<compile_context>
chip_gen: v7x
topology: tpu7x:2x2x1
jax: 0.10.0
libtpu: 0.0.40
codegen_flags: <defaults>
</compile_context>

<pallas_src>
import functools

import jax
import jax.numpy as jnp
import numpy as np
from jax.experimental import pallas as pl
from jax.experimental.pallas import tpu as pltpu

# ---- module hyperparameters (consistent with the PyTorch __init__) ----
INPUT_SIZE = 16
HIDDEN_SIZE = 32
LIN_SIZE1 = 32
N_CRITIC_LAYERS = 1   # fused kernel assumes single-layer LSTMs (module config here)
N_ACTOR_LAYERS = 1
STEPS = 8
N_ACTIONS = 17
HEAD_LANES = 128      # lane-dense width of the packed head buffer / output slab

# Kernel gate order is [i|f|o|g]; PyTorch order is [i|f|g|o].
_GATE_SRC = (0, 1, 3, 2)


def _vmem():
    return pl.BlockSpec(memory_space=pltpu.MemorySpace.VMEM)


# ------------------------------ fused kernel ---------------------------------
def lstm_policy_kernel(x_ref, wih_ref, b_ref, whh_ca_ref, whh_23_ref, head_ref,
                       out_ref, xg_ref):
    H = HIDDEN_SIZE
    B = out_ref.shape[0] // 4          # static at trace time
    T = x_ref.shape[0] // B

    # Hoisted input projection (+fused bias) for all four LSTMs.
    # x is time-major: rows [t*B, (t+1)*B) belong to timestep t.
    # Column layout of xg:
    #   [   0 :  8H)  critic+actor1 packed, gate-major [i_c|i_a|f_c|f_a|o_c|o_a|g_c|g_a]
    #   [  8H : 12H)  actor2 gates [i|f|o|g]
    #   [ 12H : 16H)  actor3 gates [i|f|o|g]
    xg_ref[...] = (jnp.dot(x_ref[...], wih_ref[...],
                           preferred_element_type=jnp.float32) + b_ref[...])

    whh_ca = whh_ca_ref[...]              # (2H, 8H) block-diagonal, reordered gates
    whh_2 = whh_23_ref[:, 0:4 * H]        # (H, 4H)
    whh_3 = whh_23_ref[:, 4 * H:8 * H]    # (H, 4H)

    def cell(gates, c, hw):
        # Gate layout [i|f|o|g] per hw-wide block: 1 sigmoid push (3/4 width)
        # + 1 tanh push per step.
        sg = jax.nn.sigmoid(gates[:, 0:3 * hw])
        g = jnp.tanh(gates[:, 3 * hw:4 * hw])
        c_new = sg[:, hw:2 * hw] * c + sg[:, 0:hw] * g
        h_new = sg[:, 2 * hw:3 * hw] * jnp.tanh(c_new)
        return h_new, c_new

    # --- recurrence 1: critic LSTM + actor LSTM1 packed as one width-2H LSTM -
    h_ca = jnp.zeros((B, 2 * H), jnp.float32)
    c_ca = jnp.zeros((B, 2 * H), jnp.float32)
    for t in range(T):                                     # fully unrolled, T static
        gates = (jnp.dot(h_ca, whh_ca, preferred_element_type=jnp.float32)
                 + xg_ref[t * B:(t + 1) * B, 0:8 * H])
        h_ca, c_ca = cell(gates, c_ca, 2 * H)
    h_c = h_ca[:, 0:H]            # critic final hidden
    h_a1 = h_ca[:, H:2 * H]       # actor1 final hidden
    h_a = h_a1
    c_a = c_ca[:, H:2 * H]        # actor1 final cell (chained into actor2)

    # --- recurrence 2: actor LSTM2 (initial state = actor1 final state) ------
    for t in range(T):
        gates = (jnp.dot(h_a, whh_2, preferred_element_type=jnp.float32)
                 + xg_ref[t * B:(t + 1) * B, 8 * H:12 * H])
        h_a, c_a = cell(gates, c_a, H)
    h_a2 = h_a

    # --- recurrence 3: actor LSTM3 (initial state = actor2 final state) ------
    for t in range(T):
        gates = (jnp.dot(h_a, whh_3, preferred_element_type=jnp.float32)
                 + xg_ref[t * B:(t + 1) * B, 12 * H:16 * H])
        h_a, c_a = cell(gates, c_a, H)
    h_a3 = h_a

    # --- fused heads on stacked [h_c; h_a1; h_a2; h_a3] ----------------------
    # head_ref rows 0:H    : lanes 0:32 = cw1, lanes 32:49 = aw
    #          row  H      : lanes 0:32 = cb1, lanes 32:49 = ab
    #          row  H+1    : lanes 0:32 = cw2^T, lane 32 = cb2
    combo_w = head_ref[0:H, :]                           # (H, 128)
    combo_b = head_ref[H:H + 1, :]                       # (1, 128)
    tail = head_ref[H + 1:H + 2, :]                      # (1, 128)
    cw2_row = tail[:, 0:LIN_SIZE1]                       # (1, 32)
    cb2 = tail[:, LIN_SIZE1:LIN_SIZE1 + 1]               # (1, 1)

    hs = jnp.maximum(jnp.concatenate([h_c, h_a1, h_a2, h_a3], axis=0), 0.0)
    z = jnp.dot(hs, combo_w, preferred_element_type=jnp.float32) + combo_b

    # critic head: relu -> linear -> relu -> linear (last linear is a row-reduce)
    y = jnp.maximum(z[0:B, 0:LIN_SIZE1], 0.0)
    value = jnp.sum(y * cw2_row, axis=-1, keepdims=True) + cb2       # (B, 1)

    # actor heads: shared linear already applied in z; softmax over 17 lanes
    logits = z[B:4 * B, LIN_SIZE1:LIN_SIZE1 + N_ACTIONS]             # (3B, 17)
    m = jnp.max(logits, axis=-1, keepdims=True)
    e = jnp.exp(logits - m)
    probs = e / jnp.sum(e, axis=-1, keepdims=True)

    # One lane-dense output slab: rows 0:B -> value (lane 0), rows B:4B -> probs.
    out_ref[...] = jnp.concatenate(
        [jnp.concatenate(
            [value, jnp.zeros((B, HEAD_LANES - 1), jnp.float32)], axis=1),
         jnp.concatenate(
            [probs, jnp.zeros((3 * B, HEAD_LANES - N_ACTIONS), jnp.float32)],
            axis=1)],
        axis=0)


# --------------------- weight packing (run ONCE at init) ----------------------
def pack_policy_params(params):
    """Pack raw (PyTorch-layout) params into the 6 kernel operands. Hoisted out
    of the per-call path: call once at init / outside the training step."""
    H = HIDDEN_SIZE
    assert N_CRITIC_LAYERS == 1 and N_ACTOR_LAYERS == 1, \
        "fused kernel supports single-layer LSTMs only"
    for name in ('critic_lstm', 'actor_lstm1', 'actor_lstm2', 'actor_lstm3'):
        assert len(params[name]) == 1

    wih_c, whh_c, b_c = params['critic_lstm'][0]
    wih_1, whh_1, b_1 = params['actor_lstm1'][0]
    wih_2, whh_2, b_2 = params['actor_lstm2'][0]
    wih_3, whh_3, b_3 = params['actor_lstm3'][0]

    def reorder(w):  # PyTorch [i|f|g|o] -> kernel [i|f|o|g]
        return jnp.concatenate([w[..., g * H:(g + 1) * H] for g in _GATE_SRC],
                               axis=-1)

    def interleave(wc, wa):
        # two (..., 4H) -> (..., 8H) gate-major [i_c|i_a|f_c|f_a|o_c|o_a|g_c|g_a]
        parts = []
        for g in _GATE_SRC:
            parts.append(wc[..., g * H:(g + 1) * H])
            parts.append(wa[..., g * H:(g + 1) * H])
        return jnp.concatenate(parts, axis=-1)

    wih_ca = interleave(wih_c, wih_1)                        # (I, 8H)
    b_ca = interleave(b_c, b_1)                              # (1, 8H)

    # Block-diagonal recurrent weight for the packed width-2H critic+actor1 LSTM.
    whh_ca = jnp.zeros((2 * H, 8 * H), jnp.float32)
    for gi, g in enumerate(_GATE_SRC):
        whh_ca = whh_ca.at[0:H, 2 * gi * H:2 * gi * H + H].set(
            whh_c[:, g * H:(g + 1) * H])
        whh_ca = whh_ca.at[H:2 * H, 2 * gi * H + H:2 * (gi + 1) * H].set(
            whh_1[:, g * H:(g + 1) * H])

    wih_all = jnp.concatenate([wih_ca, reorder(wih_2), reorder(wih_3)], axis=1)
    b_all = jnp.concatenate([b_ca, reorder(b_2), reorder(b_3)], axis=1)
    whh_23 = jnp.concatenate([reorder(whh_2), reorder(whh_3)], axis=1)  # (H, 8H)

    cw1, cb1 = params['critic_linear1']
    cw2, cb2 = params['critic_linear2']
    aw, ab = params['actor_linear']

    head = jnp.zeros((H + 2, HEAD_LANES), jnp.float32)
    head = head.at[0:H, 0:LIN_SIZE1].set(cw1)
    head = head.at[0:H, LIN_SIZE1:LIN_SIZE1 + N_ACTIONS].set(aw)
    head = head.at[H, 0:LIN_SIZE1].set(cb1[0])
    head = head.at[H, LIN_SIZE1:LIN_SIZE1 + N_ACTIONS].set(ab[0])
    head = head.at[H + 1, 0:LIN_SIZE1].set(cw2[:, 0])
    head = head.at[H + 1, LIN_SIZE1].set(cb2[0, 0])

    return dict(wih_all=jnp.asarray(wih_all, jnp.float32),
                b_all=jnp.asarray(b_all, jnp.float32),
                whh_ca=jnp.asarray(whh_ca, jnp.float32),
                whh_23=jnp.asarray(whh_23, jnp.float32),
                head=jnp.asarray(head, jnp.float32))


# --------------------------------- forward -----------------------------------
@functools.partial(jax.jit, static_argnums=(2,))
def lstm_policy_forward(packed, state, steps):
    """state: (B, steps, INPUT_SIZE) (B=1 reproduces the PyTorch module)."""
    x = jnp.asarray(state, jnp.float32).reshape(-1, steps, INPUT_SIZE)
    B = x.shape[0]
    # time-major rows so that timestep t is the contiguous row block [t*B,(t+1)*B)
    x_tm = jnp.transpose(x, (1, 0, 2)).reshape(steps * B, INPUT_SIZE)

    out = pl.pallas_call(
        lstm_policy_kernel,
        out_shape=jax.ShapeDtypeStruct((4 * B, HEAD_LANES), jnp.float32),
        in_specs=[_vmem()] * 6,
        out_specs=_vmem(),
        scratch_shapes=[pltpu.VMEM((steps * B, 16 * HIDDEN_SIZE), jnp.float32)],
    )(x_tm, packed['wih_all'], packed['b_all'], packed['whh_ca'],
      packed['whh_23'], packed['head'])

    value = out[0:B, 0]                               # (B,)
    probs1 = out[B:2 * B, 0:N_ACTIONS]                # (B, 17)
    probs2 = out[2 * B:3 * B, 0:N_ACTIONS]
    probs3 = out[3 * B:4 * B, 0:N_ACTIONS]
    # TODO(synk): torch.distributions.Categorical has no Pallas equivalent;
    # return the softmax probabilities that parameterize each distribution.
    return value, probs1, probs2, probs3


# ------------------------------ parameter init -------------------------------
def init_lstm_params(key, n_layers, input_size, hidden_size):
    layers = []
    bound = 1.0 / float(np.sqrt(hidden_size))
    for l in range(n_layers):
        in_size = input_size if l == 0 else hidden_size
        key, k1, k2, k3, k4 = jax.random.split(key, 5)
        w_ih = jax.random.uniform(k1, (in_size, 4 * hidden_size), jnp.float32,
                                  -bound, bound)
        w_hh = jax.random.uniform(k2, (hidden_size, 4 * hidden_size), jnp.float32,
                                  -bound, bound)
        b_ih = jax.random.uniform(k3, (4 * hidden_size,), jnp.float32, -bound, bound)
        b_hh = jax.random.uniform(k4, (4 * hidden_size,), jnp.float32, -bound, bound)
        layers.append((w_ih, w_hh, (b_ih + b_hh).reshape(1, 4 * hidden_size)))
    return key, layers


def init_linear_params(key, in_size, out_size):
    bound = 1.0 / float(np.sqrt(in_size))
    key, k1, k2 = jax.random.split(key, 3)
    w = jax.random.uniform(k1, (in_size, out_size), jnp.float32, -bound, bound)
    b = jax.random.uniform(k2, (1, out_size), jnp.float32, -bound, bound)
    return key, (w, b)


def init_params(key):
    key, critic_lstm = init_lstm_params(key, N_CRITIC_LAYERS, INPUT_SIZE, HIDDEN_SIZE)
    key, cl1 = init_linear_params(key, HIDDEN_SIZE, LIN_SIZE1)
    key, cl2 = init_linear_params(key, LIN_SIZE1, 1)
    key, a1 = init_lstm_params(key, N_ACTOR_LAYERS, INPUT_SIZE, HIDDEN_SIZE)
    key, a2 = init_lstm_params(key, N_ACTOR_LAYERS, INPUT_SIZE, HIDDEN_SIZE)
    key, a3 = init_lstm_params(key, N_ACTOR_LAYERS, INPUT_SIZE, HIDDEN_SIZE)
    key, al = init_linear_params(key, HIDDEN_SIZE, N_ACTIONS)
    return dict(critic_lstm=critic_lstm, critic_linear1=cl1, critic_linear2=cl2,
                actor_lstm1=a1, actor_lstm2=a2, actor_lstm3=a3, actor_linear=al)


# --------------------------- pure-JAX reference check -------------------------
def _ref_lstm(x, layers, h0, c0):
    H = HIDDEN_SIZE
    seq = x
    hns, cns = [], []
    for l, (w_ih, w_hh, b) in enumerate(layers):
        h, c = h0[l], c0[l]
        outs = []
        for t in range(seq.shape[0]):
            gates = seq[t:t + 1] @ w_ih + h @ w_hh + b
            i_g = jax.nn.sigmoid(gates[:, 0 * H:1 * H])
            f_g = jax.nn.sigmoid(gates[:, 1 * H:2 * H])
            g_g = jnp.tanh(gates[:, 2 * H:3 * H])
            o_g = jax.nn.sigmoid(gates[:, 3 * H:4 * H])
            c = f_g * c + i_g * g_g
            h = o_g * jnp.tanh(c)
            outs.append(h)
        seq = jnp.concatenate(outs, axis=0)
        hns.append(h)
        cns.append(c)
    return seq, jnp.stack(hns), jnp.stack(cns)


def _ref_forward(params, state, steps):
    x = state.reshape(steps, INPUT_SIZE).astype(jnp.float32)
    zc = jnp.zeros((N_CRITIC_LAYERS, 1, HIDDEN_SIZE), jnp.float32)
    za = jnp.zeros((N_ACTOR_LAYERS, 1, HIDDEN_SIZE), jnp.float32)

    _, hc, _ = _ref_lstm(x, params['critic_lstm'], zc, zc)
    w1, b1 = params['critic_linear1']
    w2, b2 = params['critic_linear2']
    v = jnp.maximum(hc[-1], 0.0)
    v = jnp.maximum(v @ w1 + b1, 0.0)
    value = v @ w2 + b2

    wa, ba = params['actor_linear']

    def head(h):
        return jax.nn.softmax(jnp.maximum(h, 0.0) @ wa + ba, axis=-1)

    _, h1, c1 = _ref_lstm(x, params['actor_lstm1'], za, za)
    _, h2, c2 = _ref_lstm(x, params['actor_lstm2'], h1, c1)
    _, h3, c3 = _ref_lstm(x, params['actor_lstm3'], h2, c2)
    return (value.reshape(1), head(h1[-1]).reshape(N_ACTIONS),
            head(h2[-1]).reshape(N_ACTIONS), head(h3[-1]).reshape(N_ACTIONS))


# ----------------------------------- main -------------------------------------
if __name__ == "__main__":
    key = jax.random.PRNGKey(0)
    pkey, xkey = jax.random.split(key)
    params = init_params(pkey)
    packed = pack_policy_params(params)   # hoisted: packed ONCE, outside hot path

    B = 4                                 # batch of environments (B=1 == module)
    state = jax.random.normal(xkey, (B, STEPS, INPUT_SIZE), jnp.float32)

    value, p1, p2, p3 = jax.block_until_ready(
        lstm_policy_forward(packed, state, STEPS))

    # per-element check against the pure-JAX (PyTorch-semantics) reference
    for b in range(B):
        rv, r1, r2, r3 = _ref_forward(params, state[b], STEPS)
        np.testing.assert_allclose(np.asarray(value[b:b + 1]), np.asarray(rv),
                                   rtol=2e-3, atol=2e-3)
        np.testing.assert_allclose(np.asarray(p1[b]), np.asarray(r1),
                                   rtol=2e-3, atol=2e-3)
        np.testing.assert_allclose(np.asarray(p2[b]), np.asarray(r2),
                                   rtol=2e-3, atol=2e-3)
        np.testing.assert_allclose(np.asarray(p3[b]), np.asarray(r3),
                                   rtol=2e-3, atol=2e-3)

    print("KERNEL_OK")
</pallas_src>

<mosaic_0001>
module attributes {stable_mosaic.version = 11 : i64} {
  func.func @lstm_policy_kernel(%arg0: memref<32x16xf32, #tpu.memory_space<vmem>>, %arg1: memref<16x512xf32, #tpu.memory_space<vmem>>, %arg2: memref<1x512xf32, #tpu.memory_space<vmem>>, %arg3: memref<64x256xf32, #tpu.memory_space<vmem>>, %arg4: memref<32x256xf32, #tpu.memory_space<vmem>>, %arg5: memref<34x128xf32, #tpu.memory_space<vmem>>, %arg6: memref<16x128xf32, #tpu.memory_space<vmem>>, %arg7: memref<32x512xf32, #tpu.memory_space<vmem>>) attributes {dimension_semantics = [], scalar_prefetch = 0 : i64, scratch_operands = 1 : i64, tpu.core_type = #tpu.core_type<tc>} {
    %c0 = arith.constant 0 : index
    %c0_0 = arith.constant 0 : index
    %0 = vector.load %arg0[%c0, %c0_0] : memref<32x16xf32, #tpu.memory_space<vmem>>, vector<32x16xf32>
    %c0_1 = arith.constant 0 : index
    %c0_2 = arith.constant 0 : index
    %1 = vector.load %arg1[%c0_1, %c0_2] : memref<16x512xf32, #tpu.memory_space<vmem>>, vector<16x512xf32>
    %cst = arith.constant dense<0.000000e+00> : vector<32x512xf32>
    %2 = tpu.matmul %0, %1, %cst {dimension_numbers = #tpu.dot_dimension_numbers<[1], [0], [0], [1], [0, 0, 1, 1], [], []>} : vector<32x16xf32>, vector<16x512xf32>, vector<32x512xf32> -> vector<32x512xf32>
    %c0_3 = arith.constant 0 : index
    %c0_4 = arith.constant 0 : index
    %3 = vector.load %arg2[%c0_3, %c0_4] : memref<1x512xf32, #tpu.memory_space<vmem>>, vector<1x512xf32>
    %4 = vector.broadcast %3 : vector<1x512xf32> to vector<32x512xf32>
    %5 = arith.addf %2, %4 : vector<32x512xf32>
    %c0_5 = arith.constant 0 : index
    %c0_6 = arith.constant 0 : index
    %6 = vector.load %arg7[%c0_5, %c0_6] : memref<32x512xf32, #tpu.memory_space<vmem>>, vector<32x512xf32>
    tpu.vector_store %arg7[%c0_5, %c0_6], %5 {strides = array<i32>} : memref<32x512xf32, #tpu.memory_space<vmem>>, vector<32x512xf32>,
    %c0_7 = arith.constant 0 : index
    %c0_8 = arith.constant 0 : index
    %7 = vector.load %arg3[%c0_7, %c0_8] : memref<64x256xf32, #tpu.memory_space<vmem>>, vector<64x256xf32>
    %c0_9 = arith.constant 0 : index
    %c0_10 = arith.constant 0 : index
    %8 = vector.load %arg4[%c0_9, %c0_10] : memref<32x256xf32, #tpu.memory_space<vmem>>, vector<32x128xf32>
    %c0_11 = arith.constant 0 : index
    %c128 = arith.constant 128 : index
    %9 = vector.load %arg4[%c0_11, %c128] : memref<32x256xf32, #tpu.memory_space<vmem>>, vector<32x128xf32>
    %cst_12 = arith.constant 0.000000e+00 : f32
    %10 = vector.broadcast %cst_12 : f32 to vector<4x64xf32>
    %cst_13 = arith.constant 0.000000e+00 : f32
    %11 = vector.broadcast %cst_13 : f32 to vector<4x64xf32>
    %cst_14 = arith.constant dense<0.000000e+00> : vector<4x256xf32>
    %12 = tpu.matmul %10, %7, %cst_14 {dimension_numbers = #tpu.dot_dimension_numbers<[1], [0], [0], [1], [0, 0, 1, 1], [], []>} : vector<4x64xf32>, vector<64x256xf32>, vector<4x256xf32> -> vector<4x256xf32>
    %c0_15 = arith.constant 0 : index
    %c0_16 = arith.constant 0 : index
    %13 = vector.load %arg7[%c0_15, %c0_16] : memref<32x512xf32, #tpu.memory_space<vmem>>, vector<4x256xf32>
    %14 = arith.addf %12, %13 : vector<4x256xf32>
    %15 = vector.extract_strided_slice %14 {offsets = [0, 0], sizes = [4, 192], strides = [1, 1]} : vector<4x256xf32> to vector<4x192xf32>
    %16 = arith.negf %15 : vector<4x192xf32>
    %17 = math.exp %16 : vector<4x192xf32>
    %cst_17 = arith.constant 1.000000e+00 : f32
    %18 = vector.broadcast %cst_17 : f32 to vector<4x192xf32>
    %19 = arith.addf %18, %17 : vector<4x192xf32>
    %20 = arith.divf %18, %19 : vector<4x192xf32>
    %21 = vector.extract_strided_slice %14 {offsets = [0, 192], sizes = [4, 64], strides = [1, 1]} : vector<4x256xf32> to vector<4x64xf32>
    %22 = math.tanh %21 : vector<4x64xf32>
    %23 = vector.extract_strided_slice %20 {offsets = [0, 64], sizes = [4, 64], strides = [1, 1]} : vector<4x192xf32> to vector<4x64xf32>
    %24 = arith.mulf %23, %11 : vector<4x64xf32>
    %25 = vector.extract_strided_slice %20 {offsets = [0, 0], sizes = [4, 64], strides = [1, 1]} : vector<4x192xf32> to vector<4x64xf32>
    %26 = arith.mulf %25, %22 : vector<4x64xf32>
    %27 = arith.addf %24, %26 : vector<4x64xf32>
    %28 = vector.extract_strided_slice %20 {offsets = [0, 128], sizes = [4, 64], strides = [1, 1]} : vector<4x192xf32> to vector<4x64xf32>
    %29 = math.tanh %27 : vector<4x64xf32>
    %30 = arith.mulf %28, %29 : vector<4x64xf32>
    %cst_18 = arith.constant dense<0.000000e+00> : vector<4x256xf32>
    %31 = tpu.matmul %30, %7, %cst_18 {dimension_numbers = #tpu.dot_dimension_numbers<[1], [0], [0], [1], [0, 0, 1, 1], [], []>} : vector<4x64xf32>, vector<64x256xf32>, vector<4x256xf32> -> vector<4x256xf32>
    %c4 = arith.constant 4 : index
    %c0_19 = arith.constant 0 : index
    %32 = vector.load %arg7[%c4, %c0_19] : memref<32x512xf32, #tpu.memory_space<vmem>>, vector<4x256xf32>
    %33 = arith.addf %31, %32 : vector<4x256xf32>
    %34 = vector.extract_strided_slice %33 {offsets = [0, 0], sizes = [4, 192], strides = [1, 1]} : vector<4x256xf32> to vector<4x192xf32>
    %35 = arith.negf %34 : vector<4x192xf32>
    %36 = math.exp %35 : vector<4x192xf32>
    %cst_20 = arith.constant 1.000000e+00 : f32
    %37 = vector.broadcast %cst_20 : f32 to vector<4x192xf32>
    %38 = arith.addf %37, %36 : vector<4x192xf32>
    %39 = arith.divf %37, %38 : vector<4x192xf32>
    %40 = vector.extract_strided_slice %33 {offsets = [0, 192], sizes = [4, 64], strides = [1, 1]} : vector<4x256xf32> to vector<4x64xf32>
    %41 = math.tanh %40 : vector<4x64xf32>
    %42 = vector.extract_strided_slice %39 {offsets = [0, 64], sizes = [4, 64], strides = [1, 1]} : vector<4x192xf32> to vector<4x64xf32>
    %43 = arith.mulf %42, %27 : vector<4x64xf32>
    %44 = vector.extract_strided_slice %39 {offsets = [0, 0], sizes = [4, 64], strides = [1, 1]} : vector<4x192xf32> to vector<4x64xf32>
    %45 = arith.mulf %44, %41 : vector<4x64xf32>
    %46 = arith.addf %43, %45 : vector<4x64xf32>
    %47 = vector.extract_strided_slice %39 {offsets = [0, 128], sizes = [4, 64], strides = [1, 1]} : vector<4x192xf32> to vector<4x64xf32>
    %48 = math.tanh %46 : vector<4x64xf32>
    %49 = arith.mulf %47, %48 : vector<4x64xf32>
    %cst_21 = arith.constant dense<0.000000e+00> : vector<4x256xf32>
    %50 = tpu.matmul %49, %7, %cst_21 {dimension_numbers = #tpu.dot_dimension_numbers<[1], [0], [0], [1], [0, 0, 1, 1], [], []>} : vector<4x64xf32>, vector<64x256xf32>, vector<4x256xf32> -> vector<4x256xf32>
    %c8 = arith.constant 8 : index
    %c0_22 = arith.constant 0 : index
    %51 = vector.load %arg7[%c8, %c0_22] : memref<32x512xf32, #tpu.memory_space<vmem>>, vector<4x256xf32>
    %52 = arith.addf %50, %51 : vector<4x256xf32>
    %53 = vector.extract_strided_slice %52 {offsets = [0, 0], sizes = [4, 192], strides = [1, 1]} : vector<4x256xf32> to vector<4x192xf32>
    %54 = arith.negf %53 : vector<4x192xf32>
    %55 = math.exp %54 : vector<4x192xf32>
    %cst_23 = arith.constant 1.000000e+00 : f32
    %56 = vector.broadcast %cst_23 : f32 to vector<4x192xf32>
    %57 = arith.addf %56, %55 : vector<4x192xf32>
    %58 = arith.divf %56, %57 : vector<4x192xf32>
    %59 = vector.extract_strided_slice %52 {offsets = [0, 192], sizes = [4, 64], strides = [1, 1]} : vector<4x256xf32> to vector<4x64xf32>
    %60 = math.tanh %59 : vector<4x64xf32>
    %61 = vector.extract_strided_slice %58 {offsets = [0, 64], sizes = [4, 64], strides = [1, 1]} : vector<4x192xf32> to vector<4x64xf32>
    %62 = arith.mulf %61, %46 : vector<4x64xf32>
    %63 = vector.extract_strided_slice %58 {offsets = [0, 0], sizes = [4, 64], strides = [1, 1]} : vector<4x192xf32> to vector<4x64xf32>
    %64 = arith.mulf %63, %60 : vector<4x64xf32>
    %65 = arith.addf %62, %64 : vector<4x64xf32>
    %66 = vector.extract_strided_slice %58 {offsets = [0, 128], sizes = [4, 64], strides = [1, 1]} : vector<4x192xf32> to vector<4x64xf32>
    %67 = math.tanh %65 : vector<4x64xf32>
    %68 = arith.mulf %66, %67 : vector<4x64xf32>
    %cst_24 = arith.constant dense<0.000000e+00> : vector<4x256xf32>
    %69 = tpu.matmul %68, %7, %cst_24 {dimension_numbers = #tpu.dot_dimension_numbers<[1], [0], [0], [1], [0, 0, 1, 1], [], []>} : vector<4x64xf32>, vector<64x256xf32>, vector<4x256xf32> -> vector<4x256xf32>
    %c12 = arith.constant 12 : index
    %c0_25 = arith.constant 0 : index
    %70 = vector.load %arg7[%c12, %c0_25] : memref<32x512xf32, #tpu.memory_space<vmem>>, vector<4x256xf32>
    %71 = arith.addf %69, %70 : vector<4x256xf32>
    %72 = vector.extract_strided_slice %71 {offsets = [0, 0], sizes = [4, 192], strides = [1, 1]} : vector<4x256xf32> to vector<4x192xf32>
    %73 = arith.negf %72 : vector<4x192xf32>
    %74 = math.exp %73 : vector<4x192xf32>
    %cst_26 = arith.constant 1.000000e+00 : f32
    %75 = vector.broadcast %cst_26 : f32 to vector<4x192xf32>
    %76 = arith.addf %75, %74 : vector<4x192xf32>
    %77 = arith.divf %75, %76 : vector<4x192xf32>
    %78 = vector.extract_strided_slice %71 {offsets = [0, 192], sizes = [4, 64], strides = [1, 1]} : vector<4x256xf32> to vector<4x64xf32>
    %79 = math.tanh %78 : vector<4x64xf32>
    %80 = vector.extract_strided_slice %77 {offsets = [0, 64], sizes = [4, 64], strides = [1, 1]} : vector<4x192xf32> to vector<4x64xf32>
    %81 = arith.mulf %80, %65 : vector<4x64xf32>
    %82 = vector.extract_strided_slice %77 {offsets = [0, 0], sizes = [4, 64], strides = [1, 1]} : vector<4x192xf32> to vector<4x64xf32>
    %83 = arith.mulf %82, %79 : vector<4x64xf32>
    %84 = arith.addf %81, %83 : vector<4x64xf32>
    %85 = vector.extract_strided_slice %77 {offsets = [0, 128], sizes = [4, 64], strides = [1, 1]} : vector<4x192xf32> to vector<4x64xf32>
    %86 = math.tanh %84 : vector<4x64xf32>
    %87 = arith.mulf %85, %86 : vector<4x64xf32>
    %cst_27 = arith.constant dense<0.000000e+00> : vector<4x256xf32>
    %88 = tpu.matmul %87, %7, %cst_27 {dimension_numbers = #tpu.dot_dimension_numbers<[1], [0], [0], [1], [0, 0, 1, 1], [], []>} : vector<4x64xf32>, vector<64x256xf32>, vector<4x256xf32> -> vector<4x256xf32>
    %c16 = arith.constant 16 : index
    %c0_28 = arith.constant 0 : index
    %89 = vector.load %arg7[%c16, %c0_28] : memref<32x512xf32, #tpu.memory_space<vmem>>, vector<4x256xf32>
    %90 = arith.addf %88, %89 : vector<4x256xf32>
    %91 = vector.extract_strided_slice %90 {offsets = [0, 0], sizes = [4, 192], strides = [1, 1]} : vector<4x256xf32> to vector<4x192xf32>
    %92 = arith.negf %91 : vector<4x192xf32>
    %93 = math.exp %92 : vector<4x192xf32>
    %cst_29 = arith.constant 1.000000e+00 : f32
    %94 = vector.broadcast %cst_29 : f32 to vector<4x192xf32>
    %95 = arith.addf %94, %93 : vector<4x192xf32>
    %96 = arith.divf %94, %95 : vector<4x192xf32>
    %97 = vector.extract_strided_slice %90 {offsets = [0, 192], sizes = [4, 64], strides = [1, 1]} : vector<4x256xf32> to vector<4x64xf32>
    %98 = math.tanh %97 : vector<4x64xf32>
    %99 = vector.extract_strided_slice %96 {offsets = [0, 64], sizes = [4, 64], strides = [1, 1]} : vector<4x192xf32> to vector<4x64xf32>
    %100 = arith.mulf %99, %84 : vector<4x64xf32>
    %101 = vector.extract_strided_slice %96 {offsets = [0, 0], sizes = [4, 64], strides = [1, 1]} : vector<4x192xf32> to vector<4x64xf32>
    %102 = arith.mulf %101, %98 : vector<4x64xf32>
    %103 = arith.addf %100, %102 : vector<4x64xf32>
    %104 = vector.extract_strided_slice %96 {offsets = [0, 128], sizes = [4, 64], strides = [1, 1]} : vector<4x192xf32> to vector<4x64xf32>
    %105 = math.tanh %103 : vector<4x64xf32>
    %106 = arith.mulf %104, %105 : vector<4x64xf32>
    %cst_30 = arith.constant dense<0.000000e+00> : vector<4x256xf32>
    %107 = tpu.matmul %106, %7, %cst_30 {dimension_numbers = #tpu.dot_dimension_numbers<[1], [0], [0], [1], [0, 0, 1, 1], [], []>} : vector<4x64xf32>, vector<64x256xf32>, vector<4x256xf32> -> vector<4x256xf32>
    %c20 = arith.constant 20 : index
    %c0_31 = arith.constant 0 : index
    %108 = vector.load %arg7[%c20, %c0_31] : memref<32x512xf32, #tpu.memory_space<vmem>>, vector<4x256xf32>
    %109 = arith.addf %107, %108 : vector<4x256xf32>
    %110 = vector.extract_strided_slice %109 {offsets = [0, 0], sizes = [4, 192], strides = [1, 1]} : vector<4x256xf32> to vector<4x192xf32>
    %111 = arith.negf %110 : vector<4x192xf32>
    %112 = math.exp %111 : vector<4x192xf32>
    %cst_32 = arith.constant 1.000000e+00 : f32
    %113 = vector.broadcast %cst_32 : f32 to vector<4x192xf32>
    %114 = arith.addf %113, %112 : vector<4x192xf32>
    %115 = arith.divf %113, %114 : vector<4x192xf32>
    %116 = vector.extract_strided_slice %109 {offsets = [0, 192], sizes = [4, 64], strides = [1, 1]} : vector<4x256xf32> to vector<4x64xf32>
    %117 = math.tanh %116 : vector<4x64xf32>
    %118 = vector.extract_strided_slice %115 {offsets = [0, 64], sizes = [4, 64], strides = [1, 1]} : vector<4x192xf32> to vector<4x64xf32>
    %119 = arith.mulf %118, %103 : vector<4x64xf32>
    %120 = vector.extract_strided_slice %115 {offsets = [0, 0], sizes = [4, 64], strides = [1, 1]} : vector<4x192xf32> to vector<4x64xf32>
    %121 = arith.mulf %120, %117 : vector<4x64xf32>
    %122 = arith.addf %119, %121 : vector<4x64xf32>
    %123 = vector.extract_strided_slice %115 {offsets = [0, 128], sizes = [4, 64], strides = [1, 1]} : vector<4x192xf32> to vector<4x64xf32>
    %124 = math.tanh %122 : vector<4x64xf32>
    %125 = arith.mulf %123, %124 : vector<4x64xf32>
    %cst_33 = arith.constant dense<0.000000e+00> : vector<4x256xf32>
    %126 = tpu.matmul %125, %7, %cst_33 {dimension_numbers = #tpu.dot_dimension_numbers<[1], [0], [0], [1], [0, 0, 1, 1], [], []>} : vector<4x64xf32>, vector<64x256xf32>, vector<4x256xf32> -> vector<4x256xf32>
    %c24 = arith.constant 24 : index
    %c0_34 = arith.constant 0 : index
    %127 = vector.load %arg7[%c24, %c0_34] : memref<32x512xf32, #tpu.memory_space<vmem>>, vector<4x256xf32>
    %128 = arith.addf %126, %127 : vector<4x256xf32>
    %129 = vector.extract_strided_slice %128 {offsets = [0, 0], sizes = [4, 192], strides = [1, 1]} : vector<4x256xf32> to vector<4x192xf32>
    %130 = arith.negf %129 : vector<4x192xf32>
    %131 = math.exp %130 : vector<4x192xf32>
    %cst_35 = arith.constant 1.000000e+00 : f32
    %132 = vector.broadcast %cst_35 : f32 to vector<4x192xf32>
    %133 = arith.addf %132, %131 : vector<4x192xf32>
    %134 = arith.divf %132, %133 : vector<4x192xf32>
    %135 = vector.extract_strided_slice %128 {offsets = [0, 192], sizes = [4, 64], strides = [1, 1]} : vector<4x256xf32> to vector<4x64xf32>
    %136 = math.tanh %135 : vector<4x64xf32>
    %137 = vector.extract_strided_slice %134 {offsets = [0, 64], sizes = [4, 64], strides = [1, 1]} : vector<4x192xf32> to vector<4x64xf32>
    %138 = arith.mulf %137, %122 : vector<4x64xf32>
    %139 = vector.extract_strided_slice %134 {offsets = [0, 0], sizes = [4, 64], strides = [1, 1]} : vector<4x192xf32> to vector<4x64xf32>
    %140 = arith.mulf %139, %136 : vector<4x64xf32>
    %141 = arith.addf %138, %140 : vector<4x64xf32>
    %142 = vector.extract_strided_slice %134 {offsets = [0, 128], sizes = [4, 64], strides = [1, 1]} : vector<4x192xf32> to vector<4x64xf32>
    %143 = math.tanh %141 : vector<4x64xf32>
    %144 = arith.mulf %142, %143 : vector<4x64xf32>
    %cst_36 = arith.constant dense<0.000000e+00> : vector<4x256xf32>
    %145 = tpu.matmul %144, %7, %cst_36 {dimension_numbers = #tpu.dot_dimension_numbers<[1], [0], [0], [1], [0, 0, 1, 1], [], []>} : vector<4x64xf32>, vector<64x256xf32>, vector<4x256xf32> -> vector<4x256xf32>
    %c28 = arith.constant 28 : index
    %c0_37 = arith.constant 0 : index
    %146 = vector.load %arg7[%c28, %c0_37] : memref<32x512xf32, #tpu.memory_space<vmem>>, vector<4x256xf32>
    %147 = arith.addf %145, %146 : vector<4x256xf32>
    %148 = vector.extract_strided_slice %147 {offsets = [0, 0], sizes = [4, 192], strides = [1, 1]} : vector<4x256xf32> to vector<4x192xf32>
    %149 = arith.negf %148 : vector<4x192xf32>
    %150 = math.exp %149 : vector<4x192xf32>
    %cst_38 = arith.constant 1.000000e+00 : f32
    %151 = vector.broadcast %cst_38 : f32 to vector<4x192xf32>
    %152 = arith.addf %151, %150 : vector<4x192xf32>
    %153 = arith.divf %151, %152 : vector<4x192xf32>
    %154 = vector.extract_strided_slice %147 {offsets = [0, 192], sizes = [4, 64], strides = [1, 1]} : vector<4x256xf32> to vector<4x64xf32>
    %155 = math.tanh %154 : vector<4x64xf32>
    %156 = vector.extract_strided_slice %153 {offsets = [0, 64], sizes = [4, 64], strides = [1, 1]} : vector<4x192xf32> to vector<4x64xf32>
    %157 = arith.mulf %156, %141 : vector<4x64xf32>
    %158 = vector.extract_strided_slice %153 {offsets = [0, 0], sizes = [4, 64], strides = [1, 1]} : vector<4x192xf32> to vector<4x64xf32>
    %159 = arith.mulf %158, %155 : vector<4x64xf32>
    %160 = arith.addf %157, %159 : vector<4x64xf32>
    %161 = vector.extract_strided_slice %153 {offsets = [0, 128], sizes = [4, 64], strides = [1, 1]} : vector<4x192xf32> to vector<4x64xf32>
    %162 = math.tanh %160 : vector<4x64xf32>
    %163 = arith.mulf %161, %162 : vector<4x64xf32>
    %164 = vector.extract_strided_slice %163 {offsets = [0, 0], sizes = [4, 32], strides = [1, 1]} : vector<4x64xf32> to vector<4x32xf32>
    %165 = vector.extract_strided_slice %163 {offsets = [0, 32], sizes = [4, 32], strides = [1, 1]} : vector<4x64xf32> to vector<4x32xf32>
    %166 = vector.extract_strided_slice %160 {offsets = [0, 32], sizes = [4, 32], strides = [1, 1]} : vector<4x64xf32> to vector<4x32xf32>
    %cst_39 = arith.constant dense<0.000000e+00> : vector<4x128xf32>
    %167 = tpu.matmul %165, %8, %cst_39 {dimension_numbers = #tpu.dot_dimension_numbers<[1], [0], [0], [1], [0, 0, 1, 1], [], []>} : vector<4x32xf32>, vector<32x128xf32>, vector<4x128xf32> -> vector<4x128xf32>
    %c0_40 = arith.constant 0 : index
    %c256 = arith.constant 256 : index
    %168 = vector.load %arg7[%c0_40, %c256] : memref<32x512xf32, #tpu.memory_space<vmem>>, vector<4x128xf32>
    %169 = arith.addf %167, %168 : vector<4x128xf32>
    %170 = vector.extract_strided_slice %169 {offsets = [0, 0], sizes = [4, 96], strides = [1, 1]} : vector<4x128xf32> to vector<4x96xf32>
    %171 = arith.negf %170 : vector<4x96xf32>
    %172 = math.exp %171 : vector<4x96xf32>
    %cst_41 = arith.constant 1.000000e+00 : f32
    %173 = vector.broadcast %cst_41 : f32 to vector<4x96xf32>
    %174 = arith.addf %173, %172 : vector<4x96xf32>
    %175 = arith.divf %173, %174 : vector<4x96xf32>
    %176 = vector.extract_strided_slice %169 {offsets = [0, 96], sizes = [4, 32], strides = [1, 1]} : vector<4x128xf32> to vector<4x32xf32>
    %177 = math.tanh %176 : vector<4x32xf32>
    %178 = vector.extract_strided_slice %175 {offsets = [0, 32], sizes = [4, 32], strides = [1, 1]} : vector<4x96xf32> to vector<4x32xf32>
    %179 = arith.mulf %178, %166 : vector<4x32xf32>
    %180 = vector.extract_strided_slice %175 {offsets = [0, 0], sizes = [4, 32], strides = [1, 1]} : vector<4x96xf32> to vector<4x32xf32>
    %181 = arith.mulf %180, %177 : vector<4x32xf32>
    %182 = arith.addf %179, %181 : vector<4x32xf32>
    %183 = vector.extract_strided_slice %175 {offsets = [0, 64], sizes = [4, 32], strides = [1, 1]} : vector<4x96xf32> to vector<4x32xf32>
    %184 = math.tanh %182 : vector<4x32xf32>
    %185 = arith.mulf %183, %184 : vector<4x32xf32>
    %cst_42 = arith.constant dense<0.000000e+00> : vector<4x128xf32>
    %186 = tpu.matmul %185, %8, %cst_42 {dimension_numbers = #tpu.dot_dimension_numbers<[1], [0], [0], [1], [0, 0, 1, 1], [], []>} : vector<4x32xf32>, vector<32x128xf32>, vector<4x128xf32> -> vector<4x128xf32>
    %c4_43 = arith.constant 4 : index
    %c256_44 = arith.constant 256 : index
    %187 = vector.load %arg7[%c4_43, %c256_44] : memref<32x512xf32, #tpu.memory_space<vmem>>, vector<4x128xf32>
    %188 = arith.addf %186, %187 : vector<4x128xf32>
    %189 = vector.extract_strided_slice %188 {offsets = [0, 0], sizes = [4, 96], strides = [1, 1]} : vector<4x128xf32> to vector<4x96xf32>
    %190 = arith.negf %189 : vector<4x96xf32>
    %191 = math.exp %190 : vector<4x96xf32>
    %cst_45 = arith.constant 1.000000e+00 : f32
    %192 = vector.broadcast %cst_45 : f32 to vector<4x96xf32>
    %193 = arith.addf %192, %191 : vector<4x96xf32>
    %194 = arith.divf %192, %193 : vector<4x96xf32>
    %195 = vector.extract_strided_slice %188 {offsets = [0, 96], sizes = [4, 32], strides = [1, 1]} : vector<4x128xf32> to vector<4x32xf32>
    %196 = math.tanh %195 : vector<4x32xf32>
    %197 = vector.extract_strided_slice %194 {offsets = [0, 32], sizes = [4, 32], strides = [1, 1]} : vector<4x96xf32> to vector<4x32xf32>
    %198 = arith.mulf %197, %182 : vector<4x32xf32>
    %199 = vector.extract_strided_slice %194 {offsets = [0, 0], sizes = [4, 32], strides = [1, 1]} : vector<4x96xf32> to vector<4x32xf32>
    %200 = arith.mulf %199, %196 : vector<4x32xf32>
    %201 = arith.addf %198, %200 : vector<4x32xf32>
    %202 = vector.extract_strided_slice %194 {offsets = [0, 64], sizes = [4, 32], strides = [1, 1]} : vector<4x96xf32> to vector<4x32xf32>
    %203 = math.tanh %201 : vector<4x32xf32>
    %204 = arith.mulf %202, %203 : vector<4x32xf32>
    %cst_46 = arith.constant dense<0.000000e+00> : vector<4x128xf32>
    %205 = tpu.matmul %204, %8, %cst_46 {dimension_numbers = #tpu.dot_dimension_numbers<[1], [0], [0], [1], [0, 0, 1, 1], [], []>} : vector<4x32xf32>, vector<32x128xf32>, vector<4x128xf32> -> vector<4x128xf32>
    %c8_47 = arith.constant 8 : index
    %c256_48 = arith.constant 256 : index
    %206 = vector.load %arg7[%c8_47, %c256_48] : memref<32x512xf32, #tpu.memory_space<vmem>>, vector<4x128xf32>
    %207 = arith.addf %205, %206 : vector<4x128xf32>
    %208 = vector.extract_strided_slice %207 {offsets = [0, 0], sizes = [4, 96], strides = [1, 1]} : vector<4x128xf32> to vector<4x96xf32>
    %209 = arith.negf %208 : vector<4x96xf32>
    %210 = math.exp %209 : vector<4x96xf32>
    %cst_49 = arith.constant 1.000000e+00 : f32
    %211 = vector.broadcast %cst_49 : f32 to vector<4x96xf32>
    %212 = arith.addf %211, %210 : vector<4x96xf32>
    %213 = arith.divf %211, %212 : vector<4x96xf32>
    %214 = vector.extract_strided_slice %207 {offsets = [0, 96], sizes = [4, 32], strides = [1, 1]} : vector<4x128xf32> to vector<4x32xf32>
    %215 = math.tanh %214 : vector<4x32xf32>
    %216 = vector.extract_strided_slice %213 {offsets = [0, 32], sizes = [4, 32], strides = [1, 1]} : vector<4x96xf32> to vector<4x32xf32>
    %217 = arith.mulf %216, %201 : vector<4x32xf32>
    %218 = vector.extract_strided_slice %213 {offsets = [0, 0], sizes = [4, 32], strides = [1, 1]} : vector<4x96xf32> to vector<4x32xf32>
    %219 = arith.mulf %218, %215 : vector<4x32xf32>
    %220 = arith.addf %217, %219 : vector<4x32xf32>
    %221 = vector.extract_strided_slice %213 {offsets = [0, 64], sizes = [4, 32], strides = [1, 1]} : vector<4x96xf32> to vector<4x32xf32>
    %222 = math.tanh %220 : vector<4x32xf32>
    %223 = arith.mulf %221, %222 : vector<4x32xf32>
    %cst_50 = arith.constant dense<0.000000e+00> : vector<4x128xf32>
    %224 = tpu.matmul %223, %8, %cst_50 {dimension_numbers = #tpu.dot_dimension_numbers<[1], [0], [0], [1], [0, 0, 1, 1], [], []>} : vector<4x32xf32>, vector<32x128xf32>, vector<4x128xf32> -> vector<4x128xf32>
    %c12_51 = arith.constant 12 : index
    %c256_52 = arith.constant 256 : index
    %225 = vector.load %arg7[%c12_51, %c256_52] : memref<32x512xf32, #tpu.memory_space<vmem>>, vector<4x128xf32>
    %226 = arith.addf %224, %225 : vector<4x128xf32>
    %227 = vector.extract_strided_slice %226 {offsets = [0, 0], sizes = [4, 96], strides = [1, 1]} : vector<4x128xf32> to vector<4x96xf32>
    %228 = arith.negf %227 : vector<4x96xf32>
    %229 = math.exp %228 : vector<4x96xf32>
    %cst_53 = arith.constant 1.000000e+00 : f32
    %230 = vector.broadcast %cst_53 : f32 to vector<4x96xf32>
    %231 = arith.addf %230, %229 : vector<4x96xf32>
    %232 = arith.divf %230, %231 : vector<4x96xf32>
    %233 = vector.extract_strided_slice %226 {offsets = [0, 96], sizes = [4, 32], strides = [1, 1]} : vector<4x128xf32> to vector<4x32xf32>
    %234 = math.tanh %233 : vector<4x32xf32>
    %235 = vector.extract_strided_slice %232 {offsets = [0, 32], sizes = [4, 32], strides = [1, 1]} : vector<4x96xf32> to vector<4x32xf32>
    %236 = arith.mulf %235, %220 : vector<4x32xf32>
    %237 = vector.extract_strided_slice %232 {offsets = [0, 0], sizes = [4, 32], strides = [1, 1]} : vector<4x96xf32> to vector<4x32xf32>
    %238 = arith.mulf %237, %234 : vector<4x32xf32>
    %239 = arith.addf %236, %238 : vector<4x32xf32>
    %240 = vector.extract_strided_slice %232 {offsets = [0, 64], sizes = [4, 32], strides = [1, 1]} : vector<4x96xf32> to vector<4x32xf32>
    %241 = math.tanh %239 : vector<4x32xf32>
    %242 = arith.mulf %240, %241 : vector<4x32xf32>
    %cst_54 = arith.constant dense<0.000000e+00> : vector<4x128xf32>
    %243 = tpu.matmul %242, %8, %cst_54 {dimension_numbers = #tpu.dot_dimension_numbers<[1], [0], [0], [1], [0, 0, 1, 1], [], []>} : vector<4x32xf32>, vector<32x128xf32>, vector<4x128xf32> -> vector<4x128xf32>
    %c16_55 = arith.constant 16 : index
    %c256_56 = arith.constant 256 : index
    %244 = vector.load %arg7[%c16_55, %c256_56] : memref<32x512xf32, #tpu.memory_space<vmem>>, vector<4x128xf32>
    %245 = arith.addf %243, %244 : vector<4x128xf32>
    %246 = vector.extract_strided_slice %245 {offsets = [0, 0], sizes = [4, 96], strides = [1, 1]} : vector<4x128xf32> to vector<4x96xf32>
    %247 = arith.negf %246 : vector<4x96xf32>
    %248 = math.exp %247 : vector<4x96xf32>
    %cst_57 = arith.constant 1.000000e+00 : f32
    %249 = vector.broadcast %cst_57 : f32 to vector<4x96xf32>
    %250 = arith.addf %249, %248 : vector<4x96xf32>
    %251 = arith.divf %249, %250 : vector<4x96xf32>
    %252 = vector.extract_strided_slice %245 {offsets = [0, 96], sizes = [4, 32], strides = [1, 1]} : vector<4x128xf32> to vector<4x32xf32>
    %253 = math.tanh %252 : vector<4x32xf32>
    %254 = vector.extract_strided_slice %251 {offsets = [0, 32], sizes = [4, 32], strides = [1, 1]} : vector<4x96xf32> to vector<4x32xf32>
    %255 = arith.mulf %254, %239 : vector<4x32xf32>
    %256 = vector.extract_strided_slice %251 {offsets = [0, 0], sizes = [4, 32], strides = [1, 1]} : vector<4x96xf32> to vector<4x32xf32>
    %257 = arith.mulf %256, %253 : vector<4x32xf32>
    %258 = arith.addf %255, %257 : vector<4x32xf32>
    %259 = vector.extract_strided_slice %251 {offsets = [0, 64], sizes = [4, 32], strides = [1, 1]} : vector<4x96xf32> to vector<4x32xf32>
    %260 = math.tanh %258 : vector<4x32xf32>
    %261 = arith.mulf %259, %260 : vector<4x32xf32>
    %cst_58 = arith.constant dense<0.000000e+00> : vector<4x128xf32>
    %262 = tpu.matmul %261, %8, %cst_58 {dimension_numbers = #tpu.dot_dimension_numbers<[1], [0], [0], [1], [0, 0, 1, 1], [], []>} : vector<4x32xf32>, vector<32x128xf32>, vector<4x128xf32> -> vector<4x128xf32>
    %c20_59 = arith.constant 20 : index
    %c256_60 = arith.constant 256 : index
    %263 = vector.load %arg7[%c20_59, %c256_60] : memref<32x512xf32, #tpu.memory_space<vmem>>, vector<4x128xf32>
    %264 = arith.addf %262, %263 : vector<4x128xf32>
    %265 = vector.extract_strided_slice %264 {offsets = [0, 0], sizes = [4, 96], strides = [1, 1]} : vector<4x128xf32> to vector<4x96xf32>
    %266 = arith.negf %265 : vector<4x96xf32>
    %267 = math.exp %266 : vector<4x96xf32>
    %cst_61 = arith.constant 1.000000e+00 : f32
    %268 = vector.broadcast %cst_61 : f32 to vector<4x96xf32>
    %269 = arith.addf %268, %267 : vector<4x96xf32>
    %270 = arith.divf %268, %269 : vector<4x96xf32>
    %271 = vector.extract_strided_slice %264 {offsets = [0, 96], sizes = [4, 32], strides = [1, 1]} : vector<4x128xf32> to vector<4x32xf32>
    %272 = math.tanh %271 : vector<4x32xf32>
    %273 = vector.extract_strided_slice %270 {offsets = [0, 32], sizes = [4, 32], strides = [1, 1]} : vector<4x96xf32> to vector<4x32xf32>
    %274 = arith.mulf %273, %258 : vector<4x32xf32>
    %275 = vector.extract_strided_slice %270 {offsets = [0, 0], sizes = [4, 32], strides = [1, 1]} : vector<4x96xf32> to vector<4x32xf32>
    %276 = arith.mulf %275, %272 : vector<4x32xf32>
    %277 = arith.addf %274, %276 : vector<4x32xf32>
    %278 = vector.extract_strided_slice %270 {offsets = [0, 64], sizes = [4, 32], strides = [1, 1]} : vector<4x96xf32> to vector<4x32xf32>
    %279 = math.tanh %277 : vector<4x32xf32>
    %280 = arith.mulf %278, %279 : vector<4x32xf32>
    %cst_62 = arith.constant dense<0.000000e+00> : vector<4x128xf32>
    %281 = tpu.matmul %280, %8, %cst_62 {dimension_numbers = #tpu.dot_dimension_numbers<[1], [0], [0], [1], [0, 0, 1, 1], [], []>} : vector<4x32xf32>, vector<32x128xf32>, vector<4x128xf32> -> vector<4x128xf32>
    %c24_63 = arith.constant 24 : index
    %c256_64 = arith.constant 256 : index
    %282 = vector.load %arg7[%c24_63, %c256_64] : memref<32x512xf32, #tpu.memory_space<vmem>>, vector<4x128xf32>
    %283 = arith.addf %281, %282 : vector<4x128xf32>
    %284 = vector.extract_strided_slice %283 {offsets = [0, 0], sizes = [4, 96], strides = [1, 1]} : vector<4x128xf32> to vector<4x96xf32>
    %285 = arith.negf %284 : vector<4x96xf32>
    %286 = math.exp %285 : vector<4x96xf32>
    %cst_65 = arith.constant 1.000000e+00 : f32
    %287 = vector.broadcast %cst_65 : f32 to vector<4x96xf32>
    %288 = arith.addf %287, %286 : vector<4x96xf32>
    %289 = arith.divf %287, %288 : vector<4x96xf32>
    %290 = vector.extract_strided_slice %283 {offsets = [0, 96], sizes = [4, 32], strides = [1, 1]} : vector<4x128xf32> to vector<4x32xf32>
    %291 = math.tanh %290 : vector<4x32xf32>
    %292 = vector.extract_strided_slice %289 {offsets = [0, 32], sizes = [4, 32], strides = [1, 1]} : vector<4x96xf32> to vector<4x32xf32>
    %293 = arith.mulf %292, %277 : vector<4x32xf32>
    %294 = vector.extract_strided_slice %289 {offsets = [0, 0], sizes = [4, 32], strides = [1, 1]} : vector<4x96xf32> to vector<4x32xf32>
    %295 = arith.mulf %294, %291 : vector<4x32xf32>
    %296 = arith.addf %293, %295 : vector<4x32xf32>
    %297 = vector.extract_strided_slice %289 {offsets = [0, 64], sizes = [4, 32], strides = [1, 1]} : vector<4x96xf32> to vector<4x32xf32>
    %298 = math.tanh %296 : vector<4x32xf32>
    %299 = arith.mulf %297, %298 : vector<4x32xf32>
    %cst_66 = arith.constant dense<0.000000e+00> : vector<4x128xf32>
    %300 = tpu.matmul %299, %8, %cst_66 {dimension_numbers = #tpu.dot_dimension_numbers<[1], [0], [0], [1], [0, 0, 1, 1], [], []>} : vector<4x32xf32>, vector<32x128xf32>, vector<4x128xf32> -> vector<4x128xf32>
    %c28_67 = arith.constant 28 : index
    %c256_68 = arith.constant 256 : index
    %301 = vector.load %arg7[%c28_67, %c256_68] : memref<32x512xf32, #tpu.memory_space<vmem>>, vector<4x128xf32>
    %302 = arith.addf %300, %301 : vector<4x128xf32>
    %303 = vector.extract_strided_slice %302 {offsets = [0, 0], sizes = [4, 96], strides = [1, 1]} : vector<4x128xf32> to vector<4x96xf32>
    %304 = arith.negf %303 : vector<4x96xf32>
    %305 = math.exp %304 : vector<4x96xf32>
    %cst_69 = arith.constant 1.000000e+00 : f32
    %306 = vector.broadcast %cst_69 : f32 to vector<4x96xf32>
    %307 = arith.addf %306, %305 : vector<4x96xf32>
    %308 = arith.divf %306, %307 : vector<4x96xf32>
    %309 = vector.extract_strided_slice %302 {offsets = [0, 96], sizes = [4, 32], strides = [1, 1]} : vector<4x128xf32> to vector<4x32xf32>
    %310 = math.tanh %309 : vector<4x32xf32>
    %311 = vector.extract_strided_slice %308 {offsets = [0, 32], sizes = [4, 32], strides = [1, 1]} : vector<4x96xf32> to vector<4x32xf32>
    %312 = arith.mulf %311, %296 : vector<4x32xf32>
    %313 = vector.extract_strided_slice %308 {offsets = [0, 0], sizes = [4, 32], strides = [1, 1]} : vector<4x96xf32> to vector<4x32xf32>
    %314 = arith.mulf %313, %310 : vector<4x32xf32>
    %315 = arith.addf %312, %314 : vector<4x32xf32>
    %316 = vector.extract_strided_slice %308 {offsets = [0, 64], sizes = [4, 32], strides = [1, 1]} : vector<4x96xf32> to vector<4x32xf32>
    %317 = math.tanh %315 : vector<4x32xf32>
    %318 = arith.mulf %316, %317 : vector<4x32xf32>
    %cst_70 = arith.constant dense<0.000000e+00> : vector<4x128xf32>
    %319 = tpu.matmul %318, %9, %cst_70 {dimension_numbers = #tpu.dot_dimension_numbers<[1], [0], [0], [1], [0, 0, 1, 1], [], []>} : vector<4x32xf32>, vector<32x128xf32>, vector<4x128xf32> -> vector<4x128xf32>
    %c0_71 = arith.constant 0 : index
    %c384 = arith.constant 384 : index
    %320 = vector.load %arg7[%c0_71, %c384] : memref<32x512xf32, #tpu.memory_space<vmem>>, vector<4x128xf32>
    %321 = arith.addf %319, %320 : vector<4x128xf32>
    %322 = vector.extract_strided_slice %321 {offsets = [0, 0], sizes = [4, 96], strides = [1, 1]} : vector<4x128xf32> to vector<4x96xf32>
    %323 = arith.negf %322 : vector<4x96xf32>
    %324 = math.exp %323 : vector<4x96xf32>
    %cst_72 = arith.constant 1.000000e+00 : f32
    %325 = vector.broadcast %cst_72 : f32 to vector<4x96xf32>
    %326 = arith.addf %325, %324 : vector<4x96xf32>
    %327 = arith.divf %325, %326 : vector<4x96xf32>
    %328 = vector.extract_strided_slice %321 {offsets = [0, 96], sizes = [4, 32], strides = [1, 1]} : vector<4x128xf32> to vector<4x32xf32>
    %329 = math.tanh %328 : vector<4x32xf32>
    %330 = vector.extract_strided_slice %327 {offsets = [0, 32], sizes = [4, 32], strides = [1, 1]} : vector<4x96xf32> to vector<4x32xf32>
    %331 = arith.mulf %330, %315 : vector<4x32xf32>
    %332 = vector.extract_strided_slice %327 {offsets = [0, 0], sizes = [4, 32], strides = [1, 1]} : vector<4x96xf32> to vector<4x32xf32>
    %333 = arith.mulf %332, %329 : vector<4x32xf32>
    %334 = arith.addf %331, %333 : vector<4x32xf32>
    %335 = vector.extract_strided_slice %327 {offsets = [0, 64], sizes = [4, 32], strides = [1, 1]} : vector<4x96xf32> to vector<4x32xf32>
    %336 = math.tanh %334 : vector<4x32xf32>
    %337 = arith.mulf %335, %336 : vector<4x32xf32>
    %cst_73 = arith.constant dense<0.000000e+00> : vector<4x128xf32>
    %338 = tpu.matmul %337, %9, %cst_73 {dimension_numbers = #tpu.dot_dimension_numbers<[1], [0], [0], [1], [0, 0, 1, 1], [], []>} : vector<4x32xf32>, vector<32x128xf32>, vector<4x128xf32> -> vector<4x128xf32>
    %c4_74 = arith.constant 4 : index
    %c384_75 = arith.constant 384 : index
    %339 = vector.load %arg7[%c4_74, %c384_75] : memref<32x512xf32, #tpu.memory_space<vmem>>, vector<4x128xf32>
    %340 = arith.addf %338, %339 : vector<4x128xf32>
    %341 = vector.extract_strided_slice %340 {offsets = [0, 0], sizes = [4, 96], strides = [1, 1]} : vector<4x128xf32> to vector<4x96xf32>
    %342 = arith.negf %341 : vector<4x96xf32>
    %343 = math.exp %342 : vector<4x96xf32>
    %cst_76 = arith.constant 1.000000e+00 : f32
    %344 = vector.broadcast %cst_76 : f32 to vector<4x96xf32>
    %345 = arith.addf %344, %343 : vector<4x96xf32>
    %346 = arith.divf %344, %345 : vector<4x96xf32>
    %347 = vector.extract_strided_slice %340 {offsets = [0, 96], sizes = [4, 32], strides = [1, 1]} : vector<4x128xf32> to vector<4x32xf32>
    %348 = math.tanh %347 : vector<4x32xf32>
    %349 = vector.extract_strided_slice %346 {offsets = [0, 32], sizes = [4, 32], strides = [1, 1]} : vector<4x96xf32> to vector<4x32xf32>
    %350 = arith.mulf %349, %334 : vector<4x32xf32>
    %351 = vector.extract_strided_slice %346 {offsets = [0, 0], sizes = [4, 32], strides = [1, 1]} : vector<4x96xf32> to vector<4x32xf32>
    %352 = arith.mulf %351, %348 : vector<4x32xf32>
    %353 = arith.addf %350, %352 : vector<4x32xf32>
    %354 = vector.extract_strided_slice %346 {offsets = [0, 64], sizes = [4, 32], strides = [1, 1]} : vector<4x96xf32> to vector<4x32xf32>
    %355 = math.tanh %353 : vector<4x32xf32>
    %356 = arith.mulf %354, %355 : vector<4x32xf32>
    %cst_77 = arith.constant dense<0.000000e+00> : vector<4x128xf32>
    %357 = tpu.matmul %356, %9, %cst_77 {dimension_numbers = #tpu.dot_dimension_numbers<[1], [0], [0], [1], [0, 0, 1, 1], [], []>} : vector<4x32xf32>, vector<32x128xf32>, vector<4x128xf32> -> vector<4x128xf32>
    %c8_78 = arith.constant 8 : index
    %c384_79 = arith.constant 384 : index
    %358 = vector.load %arg7[%c8_78, %c384_79] : memref<32x512xf32, #tpu.memory_space<vmem>>, vector<4x128xf32>
    %359 = arith.addf %357, %358 : vector<4x128xf32>
    %360 = vector.extract_strided_slice %359 {offsets = [0, 0], sizes = [4, 96], strides = [1, 1]} : vector<4x128xf32> to vector<4x96xf32>
    %361 = arith.negf %360 : vector<4x96xf32>
    %362 = math.exp %361 : vector<4x96xf32>
    %cst_80 = arith.constant 1.000000e+00 : f32
    %363 = vector.broadcast %cst_80 : f32 to vector<4x96xf32>
    %364 = arith.addf %363, %362 : vector<4x96xf32>
    %365 = arith.divf %363, %364 : vector<4x96xf32>
    %366 = vector.extract_strided_slice %359 {offsets = [0, 96], sizes = [4, 32], strides = [1, 1]} : vector<4x128xf32> to vector<4x32xf32>
    %367 = math.tanh %366 : vector<4x32xf32>
    %368 = vector.extract_strided_slice %365 {offsets = [0, 32], sizes = [4, 32], strides = [1, 1]} : vector<4x96xf32> to vector<4x32xf32>
    %369 = arith.mulf %368, %353 : vector<4x32xf32>
    %370 = vector.extract_strided_slice %365 {offsets = [0, 0], sizes = [4, 32], strides = [1, 1]} : vector<4x96xf32> to vector<4x32xf32>
    %371 = arith.mulf %370, %367 : vector<4x32xf32>
    %372 = arith.addf %369, %371 : vector<4x32xf32>
    %373 = vector.extract_strided_slice %365 {offsets = [0, 64], sizes = [4, 32], strides = [1, 1]} : vector<4x96xf32> to vector<4x32xf32>
    %374 = math.tanh %372 : vector<4x32xf32>
    %375 = arith.mulf %373, %374 : vector<4x32xf32>
    %cst_81 = arith.constant dense<0.000000e+00> : vector<4x128xf32>
    %376 = tpu.matmul %375, %9, %cst_81 {dimension_numbers = #tpu.dot_dimension_numbers<[1], [0], [0], [1], [0, 0, 1, 1], [], []>} : vector<4x32xf32>, vector<32x128xf32>, vector<4x128xf32> -> vector<4x128xf32>
    %c12_82 = arith.constant 12 : index
    %c384_83 = arith.constant 384 : index
    %377 = vector.load %arg7[%c12_82, %c384_83] : memref<32x512xf32, #tpu.memory_space<vmem>>, vector<4x128xf32>
    %378 = arith.addf %376, %377 : vector<4x128xf32>
    %379 = vector.extract_strided_slice %378 {offsets = [0, 0], sizes = [4, 96], strides = [1, 1]} : vector<4x128xf32> to vector<4x96xf32>
    %380 = arith.negf %379 : vector<4x96xf32>
    %381 = math.exp %380 : vector<4x96xf32>
    %cst_84 = arith.constant 1.000000e+00 : f32
    %382 = vector.broadcast %cst_84 : f32 to vector<4x96xf32>
    %383 = arith.addf %382, %381 : vector<4x96xf32>
    %384 = arith.divf %382, %383 : vector<4x96xf32>
    %385 = vector.extract_strided_slice %378 {offsets = [0, 96], sizes = [4, 32], strides = [1, 1]} : vector<4x128xf32> to vector<4x32xf32>
    %386 = math.tanh %385 : vector<4x32xf32>
    %387 = vector.extract_strided_slice %384 {offsets = [0, 32], sizes = [4, 32], strides = [1, 1]} : vector<4x96xf32> to vector<4x32xf32>
    %388 = arith.mulf %387, %372 : vector<4x32xf32>
    %389 = vector.extract_strided_slice %384 {offsets = [0, 0], sizes = [4, 32], strides = [1, 1]} : vector<4x96xf32> to vector<4x32xf32>
    %390 = arith.mulf %389, %386 : vector<4x32xf32>
    %391 = arith.addf %388, %390 : vector<4x32xf32>
    %392 = vector.extract_strided_slice %384 {offsets = [0, 64], sizes = [4, 32], strides = [1, 1]} : vector<4x96xf32> to vector<4x32xf32>
    %393 = math.tanh %391 : vector<4x32xf32>
    %394 = arith.mulf %392, %393 : vector<4x32xf32>
    %cst_85 = arith.constant dense<0.000000e+00> : vector<4x128xf32>
    %395 = tpu.matmul %394, %9, %cst_85 {dimension_numbers = #tpu.dot_dimension_numbers<[1], [0], [0], [1], [0, 0, 1, 1], [], []>} : vector<4x32xf32>, vector<32x128xf32>, vector<4x128xf32> -> vector<4x128xf32>
    %c16_86 = arith.constant 16 : index
    %c384_87 = arith.constant 384 : index
    %396 = vector.load %arg7[%c16_86, %c384_87] : memref<32x512xf32, #tpu.memory_space<vmem>>, vector<4x128xf32>
    %397 = arith.addf %395, %396 : vector<4x128xf32>
    %398 = vector.extract_strided_slice %397 {offsets = [0, 0], sizes = [4, 96], strides = [1, 1]} : vector<4x128xf32> to vector<4x96xf32>
    %399 = arith.negf %398 : vector<4x96xf32>
    %400 = math.exp %399 : vector<4x96xf32>
    %cst_88 = arith.constant 1.000000e+00 : f32
    %401 = vector.broadcast %cst_88 : f32 to vector<4x96xf32>
    %402 = arith.addf %401, %400 : vector<4x96xf32>
    %403 = arith.divf %401, %402 : vector<4x96xf32>
    %404 = vector.extract_strided_slice %397 {offsets = [0, 96], sizes = [4, 32], strides = [1, 1]} : vector<4x128xf32> to vector<4x32xf32>
    %405 = math.tanh %404 : vector<4x32xf32>
    %406 = vector.extract_strided_slice %403 {offsets = [0, 32], sizes = [4, 32], strides = [1, 1]} : vector<4x96xf32> to vector<4x32xf32>
    %407 = arith.mulf %406, %391 : vector<4x32xf32>
    %408 = vector.extract_strided_slice %403 {offsets = [0, 0], sizes = [4, 32], strides = [1, 1]} : vector<4x96xf32> to vector<4x32xf32>
    %409 = arith.mulf %408, %405 : vector<4x32xf32>
    %410 = arith.addf %407, %409 : vector<4x32xf32>
    %411 = vector.extract_strided_slice %403 {offsets = [0, 64], sizes = [4, 32], strides = [1, 1]} : vector<4x96xf32> to vector<4x32xf32>
    %412 = math.tanh %410 : vector<4x32xf32>
    %413 = arith.mulf %411, %412 : vector<4x32xf32>
    %cst_89 = arith.constant dense<0.000000e+00> : vector<4x128xf32>
    %414 = tpu.matmul %413, %9, %cst_89 {dimension_numbers = #tpu.dot_dimension_numbers<[1], [0], [0], [1], [0, 0, 1, 1], [], []>} : vector<4x32xf32>, vector<32x128xf32>, vector<4x128xf32> -> vector<4x128xf32>
    %c20_90 = arith.constant 20 : index
    %c384_91 = arith.constant 384 : index
    %415 = vector.load %arg7[%c20_90, %c384_91] : memref<32x512xf32, #tpu.memory_space<vmem>>, vector<4x128xf32>
    %416 = arith.addf %414, %415 : vector<4x128xf32>
    %417 = vector.extract_strided_slice %416 {offsets = [0, 0], sizes = [4, 96], strides = [1, 1]} : vector<4x128xf32> to vector<4x96xf32>
    %418 = arith.negf %417 : vector<4x96xf32>
    %419 = math.exp %418 : vector<4x96xf32>
    %cst_92 = arith.constant 1.000000e+00 : f32
    %420 = vector.broadcast %cst_92 : f32 to vector<4x96xf32>
    %421 = arith.addf %420, %419 : vector<4x96xf32>
    %422 = arith.divf %420, %421 : vector<4x96xf32>
    %423 = vector.extract_strided_slice %416 {offsets = [0, 96], sizes = [4, 32], strides = [1, 1]} : vector<4x128xf32> to vector<4x32xf32>
    %424 = math.tanh %423 : vector<4x32xf32>
    %425 = vector.extract_strided_slice %422 {offsets = [0, 32], sizes = [4, 32], strides = [1, 1]} : vector<4x96xf32> to vector<4x32xf32>
    %426 = arith.mulf %425, %410 : vector<4x32xf32>
    %427 = vector.extract_strided_slice %422 {offsets = [0, 0], sizes = [4, 32], strides = [1, 1]} : vector<4x96xf32> to vector<4x32xf32>
    %428 = arith.mulf %427, %424 : vector<4x32xf32>
    %429 = arith.addf %426, %428 : vector<4x32xf32>
    %430 = vector.extract_strided_slice %422 {offsets = [0, 64], sizes = [4, 32], strides = [1, 1]} : vector<4x96xf32> to vector<4x32xf32>
    %431 = math.tanh %429 : vector<4x32xf32>
    %432 = arith.mulf %430, %431 : vector<4x32xf32>
    %cst_93 = arith.constant dense<0.000000e+00> : vector<4x128xf32>
    %433 = tpu.matmul %432, %9, %cst_93 {dimension_numbers = #tpu.dot_dimension_numbers<[1], [0], [0], [1], [0, 0, 1, 1], [], []>} : vector<4x32xf32>, vector<32x128xf32>, vector<4x128xf32> -> vector<4x128xf32>
    %c24_94 = arith.constant 24 : index
    %c384_95 = arith.constant 384 : index
    %434 = vector.load %arg7[%c24_94, %c384_95] : memref<32x512xf32, #tpu.memory_space<vmem>>, vector<4x128xf32>
    %435 = arith.addf %433, %434 : vector<4x128xf32>
    %436 = vector.extract_strided_slice %435 {offsets = [0, 0], sizes = [4, 96], strides = [1, 1]} : vector<4x128xf32> to vector<4x96xf32>
    %437 = arith.negf %436 : vector<4x96xf32>
    %438 = math.exp %437 : vector<4x96xf32>
    %cst_96 = arith.constant 1.000000e+00 : f32
    %439 = vector.broadcast %cst_96 : f32 to vector<4x96xf32>
    %440 = arith.addf %439, %438 : vector<4x96xf32>
    %441 = arith.divf %439, %440 : vector<4x96xf32>
    %442 = vector.extract_strided_slice %435 {offsets = [0, 96], sizes = [4, 32], strides = [1, 1]} : vector<4x128xf32> to vector<4x32xf32>
    %443 = math.tanh %442 : vector<4x32xf32>
    %444 = vector.extract_strided_slice %441 {offsets = [0, 32], sizes = [4, 32], strides = [1, 1]} : vector<4x96xf32> to vector<4x32xf32>
    %445 = arith.mulf %444, %429 : vector<4x32xf32>
    %446 = vector.extract_strided_slice %441 {offsets = [0, 0], sizes = [4, 32], strides = [1, 1]} : vector<4x96xf32> to vector<4x32xf32>
    %447 = arith.mulf %446, %443 : vector<4x32xf32>
    %448 = arith.addf %445, %447 : vector<4x32xf32>
    %449 = vector.extract_strided_slice %441 {offsets = [0, 64], sizes = [4, 32], strides = [1, 1]} : vector<4x96xf32> to vector<4x32xf32>
    %450 = math.tanh %448 : vector<4x32xf32>
    %451 = arith.mulf %449, %450 : vector<4x32xf32>
    %cst_97 = arith.constant dense<0.000000e+00> : vector<4x128xf32>
    %452 = tpu.matmul %451, %9, %cst_97 {dimension_numbers = #tpu.dot_dimension_numbers<[1], [0], [0], [1], [0, 0, 1, 1], [], []>} : vector<4x32xf32>, vector<32x128xf32>, vector<4x128xf32> -> vector<4x128xf32>
    %c28_98 = arith.constant 28 : index
    %c384_99 = arith.constant 384 : index
    %453 = vector.load %arg7[%c28_98, %c384_99] : memref<32x512xf32, #tpu.memory_space<vmem>>, vector<4x128xf32>
    %454 = arith.addf %452, %453 : vector<4x128xf32>
    %455 = vector.extract_strided_slice %454 {offsets = [0, 0], sizes = [4, 96], strides = [1, 1]} : vector<4x128xf32> to vector<4x96xf32>
    %456 = arith.negf %455 : vector<4x96xf32>
    %457 = math.exp %456 : vector<4x96xf32>
    %cst_100 = arith.constant 1.000000e+00 : f32
    %458 = vector.broadcast %cst_100 : f32 to vector<4x96xf32>
    %459 = arith.addf %458, %457 : vector<4x96xf32>
    %460 = arith.divf %458, %459 : vector<4x96xf32>
    %461 = vector.extract_strided_slice %454 {offsets = [0, 96], sizes = [4, 32], strides = [1, 1]} : vector<4x128xf32> to vector<4x32xf32>
    %462 = math.tanh %461 : vector<4x32xf32>
    %463 = vector.extract_strided_slice %460 {offsets = [0, 32], sizes = [4, 32], strides = [1, 1]} : vector<4x96xf32> to vector<4x32xf32>
    %464 = arith.mulf %463, %448 : vector<4x32xf32>
    %465 = vector.extract_strided_slice %460 {offsets = [0, 0], sizes = [4, 32], strides = [1, 1]} : vector<4x96xf32> to vector<4x32xf32>
    %466 = arith.mulf %465, %462 : vector<4x32xf32>
    %467 = arith.addf %464, %466 : vector<4x32xf32>
    %468 = vector.extract_strided_slice %460 {offsets = [0, 64], sizes = [4, 32], strides = [1, 1]} : vector<4x96xf32> to vector<4x32xf32>
    %469 = math.tanh %467 : vector<4x32xf32>
    %470 = arith.mulf %468, %469 : vector<4x32xf32>
    %c0_101 = arith.constant 0 : index
    %c0_102 = arith.constant 0 : index
    %471 = vector.load %arg5[%c0_101, %c0_102] : memref<34x128xf32, #tpu.memory_space<vmem>>, vector<32x128xf32>
    %c32 = arith.constant 32 : index
    %c0_103 = arith.constant 0 : index
    %472 = vector.load %arg5[%c32, %c0_103] : memref<34x128xf32, #tpu.memory_space<vmem>>, vector<1x128xf32>
    %c33 = arith.constant 33 : index
    %c0_104 = arith.constant 0 : index
    %473 = vector.load %arg5[%c33, %c0_104] : memref<34x128xf32, #tpu.memory_space<vmem>>, vector<1x128xf32>
    %474 = vector.extract_strided_slice %473 {offsets = [0, 0], sizes = [1, 32], strides = [1, 1]} : vector<1x128xf32> to vector<1x32xf32>
    %475 = vector.extract_strided_slice %473 {offsets = [0, 32], sizes = [1, 1], strides = [1, 1]} : vector<1x128xf32> to vector<1x1xf32>
    %476 = tpu.concatenate %164, %165, %318, %470 in 0 : vector<4x32xf32>, vector<4x32xf32>, vector<4x32xf32>, vector<4x32xf32> -> vector<16x32xf32>
    %cst_105 = arith.constant 0.000000e+00 : f32
    %477 = vector.broadcast %cst_105 : f32 to vector<16x32xf32>
    %478 = arith.maximumf %476, %477 : vector<16x32xf32>
    %cst_106 = arith.constant dense<0.000000e+00> : vector<16x128xf32>
    %479 = tpu.matmul %478, %471, %cst_106 {dimension_numbers = #tpu.dot_dimension_numbers<[1], [0], [0], [1], [0, 0, 1, 1], [], []>} : vector<16x32xf32>, vector<32x128xf32>, vector<16x128xf32> -> vector<16x128xf32>
    %480 = vector.broadcast %472 : vector<1x128xf32> to vector<16x128xf32>
    %481 = arith.addf %479, %480 : vector<16x128xf32>
    %482 = vector.extract_strided_slice %481 {offsets = [0, 0], sizes = [4, 32], strides = [1, 1]} : vector<16x128xf32> to vector<4x32xf32>
    %cst_107 = arith.constant 0.000000e+00 : f32
    %483 = vector.broadcast %cst_107 : f32 to vector<4x32xf32>
    %484 = arith.maximumf %482, %483 : vector<4x32xf32>
    %485 = vector.broadcast %474 : vector<1x32xf32> to vector<4x32xf32>
    %486 = arith.mulf %484, %485 : vector<4x32xf32>
    %cst_108 = arith.constant dense<0.000000e+00> : vector<4xf32>
    %487 = vector.multi_reduction <add>, %486, %cst_108 [1] : vector<4x32xf32> to vector<4xf32>
    %488 = vector.shape_cast %487 : vector<4xf32> to vector<4x1xf32>
    %489 = vector.broadcast %475 : vector<1x1xf32> to vector<4x1xf32>
    %490 = arith.addf %488, %489 : vector<4x1xf32>
    %491 = vector.extract_strided_slice %481 {offsets = [4, 32], sizes = [12, 17], strides = [1, 1]} : vector<16x128xf32> to vector<12x17xf32>
    %cst_109 = arith.constant dense<0xFF800000> : vector<12xf32>
    %492 = vector.multi_reduction <maximumf>, %491, %cst_109 [1] : vector<12x17xf32> to vector<12xf32>
    %493 = vector.shape_cast %492 : vector<12xf32> to vector<12x1xf32>
    %494 = vector.broadcast %493 : vector<12x1xf32> to vector<12x17xf32>
    %495 = arith.subf %491, %494 : vector<12x17xf32>
    %496 = math.exp %495 : vector<12x17xf32>
    %cst_110 = arith.constant dense<0.000000e+00> : vector<12xf32>
    %497 = vector.multi_reduction <add>, %496, %cst_110 [1] : vector<12x17xf32> to vector<12xf32>
    %498 = vector.shape_cast %497 : vector<12xf32> to vector<12x1xf32>
    %499 = vector.broadcast %498 : vector<12x1xf32> to vector<12x17xf32>
    %500 = arith.divf %496, %499 : vector<12x17xf32>
    %cst_111 = arith.constant 0.000000e+00 : f32
    %501 = vector.broadcast %cst_111 : f32 to vector<4x127xf32>
    %502 = tpu.concatenate %490, %501 in 1 : vector<4x1xf32>, vector<4x127xf32> -> vector<4x128xf32>
    %cst_112 = arith.constant 0.000000e+00 : f32
    %503 = vector.broadcast %cst_112 : f32 to vector<12x111xf32>
    %504 = tpu.concatenate %500, %503 in 1 : vector<12x17xf32>, vector<12x111xf32> -> vector<12x128xf32>
    %505 = tpu.concatenate %502, %504 in 0 : vector<4x128xf32>, vector<12x128xf32> -> vector<16x128xf32>
    %c0_113 = arith.constant 0 : index
    %c0_114 = arith.constant 0 : index
    %506 = vector.load %arg6[%c0_113, %c0_114] : memref<16x128xf32, #tpu.memory_space<vmem>>, vector<16x128xf32>
    tpu.vector_store %arg6[%c0_113, %c0_114], %505 {strides = array<i32>} : memref<16x128xf32, #tpu.memory_space<vmem>>, vector<16x128xf32>,
    return
  }
}

</mosaic_0001>

<llo_original>
// kernel: lstm_policy_forward.1
$region0: #{lstm_policy_forward.1}
  #allocation0 [shape = 'u32[]', space=smem, size = 0x4, offset = 0x4, fixed_abs, tag = 'smem constant byte address 0x4 - core index']
  #allocation1 [shape = 'u32[144,128]{1,0:T(1,128)}', space=vmem, size = 0x12000, scoped, tag = 'internal scratch']
  #allocation2 [shape = 'f32[32,512]{1,0:T(8,128)}', space=vmem, size = 0x10000, scoped, tag = 'scratch operand']
  %s0 = inlined_call_operand.vmem [shape: f32[32,16], index: 0, kind: input, shape index: {}]
  %s1 = inlined_call_operand.vmem [shape: f32[16,512], index: 1, kind: input, shape index: {}]
  %s2 = inlined_call_operand.vmem [shape: f32[1,512], index: 2, kind: input, shape index: {}]
  %s3 = inlined_call_operand.hbm [shape: f32[64,256], index: 3, kind: input, shape index: {}]
  %s4 = inlined_call_operand.hbm [shape: f32[32,256], index: 4, kind: input, shape index: {}]
  %s5 = inlined_call_operand.hbm [shape: f32[34,128], index: 5, kind: input, shape index: {}]
  %s6 = inlined_call_operand.vmem [shape: f32[16,128], index: 6, kind: output, shape index: {}]
  %s7 = sld [smem:[#allocation0]]
  $region46: #{lstm_policy_forward.1} parent=0
    _
  %s9 = ssub.s32 1, %s7
  %s10 = scalar_select 0, %s9, %s7
  $region1: #{lstm_policy_forward.1} parent=0
    #allocation3 [shape = 'u8[65536]{0}', space=vmem, size = 0x10000, scoped, tag = 'input window, operand 3, single buffered']
    #allocation4 [shape = 's32[1]{0}', space=sflag, size = 0x4, scoped, tag = 'scoped memory for lstm_policy_forward.1']
    #allocation5 [shape = 'u8[32768]{0}', space=vmem, size = 0x8000, scoped, tag = 'input window, operand 4, single buffered']
    #allocation6 [shape = 's32[1]{0}', space=sflag, size = 0x4, scoped, tag = 'scoped memory for lstm_policy_forward.1']
    #allocation7 [shape = 'u8[20480]{0}', space=vmem, size = 0x5000, scoped, tag = 'input window, operand 5, single buffered']
    %11 = vsyncpa [#allocation4], 0
    %12 = vsyncpa [#allocation6], 0
    // Predicated region
    $region2: #{lstm_policy_forward.1} parent=1 // pred_check
      _
    $region3: #{lstm_policy_forward.1} parent=1 // pred_check_branch
      %14 = sbr.rel (0) target = $region5
    $region4: #{lstm_policy_forward.1} parent=1 // pred_region
      _
    $region5: #{lstm_policy_forward.1} parent=1 // pred_fallthru
      _
    // Predicated region
    $region6: #{lstm_policy_forward.1} parent=1 // pred_check
      _
    $region7: #{lstm_policy_forward.1} parent=1 // pred_check_branch
      %16 = sbr.rel (0) target = $region9
    $region8: #{lstm_policy_forward.1} parent=1 // pred_region
      _
    $region9: #{lstm_policy_forward.1} parent=1 // pred_fallthru
      _
    // Predicated region
    $region10: #{lstm_policy_forward.1} parent=1 // pred_check
      _
    $region11: #{lstm_policy_forward.1} parent=1 // pred_check_branch
      %18 = sbr.rel (0) target = $region13
    $region12: #{lstm_policy_forward.1} parent=1 // pred_region
      _
    $region13: #{lstm_policy_forward.1} parent=1 // pred_fallthru
      _
    // Predicated region
    $region14: #{lstm_policy_forward.1} parent=1 // pred_check
      _
    $region15: #{lstm_policy_forward.1} parent=1 // pred_check_branch
      %20 = sbr.rel (0) target = $region17
    $region16: #{lstm_policy_forward.1} parent=1 // pred_region
      %s22 = ssub.s32 2048, 2048
      %23 = vsyncadd [#allocation4], %s22
      %s24 = sshll.u32 [#allocation3], 4
      %s25 = int_to_ptr.vmem [resolvable:$true] %s24
      %30 = dma.hbm_to_vmem [thread:$0]  %s3, 2048, %s25, [#allocation4], 256, 256, 16
    $region17: #{lstm_policy_forward.1} parent=1 // pred_fallthru
      _
    // Predicated region
    $region18: #{lstm_policy_forward.1} parent=1 // pred_check
      _
    $region19: #{lstm_policy_forward.1} parent=1 // pred_check_branch
      %32 = sbr.rel (0) target = $region21
    $region20: #{lstm_policy_forward.1} parent=1 // pred_region
      %s34 = ssub.s32 1024, 1024
      %35 = vsyncadd [#allocation6], %s34
      %s36 = sshll.u32 [#allocation5], 4
      %s37 = int_to_ptr.vmem [resolvable:$true] %s36
      %42 = dma.hbm_to_vmem [thread:$0]  %s4, 1024, %s37, [#allocation6], 256, 256, 16
    $region21: #{lstm_policy_forward.1} parent=1 // pred_fallthru
      _
    // Predicated region
    $region22: #{lstm_policy_forward.1} parent=1 // pred_check
      _
    $region23: #{lstm_policy_forward.1} parent=1 // pred_check_branch
      %44 = sbr.rel (0) target = $region25
    $region24: #{lstm_policy_forward.1} parent=1 // pred_region
      %s46 = ssub.s32 640, 640
      %47 = vsyncadd [#allocation6], %s46
      %s48 = sshll.u32 [#allocation7], 4
      %s49 = int_to_ptr.vmem [resolvable:$true] %s48
      %54 = dma.hbm_to_vmem [thread:$0]  %s5, 640, %s49, [#allocation6], 128, 128, 8
    $region25: #{lstm_policy_forward.1} parent=1 // pred_fallthru
      _
    // Predicated region
    $region26: #{lstm_policy_forward.1} parent=1 // pred_check
      _
    $region27: #{lstm_policy_forward.1} parent=1 // pred_check_branch
      %56 = sbr.rel (0) target = $region29
    $region28: #{lstm_policy_forward.1} parent=1 // pred_region
      %57 = dma.done [#allocation4], 2048
    $region29: #{lstm_policy_forward.1} parent=1 // pred_fallthru
      _
    // Predicated region
    $region30: #{lstm_policy_forward.1} parent=1 // pred_check
      _
    $region31: #{lstm_policy_forward.1} parent=1 // pred_check_branch
      %59 = sbr.rel (0) target = $region33
    $region32: #{lstm_policy_forward.1} parent=1 // pred_region
      %60 = dma.done [#allocation6], 1024
    $region33: #{lstm_policy_forward.1} parent=1 // pred_fallthru
      _
    // Predicated region
    $region34: #{lstm_policy_forward.1} parent=1 // pred_check
      _
    $region35: #{lstm_policy_forward.1} parent=1 // pred_check_branch
      %62 = sbr.rel (0) target = $region37
    $region36: #{lstm_policy_forward.1} parent=1 // pred_region
      %63 = dma.done [#allocation6], 640
    $region37: #{lstm_policy_forward.1} parent=1 // pred_fallthru
      _
    %v64 = vld [vmem:[%s0] sm:$0xff]
    %v65 = vld [vmem:[%s0 + $0x8] sm:$0xff]
    %v66 = vld [vmem:[%s0 + $0x10] sm:$0xff]
    %v67 = vld [vmem:[%s0 + $0x18] sm:$0xff]
    %v68 = vld [vmem:[%s1] sm:$0xff]
    %v69 = vld [vmem:[%s1 + $0x8] sm:$0xff]
    %v70 = vld [vmem:[%s1 + $0x10] sm:$0xff]
    %v71 = vld [vmem:[%s1 + $0x18] sm:$0xff]
    %v72 = vld [vmem:[%s1 + $0x20] sm:$0xff]
    %v73 = vld [vmem:[%s1 + $0x28] sm:$0xff]
    %v74 = vld [vmem:[%s1 + $0x30] sm:$0xff]
    %v75 = vld [vmem:[%s1 + $0x38] sm:$0xff]
    %v76 = vld [vmem:[%s2] sm:$0xf]
    %v78 = vlaneseq
    %v79 = vshrl.u32 %v78, 7
    %v80 = vsub.s32 0, %v79
    %v81 = vrot.slane %v76, %v80
    %v82 = vlaneseq
    %v83 = vshrl.u32 %v82, 7
    %v84 = vsub.s32 1, %v83
    %v85 = vrot.slane %v76, %v84
    %v86 = vlaneseq
    %v87 = vshrl.u32 %v86, 7
    %v88 = vsub.s32 2, %v87
    %v89 = vrot.slane %v76, %v88
    %v90 = vlaneseq
    %v91 = vshrl.u32 %v90, 7
    %v92 = vsub.s32 3, %v91
    %v93 = vrot.slane %v76, %v92
    %vm98 = vcmask 130048
    %v100 = vsel %vm98, %v64, 0
    %v103 = vsel %vm98, %v65, 0
    %v106 = vsel %vm98, %v66, 0
    %v109 = vsel %vm98, %v67, 0
    %111 = vmatprep.subr.mxu0 %v69
    %112 = vmatpush1.msra.mxu0 %v68
    %113 = vmatprep.subr.mxu0 %v73
    %114 = vmatpush1.msra.mxu0 %v72
    %115 = vmatprep.subr.mxu0 0.0
    %116 = vmatpush1.msra.mxu0 0.0
    %117 = vmatprep.subr.mxu0 0.0
    %118 = vmatpush1.msra.mxu0 0.0
    %119 = vmatprep.subr.mxu0 0.0
    %120 = vmatpush1.msra.mxu0 0.0
    %121 = vmatprep.subr.mxu0 0.0
    %122 = vmatpush1.msra.mxu0 0.0
    %123 = vmatprep.subr.mxu0 0.0
    %124 = vmatpush1.msra.mxu0 0.0
    %125 = vmatprep.subr.mxu0 0.0
    %126 = vmatpush1.msra.mxu0 0.0
    %127 = vmatprep.subr.mxu0 0.0
    %128 = vmatpush1.msra.mxu0 0.0
    %129 = vmatprep.subr.mxu0 0.0
    %130 = vmatpush1.msra.mxu0 0.0
    %131 = vmatprep.subr.mxu0 0.0
    %132 = vmatpush1.msra.mxu0 0.0
    %133 = vmatprep.subr.mxu0 0.0
    %134 = vmatpush1.msra.mxu0 0.0
    %135 = vmatprep.subr.mxu0 0.0
    %136 = vmatpush1.msra.mxu0 0.0
    %137 = vmatprep.subr.mxu0 0.0
    %138 = vmatpush1.msra.mxu0 0.0
    %139 = vmatprep.subr.mxu0 0.0
    %140 = vmatpush1.msra.mxu0 0.0
    %141 = vmatprep.subr.mxu0 0.0
    %142 = vmatpush1.msra.mxu0 0.0
    %143 = vmatprep.subr.mxu0 0.0
    %144 = vmatpush1.msra.mxu0 0.0
    %145 = vmatprep.subr.mxu0 0.0
    %146 = vmatpush1.msra.mxu0 0.0
    %147 = vmatprep.subr.mxu0 0.0
    %148 = vmatpush1.msra.mxu0 0.0
    %149 = vmatprep.subr.mxu0 0.0
    %150 = vmatpush1.msra.mxu0 0.0
    %151 = vmatprep.subr.mxu0 0.0
    %152 = vmatpush1.msra.mxu0 0.0
    %153 = vmatprep.subr.mxu0 0.0
    %154 = vmatpush1.msra.mxu0 0.0
    %155 = vmatprep.subr.mxu0 0.0
    %156 = vmatpush1.msra.mxu0 0.0
    %157 = vmatprep.subr.mxu0 0.0
    %158 = vmatpush1.msra.mxu0 0.0
    %159 = vmatprep.subr.mxu0 0.0
    %160 = vmatpush1.msra.mxu0 0.0
    %161 = vmatprep.subr.mxu0 0.0
    %162 = vmatpush1.msra.mxu0 0.0
    %163 = vmatprep.subr.mxu0 0.0
    %164 = vmatpush1.msra.mxu0 0.0
    %165 = vmatprep.subr.mxu0 0.0
    %166 = vmatpush1.msra.mxu0 0.0
    %167 = vmatprep.subr.mxu0 0.0
    %168 = vmatpush1.msra.mxu0 0.0
    %169 = vmatprep.subr.mxu0 0.0
    %170 = vmatpush1.msra.mxu0 0.0
    %171 = vmatprep.subr.mxu0 0.0
    %172 = vmatpush1.msra.mxu0 0.0
    %173 = vmatprep.subr.mxu0 0.0
    %174 = vmatpush1.msra.mxu0 0.0
    %175 = vmatprep.mubr.f32.mxu0 0.0
    %176 = vmatmul.mubr.f32.gmra.mrb[0].mxu0 %v100
    %v177 = vpop.f32.mrb[0].mxu0
    %v178 = vadd.f32 %v81, %v177
    %v179 = vpop.f32.mrb[0].mxu0
    %v180 = vadd.f32 %v85, %v179
    %181 = vmatprep.mubr.f32.mxu0 0.0
    %182 = vmatmul.mubr.f32.gmra.mrb[0].mxu0 %v103
    %v183 = vpop.f32.mrb[0].mxu0
    %v184 = vadd.f32 %v81, %v183
    %v185 = vpop.f32.mrb[0].mxu0
    %v186 = vadd.f32 %v85, %v185
    %187 = vmatprep.mubr.f32.mxu0 0.0
    %188 = vmatmul.mubr.f32.gmra.mrb[0].mxu0 %v106
    %v189 = vpop.f32.mrb[0].mxu0
    %v190 = vadd.f32 %v81, %v189
    %v191 = vpop.f32.mrb[0].mxu0
    %v192 = vadd.f32 %v85, %v191
    %193 = vmatprep.mubr.f32.mxu0 0.0
    %194 = vmatmul.mubr.f32.gmra.mrb[0].mxu0 %v109
    %v195 = vpop.f32.mrb[0].mxu0
    %v196 = vadd.f32 %v81, %v195
    %v197 = vpop.f32.mrb[0].mxu0
    %v198 = vadd.f32 %v85, %v197
    %199 = vdwg.mxu0
    %200 = vmatprep.subr.mxu0 %v71
    %201 = vmatpush1.msra.mxu0 %v70
    %202 = vmatprep.subr.mxu0 %v75
    %203 = vmatpush1.msra.mxu0 %v74
    %204 = vmatprep.subr.mxu0 0.0
    %205 = vmatpush1.msra.mxu0 0.0
    %206 = vmatprep.subr.mxu0 0.0
    %207 = vmatpush1.msra.mxu0 0.0
    %208 = vmatprep.subr.mxu0 0.0
    %209 = vmatpush1.msra.mxu0 0.0
    %210 = vmatprep.subr.mxu0 0.0
    %211 = vmatpush1.msra.mxu0 0.0
    %212 = vmatprep.subr.mxu0 0.0
    %213 = vmatpush1.msra.mxu0 0.0
    %214 = vmatprep.subr.mxu0 0.0
    %215 = vmatpush1.msra.mxu0 0.0
    %216 = vmatprep.subr.mxu0 0.0
    %217 = vmatpush1.msra.mxu0 0.0
    %218 = vmatprep.subr.mxu0 0.0
    %219 = vmatpush1.msra.mxu0 0.0
    %220 = vmatprep.subr.mxu0 0.0
    %221 = vmatpush1.msra.mxu0 0.0
    %222 = vmatprep.subr.mxu0 0.0
    %223 = vmatpush1.msra.mxu0 0.0
    %224 = vmatprep.subr.mxu0 0.0
    %225 = vmatpush1.msra.mxu0 0.0
    %226 = vmatprep.subr.mxu0 0.0
    %227 = vmatpush1.msra.mxu0 0.0
    %228 = vmatprep.subr.mxu0 0.0
    %229 = vmatpush1.msra.mxu0 0.0
    %230 = vmatprep.subr.mxu0 0.0
    %231 = vmatpush1.msra.mxu0 0.0
    %232 = vmatprep.subr.mxu0 0.0
    %233 = vmatpush1.msra.mxu0 0.0
    %234 = vmatprep.subr.mxu0 0.0
    %235 = vmatpush1.msra.mxu0 0.0
    %236 = vmatprep.subr.mxu0 0.0
    %237 = vmatpush1.msra.mxu0 0.0
    %238 = vmatprep.subr.mxu0 0.0
    %239 = vmatpush1.msra.mxu0 0.0
    %240 = vmatprep.subr.mxu0 0.0
    %241 = vmatpush1.msra.mxu0 0.0
    %242 = vmatprep.subr.mxu0 0.0
    %243 = vmatpush1.msra.mxu0 0.0
    %244 = vmatprep.subr.mxu0 0.0
    %245 = vmatpush1.msra.mxu0 0.0
    %246 = vmatprep.subr.mxu0 0.0
    %247 = vmatpush1.msra.mxu0 0.0
    %248 = vmatprep.subr.mxu0 0.0
    %249 = vmatpush1.msra.mxu0 0.0
    %250 = vmatprep.subr.mxu0 0.0
    %251 = vmatpush1.msra.mxu0 0.0
    %252 = vmatprep.subr.mxu0 0.0
    %253 = vmatpush1.msra.mxu0 0.0
    %254 = vmatprep.subr.mxu0 0.0
    %255 = vmatpush1.msra.mxu0 0.0
    %256 = vmatprep.subr.mxu0 0.0
    %257 = vmatpush1.msra.mxu0 0.0
    %258 = vmatprep.subr.mxu0 0.0
    %259 = vmatpush1.msra.mxu0 0.0
    %260 = vmatprep.subr.mxu0 0.0
    %261 = vmatpush1.msra.mxu0 0.0
    %262 = vmatprep.subr.mxu0 0.0
    %263 = vmatpush1.msra.mxu0 0.0
    %264 = vmatprep.mubr.f32.mxu0 0.0
    %265 = vmatmul.mubr.f32.gmra.mrb[0].mxu0 %v100
    %v266 = vpop.f32.mrb[0].mxu0
    %v267 = vadd.f32 %v89, %v266
    %v268 = vpop.f32.mrb[0].mxu0
    %v269 = vadd.f32 %v93, %v268
    %270 = vmatprep.mubr.f32.mxu0 0.0
    %271 = vmatmul.mubr.f32.gmra.mrb[0].mxu0 %v103
    %v272 = vpop.f32.mrb[0].mxu0
    %v273 = vadd.f32 %v89, %v272
    %v274 = vpop.f32.mrb[0].mxu0
    %v275 = vadd.f32 %v93, %v274
    %276 = vmatprep.mubr.f32.mxu0 0.0
    %277 = vmatmul.mubr.f32.gmra.mrb[0].mxu0 %v106
    %v278 = vpop.f32.mrb[0].mxu0
    %v279 = vadd.f32 %v89, %v278
    %v280 = vpop.f32.mrb[0].mxu0
    %v281 = vadd.f32 %v93, %v280
    %282 = vmatprep.mubr.f32.mxu0 0.0
    %283 = vmatmul.mubr.f32.gmra.mrb[0].mxu0 %v109
    %v284 = vpop.f32.mrb[0].mxu0
    %v285 = vadd.f32 %v89, %v284
    %v286 = vpop.f32.mrb[0].mxu0
    %v287 = vadd.f32 %v93, %v286
    %288 = vdwg.mxu0
    %289 = vst [vmem:[#allocation2] sm:$0xff] %v178
    %290 = vst [vmem:[#allocation2 + $0x8] sm:$0xff] %v180
    %291 = vst [vmem:[#allocation2 + $0x10] sm:$0xff] %v267
    %292 = vst [vmem:[#allocation2 + $0x18] sm:$0xff] %v269
    %293 = vst [vmem:[#allocation2 + $0x20] sm:$0xff] %v184
    %294 = vst [vmem:[#allocation2 + $0x28] sm:$0xff] %v186
    %295 = vst [vmem:[#allocation2 + $0x30] sm:$0xff] %v273
    %296 = vst [vmem:[#allocation2 + $0x38] sm:$0xff] %v275
    %297 = vst [vmem:[#allocation2 + $0x40] sm:$0xff] %v190
    %298 = vst [vmem:[#allocation2 + $0x48] sm:$0xff] %v192
    %299 = vst [vmem:[#allocation2 + $0x50] sm:$0xff] %v279
    %300 = vst [vmem:[#allocation2 + $0x58] sm:$0xff] %v281
    %301 = vst [vmem:[#allocation2 + $0x60] sm:$0xff] %v196
    %302 = vst [vmem:[#allocation2 + $0x68] sm:$0xff] %v198
    %303 = vst [vmem:[#allocation2 + $0x70] sm:$0xff] %v285
    %304 = vst [vmem:[#allocation2 + $0x78] sm:$0xff] %v287
    %v305 = vld [vmem:[#allocation3] sm:$0xff]
    %v306 = vld [vmem:[#allocation3 + $0x8] sm:$0xff]
    %v307 = vld [vmem:[#allocation3 + $0x10] sm:$0xff]
    %v308 = vld [vmem:[#allocation3 + $0x18] sm:$0xff]
    %v309 = vld [vmem:[#allocation3 + $0x20] sm:$0xff]
    %v310 = vld [vmem:[#allocation3 + $0x28] sm:$0xff]
    %v311 = vld [vmem:[#allocation3 + $0x30] sm:$0xff]
    %v312 = vld [vmem:[#allocation3 + $0x38] sm:$0xff]
    %v313 = vld [vmem:[#allocation3 + $0x40] sm:$0xff]
    %v314 = vld [vmem:[#allocation3 + $0x48] sm:$0xff]
    %v315 = vld [vmem:[#allocation3 + $0x50] sm:$0xff]
    %v316 = vld [vmem:[#allocation3 + $0x58] sm:$0xff]
    %v317 = vld [vmem:[#allocation3 + $0x60] sm:$0xff]
    %v318 = vld [vmem:[#allocation3 + $0x68] sm:$0xff]
    %v319 = vld [vmem:[#allocation3 + $0x70] sm:$0xff]
    %v320 = vld [vmem:[#allocation3 + $0x78] sm:$0xff]
    %v321 = vld [vmem:[#allocation5] sm:$0xff]
    %v322 = vld [vmem:[#allocation5 + $0x10] sm:$0xff]
    %v323 = vld [vmem:[#allocation5 + $0x20] sm:$0xff]
    %v324 = vld [vmem:[#allocation5 + $0x30] sm:$0xff]
    %v325 = vld [vmem:[#allocation5 + $0x8] sm:$0xff]
    %v326 = vld [vmem:[#allocation5 + $0x18] sm:$0xff]
    %v327 = vld [vmem:[#allocation5 + $0x28] sm:$0xff]
    %v328 = vld [vmem:[#allocation5 + $0x38] sm:$0xff]
    %v329 = vld [vmem:[#allocation2] sm:$0xf]
    %v330 = vld [vmem:[#allocation2 + $0x8] sm:$0xf]
    %vm331 = vcmask 523264
    %v333 = vsel %vm331, 0.0, 0
    %335 = vmatprep.subr.mxu0 %v306
    %336 = vmatpush1.msra.mxu0 %v305
    %337 = vmatprep.subr.mxu0 %v308
    %338 = vmatpush1.msra.mxu0 %v307
    %339 = vmatprep.subr.mxu0 %v310
    %340 = vmatpush1.msra.mxu0 %v309
    %341 = vmatprep.subr.mxu0 %v312
    %342 = vmatpush1.msra.mxu0 %v311
    %343 = vmatprep.subr.mxu0 %v314
    %344 = vmatpush1.msra.mxu0 %v313
    %345 = vmatprep.subr.mxu0 %v316
    %346 = vmatpush1.msra.mxu0 %v315
    %347 = vmatprep.subr.mxu0 %v318
    %348 = vmatpush1.msra.mxu0 %v317
    %349 = vmatprep.subr.mxu0 %v320
    %350 = vmatpush1.msra.mxu0 %v319
    %351 = vmatprep.subr.mxu0 0.0
    %352 = vmatpush1.msra.mxu0 0.0
    %353 = vmatprep.subr.mxu0 0.0
    %354 = vmatpush1.msra.mxu0 0.0
    %355 = vmatprep.subr.mxu0 0.0
    %356 = vmatpush1.msra.mxu0 0.0
    %357 = vmatprep.subr.mxu0 0.0
    %358 = vmatpush1.msra.mxu0 0.0
    %359 = vmatprep.subr.mxu0 0.0
    %360 = vmatpush1.msra.mxu0 0.0
    %361 = vmatprep.subr.mxu0 0.0
    %362 = vmatpush1.msra.mxu0 0.0
    %363 = vmatprep.subr.mxu0 0.0
    %364 = vmatpush1.msra.mxu0 0.0
    %365 = vmatprep.subr.mxu0 0.0
    %366 = vmatpush1.msra.mxu0 0.0
    %367 = vmatprep.subr.mxu0 0.0
    %368 = vmatpush1.msra.mxu0 0.0
    %369 = vmatprep.subr.mxu0 0.0
    %370 = vmatpush1.msra.mxu0 0.0
    %371 = vmatprep.subr.mxu0 0.0
    %372 = vmatpush1.msra.mxu0 0.0
    %373 = vmatprep.subr.mxu0 0.0
    %374 = vmatpush1.msra.mxu0 0.0
    %375 = vmatprep.subr.mxu0 0.0
    %376 = vmatpush1.msra.mxu0 0.0
    %377 = vmatprep.subr.mxu0 0.0
    %378 = vmatpush1.msra.mxu0 0.0
    %379 = vmatprep.subr.mxu0 0.0
    %380 = vmatpush1.msra.mxu0 0.0
    %381 = vmatprep.subr.mxu0 0.0
    %382 = vmatpush1.msra.mxu0 0.0
    %383 = vmatprep.subr.mxu0 0.0
    %384 = vmatpush1.msra.mxu0 0.0
    %385 = vmatprep.subr.mxu0 0.0
    %386 = vmatpush1.msra.mxu0 0.0
    %387 = vmatprep.subr.mxu0 0.0
    %388 = vmatpush1.msra.mxu0 0.0
    %389 = vmatprep.subr.mxu0 0.0
    %390 = vmatpush1.msra.mxu0 0.0
    %391 = vmatprep.subr.mxu0 0.0
    %392 = vmatpush1.msra.mxu0 0.0
    %393 = vmatprep.subr.mxu0 0.0
    %394 = vmatpush1.msra.mxu0 0.0
    %395 = vmatprep.subr.mxu0 0.0
    %396 = vmatpush1.msra.mxu0 0.0
    %397 = vmatprep.subr.mxu0 0.0
    %398 = vmatpush1.msra.mxu0 0.0
    %399 = vmatprep.mubr.f32.mxu0 0.0
    %400 = vmatmul.mubr.f32.gmra.mrb[0].mxu0 %v333
    %v401 = vpop.f32.mrb[0].mxu0
    %v402 = vadd.f32 %v329, %v401
    %v403 = vpop.f32.mrb[0].mxu0
    %v404 = vadd.f32 %v330, %v403
    %405 = vdwg.mxu0
    %v406 = vxor.u32 %v402, 2147483648
    %v407 = vxor.u32 %v404, 2147483648
    %v408 = vmul.f32 %v406, 1.442695
    %v409 = vpow.pop %v408
    %v410 = vmul.f32 %v407, 1.442695
    %v411 = vpow.pop %v410
    %v412 = vadd.f32 %v409, 1.0
    %v413 = vadd.f32 %v411, 1.0
    %v414 = vrcp.pop %v412
    %v415 = vmul.f32 1.0, %v414
    %v416 = vrcp.pop %v413
    %v417 = vmul.f32 1.0, %v416
    %v418 = vtanh.pop %v404
    %v419 = vmul.f32 %v415, 0.0
    %421 = vrot.lane.b32.xlu0 %v418, 64
    %v422 = vpop.permute.xlu0 %421
    %v424 = vmul.f32 %v415, %v422
    %426 = vrot.lane.b32.xlu0 %v424, 64
    %v427 = vpop.permute.xlu0 %426
    %v429 = vadd.f32 %v419, %v427
    %v430 = vtanh.pop %v429
    %432 = vrot.lane.b32.xlu0 %v430, 64
    %v433 = vpop.permute.xlu0 %432
    %v435 = vmul.f32 %v417, %v433
    %v436 = vld [vmem:[#allocation2] sm:$0xf0]
    %v437 = vld [vmem:[#allocation2 + $0x8] sm:$0xf0]
    %v440 = vrot.slane %v436, 4
    %v441 = vrot.slane %v437, 4
    %v445 = vsel %vm331, %v435, 0
    %447 = vmatprep.subr.mxu0 %v306
    %448 = vmatpush1.msra.mxu0 %v305
    %449 = vmatprep.subr.mxu0 %v308
    %450 = vmatpush1.msra.mxu0 %v307
    %451 = vmatprep.subr.mxu0 %v310
    %452 = vmatpush1.msra.mxu0 %v309
    %453 = vmatprep.subr.mxu0 %v312
    %454 = vmatpush1.msra.mxu0 %v311
    %455 = vmatprep.subr.mxu0 %v314
    %456 = vmatpush1.msra.mxu0 %v313
    %457 = vmatprep.subr.mxu0 %v316
    %458 = vmatpush1.msra.mxu0 %v315
    %459 = vmatprep.subr.mxu0 %v318
    %460 = vmatpush1.msra.mxu0 %v317
    %461 = vmatprep.subr.mxu0 %v320
    %462 = vmatpush1.msra.mxu0 %v319
    %463 = vmatprep.subr.mxu0 0.0
    %464 = vmatpush1.msra.mxu0 0.0
    %465 = vmatprep.subr.mxu0 0.0
    %466 = vmatpush1.msra.mxu0 0.0
    %467 = vmatprep.subr.mxu0 0.0
    %468 = vmatpush1.msra.mxu0 0.0
    %469 = vmatprep.subr.mxu0 0.0
    %470 = vmatpush1.msra.mxu0 0.0
    %471 = vmatprep.subr.mxu0 0.0
    %472 = vmatpush1.msra.mxu0 0.0
    %473 = vmatprep.subr.mxu0 0.0
    %474 = vmatpush1.msra.mxu0 0.0
    %475 = vmatprep.subr.mxu0 0.0
    %476 = vmatpush1.msra.mxu0 0.0
    %477 = vmatprep.subr.mxu0 0.0
    %478 = vmatpush1.msra.mxu0 0.0
    %479 = vmatprep.subr.mxu0 0.0
    %480 = vmatpush1.msra.mxu0 0.0
    %481 = vmatprep.subr.mxu0 0.0
    %482 = vmatpush1.msra.mxu0 0.0
    %483 = vmatprep.subr.mxu0 0.0
    %484 = vmatpush1.msra.mxu0 0.0
    %485 = vmatprep.subr.mxu0 0.0
    %486 = vmatpush1.msra.mxu0 0.0
    %487 = vmatprep.subr.mxu0 0.0
    %488 = vmatpush1.msra.mxu0 0.0
    %489 = vmatprep.subr.mxu0 0.0
    %490 = vmatpush1.msra.mxu0 0.0
    %491 = vmatprep.subr.mxu0 0.0
    %492 = vmatpush1.msra.mxu0 0.0
    %493 = vmatprep.subr.mxu0 0.0
    %494 = vmatpush1.msra.mxu0 0.0
    %495 = vmatprep.subr.mxu0 0.0
    %496 = vmatpush1.msra.mxu0 0.0
    %497 = vmatprep.subr.mxu0 0.0
    %498 = vmatpush1.msra.mxu0 0.0
    %499 = vmatprep.subr.mxu0 0.0
    %500 = vmatpush1.msra.mxu0 0.0
    %501 = vmatprep.subr.mxu0 0.0
    %502 = vmatpush1.msra.mxu0 0.0
    %503 = vmatprep.subr.mxu0 0.0
    %504 = vmatpush1.msra.mxu0 0.0
    %505 = vmatprep.subr.mxu0 0.0
    %506 = vmatpush1.msra.mxu0 0.0
    %507 = vmatprep.subr.mxu0 0.0
    %508 = vmatpush1.msra.mxu0 0.0
    %509 = vmatprep.subr.mxu0 0.0
    %510 = vmatpush1.msra.mxu0 0.0
    %511 = vmatprep.mubr.f32.mxu0 0.0
    %512 = vmatmul.mubr.f32.gmra.mrb[0].mxu0 %v445
    %v513 = vpop.f32.mrb[0].mxu0
    %v514 = vadd.f32 %v440, %v513
    %v515 = vpop.f32.mrb[0].mxu0
    %v516 = vadd.f32 %v441, %v515
    %517 = vdwg.mxu0
    %v518 = vxor.u32 %v514, 2147483648
    %v519 = vxor.u32 %v516, 2147483648
    %v520 = vmul.f32 %v518, 1.442695
    %v521 = vpow.pop %v520
    %v522 = vmul.f32 %v519, 1.442695
    %v523 = vpow.pop %v522
    %v524 = vadd.f32 %v521, 1.0
    %v525 = vadd.f32 %v523, 1.0
    %v526 = vrcp.pop %v524
    %v527 = vmul.f32 1.0, %v526
    %v528 = vrcp.pop %v525
    %v529 = vmul.f32 1.0, %v528
    %v530 = vtanh.pop %v516
    %v531 = vmul.f32 %v527, %v429
    %533 = vrot.lane.b32.xlu0 %v530, 64
    %v534 = vpop.permute.xlu0 %533
    %v536 = vmul.f32 %v527, %v534
    %538 = vrot.lane.b32.xlu0 %v536, 64
    %v539 = vpop.permute.xlu0 %538
    %v541 = vadd.f32 %v531, %v539
    %v542 = vtanh.pop %v541
    %544 = vrot.lane.b32.xlu0 %v542, 64
    %v545 = vpop.permute.xlu0 %544
    %v547 = vmul.f32 %v529, %v545
    %v548 = vld [vmem:[#allocation2 + $0x20] sm:$0xf]
    %v549 = vld [vmem:[#allocation2 + $0x28] sm:$0xf]
    %v551 = vsel %vm331, %v547, 0
    %553 = vmatprep.subr.mxu0 %v306
    %554 = vmatpush1.msra.mxu0 %v305
    %555 = vmatprep.subr.mxu0 %v308
    %556 = vmatpush1.msra.mxu0 %v307
    %557 = vmatprep.subr.mxu0 %v310
    %558 = vmatpush1.msra.mxu0 %v309
    %559 = vmatprep.subr.mxu0 %v312
    %560 = vmatpush1.msra.mxu0 %v311
    %561 = vmatprep.subr.mxu0 %v314
    %562 = vmatpush1.msra.mxu0 %v313
    %563 = vmatprep.subr.mxu0 %v316
    %564 = vmatpush1.msra.mxu0 %v315
    %565 = vmatprep.subr.mxu0 %v318
    %566 = vmatpush1.msra.mxu0 %v317
    %567 = vmatprep.subr.mxu0 %v320
    %568 = vmatpush1.msra.mxu0 %v319
    %569 = vmatprep.subr.mxu0 0.0
    %570 = vmatpush1.msra.mxu0 0.0
    %571 = vmatprep.subr.mxu0 0.0
    %572 = vmatpush1.msra.mxu0 0.0
    %573 = vmatprep.subr.mxu0 0.0
    %574 = vmatpush1.msra.mxu0 0.0
    %575 = vmatprep.subr.mxu0 0.0
    %576 = vmatpush1.msra.mxu0 0.0
    %577 = vmatprep.subr.mxu0 0.0
    %578 = vmatpush1.msra.mxu0 0.0
    %579 = vmatprep.subr.mxu0 0.0
    %580 = vmatpush1.msra.mxu0 0.0
    %581 = vmatprep.subr.mxu0 0.0
    %582 = vmatpush1.msra.mxu0 0.0
    %583 = vmatprep.subr.mxu0 0.0
    %584 = vmatpush1.msra.mxu0 0.0
    %585 = vmatprep.subr.mxu0 0.0
    %586 = vmatpush1.msra.mxu0 0.0
    %587 = vmatprep.subr.mxu0 0.0
    %588 = vmatpush1.msra.mxu0 0.0
    %589 = vmatprep.subr.mxu0 0.0
    %590 = vmatpush1.msra.mxu0 0.0
    %591 = vmatprep.subr.mxu0 0.0
    %592 = vmatpush1.msra.mxu0 0.0
    %593 = vmatprep.subr.mxu0 0.0
    %594 = vmatpush1.msra.mxu0 0.0
    %595 = vmatprep.subr.mxu0 0.0
    %596 = vmatpush1.msra.mxu0 0.0
    %597 = vmatprep.subr.mxu0 0.0
    %598 = vmatpush1.msra.mxu0 0.0
    %599 = vmatprep.subr.mxu0 0.0
    %600 = vmatpush1.msra.mxu0 0.0
    %601 = vmatprep.subr.mxu0 0.0
    %602 = vmatpush1.msra.mxu0 0.0
    %603 = vmatprep.subr.mxu0 0.0
    %604 = vmatpush1.msra.mxu0 0.0
    %605 = vmatprep.subr.mxu0 0.0
    %606 = vmatpush1.msra.mxu0 0.0
    %607 = vmatprep.subr.mxu0 0.0
    %608 = vmatpush1.msra.mxu0 0.0
    %609 = vmatprep.subr.mxu0 0.0
    %610 = vmatpush1.msra.mxu0 0.0
    %611 = vmatprep.subr.mxu0 0.0
    %612 = vmatpush1.msra.mxu0 0.0
    %613 = vmatprep.subr.mxu0 0.0
    %614 = vmatpush1.msra.mxu0 0.0
    %615 = vmatprep.subr.mxu0 0.0
    %616 = vmatpush1.msra.mxu0 0.0
    %617 = vmatprep.mubr.f32.mxu0 0.0
    %618 = vmatmul.mubr.f32.gmra.mrb[0].mxu0 %v551
    %v619 = vpop.f32.mrb[0].mxu0
    %v620 = vadd.f32 %v548, %v619
    %v621 = vpop.f32.mrb[0].mxu0
    %v622 = vadd.f32 %v549, %v621
    %623 = vdwg.mxu0
    %v624 = vxor.u32 %v620, 2147483648
    %v625 = vxor.u32 %v622, 2147483648
    %v626 = vmul.f32 %v624, 1.442695
    %v627 = vpow.pop %v626
    %v628 = vmul.f32 %v625, 1.442695
    %v629 = vpow.pop %v628
    %v630 = vadd.f32 %v627, 1.0
    %v631 = vadd.f32 %v629, 1.0
    %v632 = vrcp.pop %v630
    %v633 = vmul.f32 1.0, %v632
    %v634 = vrcp.pop %v631
    %v635 = vmul.f32 1.0, %v634
    %v636 = vtanh.pop %v622
    %v637 = vmul.f32 %v633, %v541
    %639 = vrot.lane.b32.xlu0 %v636, 64
    %v640 = vpop.permute.xlu0 %639
    %v642 = vmul.f32 %v633, %v640
    %644 = vrot.lane.b32.xlu0 %v642, 64
    %v645 = vpop.permute.xlu0 %644
    %v647 = vadd.f32 %v637, %v645
    %v648 = vtanh.pop %v647
    %650 = vrot.lane.b32.xlu0 %v648, 64
    %v651 = vpop.permute.xlu0 %650
    %v653 = vmul.f32 %v635, %v651
    %v654 = vld [vmem:[#allocation2 + $0x20] sm:$0xf0]
    %v655 = vld [vmem:[#allocation2 + $0x28] sm:$0xf0]
    %v658 = vrot.slane %v654, 4
    %v659 = vrot.slane %v655, 4
    %v663 = vsel %vm331, %v653, 0
    %665 = vmatprep.subr.mxu0 %v306
    %666 = vmatpush1.msra.mxu0 %v305
    %667 = vmatprep.subr.mxu0 %v308
    %668 = vmatpush1.msra.mxu0 %v307
    %669 = vmatprep.subr.mxu0 %v310
    %670 = vmatpush1.msra.mxu0 %v309
    %671 = vmatprep.subr.mxu0 %v312
    %672 = vmatpush1.msra.mxu0 %v311
    %673 = vmatprep.subr.mxu0 %v314
    %674 = vmatpush1.msra.mxu0 %v313
    %675 = vmatprep.subr.mxu0 %v316
    %676 = vmatpush1.msra.mxu0 %v315
    %677 = vmatprep.subr.mxu0 %v318
    %678 = vmatpush1.msra.mxu0 %v317
    %679 = vmatprep.subr.mxu0 %v320
    %680 = vmatpush1.msra.mxu0 %v319
    %681 = vmatprep.subr.mxu0 0.0
    %682 = vmatpush1.msra.mxu0 0.0
    %683 = vmatprep.subr.mxu0 0.0
    %684 = vmatpush1.msra.mxu0 0.0
    %685 = vmatprep.subr.mxu0 0.0
    %686 = vmatpush1.msra.mxu0 0.0
    %687 = vmatprep.subr.mxu0 0.0
    %688 = vmatpush1.msra.mxu0 0.0
    %689 = vmatprep.subr.mxu0 0.0
    %690 = vmatpush1.msra.mxu0 0.0
    %691 = vmatprep.subr.mxu0 0.0
    %692 = vmatpush1.msra.mxu0 0.0
    %693 = vmatprep.subr.mxu0 0.0
    %694 = vmatpush1.msra.mxu0 0.0
    %695 = vmatprep.subr.mxu0 0.0
    %696 = vmatpush1.msra.mxu0 0.0
    %697 = vmatprep.subr.mxu0 0.0
    %698 = vmatpush1.msra.mxu0 0.0
    %699 = vmatprep.subr.mxu0 0.0
    %700 = vmatpush1.msra.mxu0 0.0
    %701 = vmatprep.subr.mxu0 0.0
    %702 = vmatpush1.msra.mxu0 0.0
    %703 = vmatprep.subr.mxu0 0.0
    %704 = vmatpush1.msra.mxu0 0.0
    %705 = vmatprep.subr.mxu0 0.0
    %706 = vmatpush1.msra.mxu0 0.0
    %707 = vmatprep.subr.mxu0 0.0
    %708 = vmatpush1.msra.mxu0 0.0
    %709 = vmatprep.subr.mxu0 0.0
    %710 = vmatpush1.msra.mxu0 0.0
    %711 = vmatprep.subr.mxu0 0.0
    %712 = vmatpush1.msra.mxu0 0.0
    %713 = vmatprep.subr.mxu0 0.0
    %714 = vmatpush1.msra.mxu0 0.0
    %715 = vmatprep.subr.mxu0 0.0
    %716 = vmatpush1.msra.mxu0 0.0
    %717 = vmatprep.subr.mxu0 0.0
    %718 = vmatpush1.msra.mxu0 0.0
    %719 = vmatprep.subr.mxu0 0.0
    %720 = vmatpush1.msra.mxu0 0.0
    %721 = vmatprep.subr.mxu0 0.0
    %722 = vmatpush1.msra.mxu0 0.0
    %723 = vmatprep.subr.mxu0 0.0
    %724 = vmatpush1.msra.mxu0 0.0
    %725 = vmatprep.subr.mxu0 0.0
    %726 = vmatpush1.msra.mxu0 0.0
    %727 = vmatprep.subr.mxu0 0.0
    %728 = vmatpush1.msra.mxu0 0.0
    %729 = vmatprep.mubr.f32.mxu0 0.0
    %730 = vmatmul.mubr.f32.gmra.mrb[0].mxu0 %v663
    %v731 = vpop.f32.mrb[0].mxu0
    %v732 = vadd.f32 %v658, %v731
    %v733 = vpop.f32.mrb[0].mxu0
    %v734 = vadd.f32 %v659, %v733
    %735 = vdwg.mxu0
    %v736 = vxor.u32 %v732, 2147483648
    %v737 = vxor.u32 %v734, 2147483648
    %v738 = vmul.f32 %v736, 1.442695
    %v739 = vpow.pop %v738
    %v740 = vmul.f32 %v737, 1.442695
    %v741 = vpow.pop %v740
    %v742 = vadd.f32 %v739, 1.0
    %v743 = vadd.f32 %v741, 1.0
    %v744 = vrcp.pop %v742
    %v745 = vmul.f32 1.0, %v744
    %v746 = vrcp.pop %v743
    %v747 = vmul.f32 1.0, %v746
    %v748 = vtanh.pop %v734
    %v749 = vmul.f32 %v745, %v647
    %751 = vrot.lane.b32.xlu0 %v748, 64
    %v752 = vpop.permute.xlu0 %751
    %v754 = vmul.f32 %v745, %v752
    %756 = vrot.lane.b32.xlu0 %v754, 64
    %v757 = vpop.permute.xlu0 %756
    %v759 = vadd.f32 %v749, %v757
    %v760 = vtanh.pop %v759
    %762 = vrot.lane.b32.xlu0 %v760, 64
    %v763 = vpop.permute.xlu0 %762
    %v765 = vmul.f32 %v747, %v763
    %v766 = vld [vmem:[#allocation2 + $0x40] sm:$0xf]
    %v767 = vld [vmem:[#allocation2 + $0x48] sm:$0xf]
    %v769 = vsel %vm331, %v765, 0
    %771 = vmatprep.subr.mxu0 %v306
    %772 = vmatpush1.msra.mxu0 %v305
    %773 = vmatprep.subr.mxu0 %v308
    %774 = vmatpush1.msra.mxu0 %v307
    %775 = vmatprep.subr.mxu0 %v310
    %776 = vmatpush1.msra.mxu0 %v309
    %777 = vmatprep.subr.mxu0 %v312
    %778 = vmatpush1.msra.mxu0 %v311
    %779 = vmatprep.subr.mxu0 %v314
    %780 = vmatpush1.msra.mxu0 %v313
    %781 = vmatprep.subr.mxu0 %v316
    %782 = vmatpush1.msra.mxu0 %v315
    %783 = vmatprep.subr.mxu0 %v318
    %784 = vmatpush1.msra.mxu0 %v317
    %785 = vmatprep.subr.mxu0 %v320
    %786 = vmatpush1.msra.mxu0 %v319
    %787 = vmatprep.subr.mxu0 0.0
    %788 = vmatpush1.msra.mxu0 0.0
    %789 = vmatprep.subr.mxu0 0.0
    %790 = vmatpush1.msra.mxu0 0.0
    %791 = vmatprep.subr.mxu0 0.0
    %792 = vmatpush1.msra.mxu0 0.0
    %793 = vmatprep.subr.mxu0 0.0
    %794 = vmatpush1.msra.mxu0 0.0
    %795 = vmatprep.subr.mxu0 0.0
    %796 = vmatpush1.msra.mxu0 0.0
    %797 = vmatprep.subr.mxu0 0.0
    %798 = vmatpush1.msra.mxu0 0.0
    %799 = vmatprep.subr.mxu0 0.0
    %800 = vmatpush1.msra.mxu0 0.0
    %801 = vmatprep.subr.mxu0 0.0
    %802 = vmatpush1.msra.mxu0 0.0
    %803 = vmatprep.subr.mxu0 0.0
    %804 = vmatpush1.msra.mxu0 0.0
    %805 = vmatprep.subr.mxu0 0.0
    %806 = vmatpush1.msra.mxu0 0.0
    %807 = vmatprep.subr.mxu0 0.0
    %808 = vmatpush1.msra.mxu0 0.0
    %809 = vmatprep.subr.mxu0 0.0
    %810 = vmatpush1.msra.mxu0 0.0
    %811 = vmatprep.subr.mxu0 0.0
    %812 = vmatpush1.msra.mxu0 0.0
    %813 = vmatprep.subr.mxu0 0.0
    %814 = vmatpush1.msra.mxu0 0.0
    %815 = vmatprep.subr.mxu0 0.0
    %816 = vmatpush1.msra.mxu0 0.0
    %817 = vmatprep.subr.mxu0 0.0
    %818 = vmatpush1.msra.mxu0 0.0
    %819 = vmatprep.subr.mxu0 0.0
    %820 = vmatpush1.msra.mxu0 0.0
    %821 = vmatprep.subr.mxu0 0.0
    %822 = vmatpush1.msra.mxu0 0.0
    %823 = vmatprep.subr.mxu0 0.0
    %824 = vmatpush1.msra.mxu0 0.0
    %825 = vmatprep.subr.mxu0 0.0
    %826 = vmatpush1.msra.mxu0 0.0
    %827 = vmatprep.subr.mxu0 0.0
    %828 = vmatpush1.msra.mxu0 0.0
    %829 = vmatprep.subr.mxu0 0.0
    %830 = vmatpush1.msra.mxu0 0.0
    %831 = vmatprep.subr.mxu0 0.0
    %832 = vmatpush1.msra.mxu0 0.0
    %833 = vmatprep.subr.mxu0 0.0
    %834 = vmatpush1.msra.mxu0 0.0
    %835 = vmatprep.mubr.f32.mxu0 0.0
    %836 = vmatmul.mubr.f32.gmra.mrb[0].mxu0 %v769
    %v837 = vpop.f32.mrb[0].mxu0
    %v838 = vadd.f32 %v766, %v837
    %v839 = vpop.f32.mrb[0].mxu0
    %v840 = vadd.f32 %v767, %v839
    %841 = vdwg.mxu0
    %v842 = vxor.u32 %v838, 2147483648
    %v843 = vxor.u32 %v840, 2147483648
    %v844 = vmul.f32 %v842, 1.442695
    %v845 = vpow.pop %v844
    %v846 = vmul.f32 %v843, 1.442695
    %v847 = vpow.pop %v846
    %v848 = vadd.f32 %v845, 1.0
    %v849 = vadd.f32 %v847, 1.0
    %v850 = vrcp.pop %v848
    %v851 = vmul.f32 1.0, %v850
    %v852 = vrcp.pop %v849
    %v853 = vmul.f32 1.0, %v852
    %v854 = vtanh.pop %v840
    %v855 = vmul.f32 %v851, %v759
    %857 = vrot.lane.b32.xlu0 %v854, 64
    %v858 = vpop.permute.xlu0 %857
    %v860 = vmul.f32 %v851, %v858
    %862 = vrot.lane.b32.xlu0 %v860, 64
    %v863 = vpop.permute.xlu0 %862
    %v865 = vadd.f32 %v855, %v863
    %v866 = vtanh.pop %v865
    %868 = vrot.lane.b32.xlu0 %v866, 64
    %v869 = vpop.permute.xlu0 %868
    %v871 = vmul.f32 %v853, %v869
    %v872 = vld [vmem:[#allocation2 + $0x40] sm:$0xf0]
    %v873 = vld [vmem:[#allocation2 + $0x48] sm:$0xf0]
    %v876 = vrot.slane %v872, 4
    %v877 = vrot.slane %v873, 4
    %v881 = vsel %vm331, %v871, 0
    %883 = vmatprep.subr.mxu0 %v306
    %884 = vmatpush1.msra.mxu0 %v305
    %885 = vmatprep.subr.mxu0 %v308
    %886 = vmatpush1.msra.mxu0 %v307
    %887 = vmatprep.subr.mxu0 %v310
    %888 = vmatpush1.msra.mxu0 %v309
    %889 = vmatprep.subr.mxu0 %v312
    %890 = vmatpush1.msra.mxu0 %v311
    %891 = vmatprep.subr.mxu0 %v314
    %892 = vmatpush1.msra.mxu0 %v313
    %893 = vmatprep.subr.mxu0 %v316
    %894 = vmatpush1.msra.mxu0 %v315
    %895 = vmatprep.subr.mxu0 %v318
    %896 = vmatpush1.msra.mxu0 %v317
    %897 = vmatprep.subr.mxu0 %v320
    %898 = vmatpush1.msra.mxu0 %v319
    %899 = vmatprep.subr.mxu0 0.0
    %900 = vmatpush1.msra.mxu0 0.0
    %901 = vmatprep.subr.mxu0 0.0
    %902 = vmatpush1.msra.mxu0 0.0
    %903 = vmatprep.subr.mxu0 0.0
    %904 = vmatpush1.msra.mxu0 0.0
    %905 = vmatprep.subr.mxu0 0.0
    %906 = vmatpush1.msra.mxu0 0.0
    %907 = vmatprep.subr.mxu0 0.0
    %908 = vmatpush1.msra.mxu0 0.0
    %909 = vmatprep.subr.mxu0 0.0
    %910 = vmatpush1.msra.mxu0 0.0
    %911 = vmatprep.subr.mxu0 0.0
    %912 = vmatpush1.msra.mxu0 0.0
    %913 = vmatprep.subr.mxu0 0.0
    %914 = vmatpush1.msra.mxu0 0.0
    %915 = vmatprep.subr.mxu0 0.0
    %916 = vmatpush1.msra.mxu0 0.0
    %917 = vmatprep.subr.mxu0 0.0
    %918 = vmatpush1.msra.mxu0 0.0
    %919 = vmatprep.subr.mxu0 0.0
    %920 = vmatpush1.msra.mxu0 0.0
    %921 = vmatprep.subr.mxu0 0.0
    %922 = vmatpush1.msra.mxu0 0.0
    %923 = vmatprep.subr.mxu0 0.0
    %924 = vmatpush1.msra.mxu0 0.0
    %925 = vmatprep.subr.mxu0 0.0
    %926 = vmatpush1.msra.mxu0 0.0
    %927 = vmatprep.subr.mxu0 0.0
    %928 = vmatpush1.msra.mxu0 0.0
    %929 = vmatprep.subr.mxu0 0.0
    %930 = vmatpush1.msra.mxu0 0.0
    %931 = vmatprep.subr.mxu0 0.0
    %932 = vmatpush1.msra.mxu0 0.0
    %933 = vmatprep.subr.mxu0 0.0
    %934 = vmatpush1.msra.mxu0 0.0
    %935 = vmatprep.subr.mxu0 0.0
    %936 = vmatpush1.msra.mxu0 0.0
    %937 = vmatprep.subr.mxu0 0.0
    %938 = vmatpush1.msra.mxu0 0.0
    %939 = vmatprep.subr.mxu0 0.0
    %940 = vmatpush1.msra.mxu0 0.0
    %941 = vmatprep.subr.mxu0 0.0
    %942 = vmatpush1.msra.mxu0 0.0
    %943 = vmatprep.subr.mxu0 0.0
    %944 = vmatpush1.msra.mxu0 0.0
    %945 = vmatprep.subr.mxu0 0.0
    %946 = vmatpush1.msra.mxu0 0.0
    %947 = vmatprep.mubr.f32.mxu0 0.0
    %948 = vmatmul.mubr.f32.gmra.mrb[0].mxu0 %v881
    %v949 = vpop.f32.mrb[0].mxu0
    %v950 = vadd.f32 %v876, %v949
    %v951 = vpop.f32.mrb[0].mxu0
    %v952 = vadd.f32 %v877, %v951
    %953 = vdwg.mxu0
    %v954 = vxor.u32 %v950, 2147483648
    %v955 = vxor.u32 %v952, 2147483648
    %v956 = vmul.f32 %v954, 1.442695
    %v957 = vpow.pop %v956
    %v958 = vmul.f32 %v955, 1.442695
    %v959 = vpow.pop %v958
    %v960 = vadd.f32 %v957, 1.0
    %v961 = vadd.f32 %v959, 1.0
    %v962 = vrcp.pop %v960
    %v963 = vmul.f32 1.0, %v962
    %v964 = vrcp.pop %v961
    %v965 = vmul.f32 1.0, %v964
    %v966 = vtanh.pop %v952
    %v967 = vmul.f32 %v963, %v865
    %969 = vrot.lane.b32.xlu0 %v966, 64
    %v970 = vpop.permute.xlu0 %969
    %v972 = vmul.f32 %v963, %v970
    %974 = vrot.lane.b32.xlu0 %v972, 64
    %v975 = vpop.permute.xlu0 %974
    %v977 = vadd.f32 %v967, %v975
    %v978 = vtanh.pop %v977
    %980 = vrot.lane.b32.xlu0 %v978, 64
    %v981 = vpop.permute.xlu0 %980
    %v983 = vmul.f32 %v965, %v981
    %v984 = vld [vmem:[#allocation2 + $0x60] sm:$0xf]
    %v985 = vld [vmem:[#allocation2 + $0x68] sm:$0xf]
    %v987 = vsel %vm331, %v983, 0
    %989 = vmatprep.subr.mxu0 %v306
    %990 = vmatpush1.msra.mxu0 %v305
    %991 = vmatprep.subr.mxu0 %v308
    %992 = vmatpush1.msra.mxu0 %v307
    %993 = vmatprep.subr.mxu0 %v310
    %994 = vmatpush1.msra.mxu0 %v309
    %995 = vmatprep.subr.mxu0 %v312
    %996 = vmatpush1.msra.mxu0 %v311
    %997 = vmatprep.subr.mxu0 %v314
    %998 = vmatpush1.msra.mxu0 %v313
    %999 = vmatprep.subr.mxu0 %v316
    %1000 = vmatpush1.msra.mxu0 %v315
    %1001 = vmatprep.subr.mxu0 %v318
    %1002 = vmatpush1.msra.mxu0 %v317
    %1003 = vmatprep.subr.mxu0 %v320
    %1004 = vmatpush1.msra.mxu0 %v319
    %1005 = vmatprep.subr.mxu0 0.0
    %1006 = vmatpush1.msra.mxu0 0.0
    %1007 = vmatprep.subr.mxu0 0.0
    %1008 = vmatpush1.msra.mxu0 0.0
    %1009 = vmatprep.subr.mxu0 0.0
    %1010 = vmatpush1.msra.mxu0 0.0
    %1011 = vmatprep.subr.mxu0 0.0
    %1012 = vmatpush1.msra.mxu0 0.0
    %1013 = vmatprep.subr.mxu0 0.0
    %1014 = vmatpush1.msra.mxu0 0.0
    %1015 = vmatprep.subr.mxu0 0.0
    %1016 = vmatpush1.msra.mxu0 0.0
    %1017 = vmatprep.subr.mxu0 0.0
    %1018 = vmatpush1.msra.mxu0 0.0
    %1019 = vmatprep.subr.mxu0 0.0
    %1020 = vmatpush1.msra.mxu0 0.0
    %1021 = vmatprep.subr.mxu0 0.0
    %1022 = vmatpush1.msra.mxu0 0.0
    %1023 = vmatprep.subr.mxu0 0.0
    %1024 = vmatpush1.msra.mxu0 0.0
    %1025 = vmatprep.subr.mxu0 0.0
    %1026 = vmatpush1.msra.mxu0 0.0
    %1027 = vmatprep.subr.mxu0 0.0
    %1028 = vmatpush1.msra.mxu0 0.0
    %1029 = vmatprep.subr.mxu0 0.0
    %1030 = vmatpush1.msra.mxu0 0.0
    %1031 = vmatprep.subr.mxu0 0.0
    %1032 = vmatpush1.msra.mxu0 0.0
    %1033 = vmatprep.subr.mxu0 0.0
    %1034 = vmatpush1.msra.mxu0 0.0
    %1035 = vmatprep.subr.mxu0 0.0
    %1036 = vmatpush1.msra.mxu0 0.0
    %1037 = vmatprep.subr.mxu0 0.0
    %1038 = vmatpush1.msra.mxu0 0.0
    %1039 = vmatprep.subr.mxu0 0.0
    %1040 = vmatpush1.msra.mxu0 0.0
    %1041 = vmatprep.subr.mxu0 0.0
    %1042 = vmatpush1.msra.mxu0 0.0
    %1043 = vmatprep.subr.mxu0 0.0
    %1044 = vmatpush1.msra.mxu0 0.0
    %1045 = vmatprep.subr.mxu0 0.0
    %1046 = vmatpush1.msra.mxu0 0.0
    %1047 = vmatprep.subr.mxu0 0.0
    %1048 = vmatpush1.msra.mxu0 0.0
    %1049 = vmatprep.subr.mxu0 0.0
    %1050 = vmatpush1.msra.mxu0 0.0
    %1051 = vmatprep.subr.mxu0 0.0
    %1052 = vmatpush1.msra.mxu0 0.0
    %1053 = vmatprep.mubr.f32.mxu0 0.0
    %1054 = vmatmul.mubr.f32.gmra.mrb[0].mxu0 %v987
    %v1055 = vpop.f32.mrb[0].mxu0
    %v1056 = vadd.f32 %v984, %v1055
    %v1057 = vpop.f32.mrb[0].mxu0
    %v1058 = vadd.f32 %v985, %v1057
    %1059 = vdwg.mxu0
    %v1060 = vxor.u32 %v1056, 2147483648
    %v1061 = vxor.u32 %v1058, 2147483648
    %v1062 = vmul.f32 %v1060, 1.442695
    %v1063 = vpow.pop %v1062
    %v1064 = vmul.f32 %v1061, 1.442695
    %v1065 = vpow.pop %v1064
    %v1066 = vadd.f32 %v1063, 1.0
    %v1067 = vadd.f32 %v1065, 1.0
    %v1068 = vrcp.pop %v1066
    %v1069 = vmul.f32 1.0, %v1068
    %v1070 = vrcp.pop %v1067
    %v1071 = vmul.f32 1.0, %v1070
    %v1072 = vtanh.pop %v1058
    %v1073 = vmul.f32 %v1069, %v977
    %1075 = vrot.lane.b32.xlu0 %v1072, 64
    %v1076 = vpop.permute.xlu0 %1075
    %v1078 = vmul.f32 %v1069, %v1076
    %1080 = vrot.lane.b32.xlu0 %v1078, 64
    %v1081 = vpop.permute.xlu0 %1080
    %v1083 = vadd.f32 %v1073, %v1081
    %v1084 = vtanh.pop %v1083
    %1086 = vrot.lane.b32.xlu0 %v1084, 64
    %v1087 = vpop.permute.xlu0 %1086
    %v1089 = vmul.f32 %v1071, %v1087
    %v1090 = vld [vmem:[#allocation2 + $0x60] sm:$0xf0]
    %v1091 = vld [vmem:[#allocation2 + $0x68] sm:$0xf0]
    %v1094 = vrot.slane %v1090, 4
    %v1095 = vrot.slane %v1091, 4
    %v1099 = vsel %vm331, %v1089, 0
    %1101 = vmatprep.subr.mxu0 %v306
    %1102 = vmatpush1.msra.mxu0 %v305
    %1103 = vmatprep.subr.mxu0 %v308
    %1104 = vmatpush1.msra.mxu0 %v307
    %1105 = vmatprep.subr.mxu0 %v310
    %1106 = vmatpush1.msra.mxu0 %v309
    %1107 = vmatprep.subr.mxu0 %v312
    %1108 = vmatpush1.msra.mxu0 %v311
    %1109 = vmatprep.subr.mxu0 %v314
    %1110 = vmatpush1.msra.mxu0 %v313
    %1111 = vmatprep.subr.mxu0 %v316
    %1112 = vmatpush1.msra.mxu0 %v315
    %1113 = vmatprep.subr.mxu0 %v318
    %1114 = vmatpush1.msra.mxu0 %v317
    %1115 = vmatprep.subr.mxu0 %v320
    %1116 = vmatpush1.msra.mxu0 %v319
    %1117 = vmatprep.subr.mxu0 0.0
    %1118 = vmatpush1.msra.mxu0 0.0
    %1119 = vmatprep.subr.mxu0 0.0
    %1120 = vmatpush1.msra.mxu0 0.0
    %1121 = vmatprep.subr.mxu0 0.0
    %1122 = vmatpush1.msra.mxu0 0.0
    %1123 = vmatprep.subr.mxu0 0.0
    %1124 = vmatpush1.msra.mxu0 0.0
    %1125 = vmatprep.subr.mxu0 0.0
    %1126 = vmatpush1.msra.mxu0 0.0
    %1127 = vmatprep.subr.mxu0 0.0
    %1128 = vmatpush1.msra.mxu0 0.0
    %1129 = vmatprep.subr.mxu0 0.0
    %1130 = vmatpush1.msra.mxu0 0.0
    %1131 = vmatprep.subr.mxu0 0.0
    %1132 = vmatpush1.msra.mxu0 0.0
    %1133 = vmatprep.subr.mxu0 0.0
    %1134 = vmatpush1.msra.mxu0 0.0
    %1135 = vmatprep.subr.mxu0 0.0
    %1136 = vmatpush1.msra.mxu0 0.0
    %1137 = vmatprep.subr.mxu0 0.0
    %1138 = vmatpush1.msra.mxu0 0.0
    %1139 = vmatprep.subr.mxu0 0.0
    %1140 = vmatpush1.msra.mxu0 0.0
    %1141 = vmatprep.subr.mxu0 0.0
    %1142 = vmatpush1.msra.mxu0 0.0
    %1143 = vmatprep.subr.mxu0 0.0
    %1144 = vmatpush1.msra.mxu0 0.0
    %1145 = vmatprep.subr.mxu0 0.0
    %1146 = vmatpush1.msra.mxu0 0.0
    %1147 = vmatprep.subr.mxu0 0.0
    %1148 = vmatpush1.msra.mxu0 0.0
    %1149 = vmatprep.subr.mxu0 0.0
    %1150 = vmatpush1.msra.mxu0 0.0
    %1151 = vmatprep.subr.mxu0 0.0
    %1152 = vmatpush1.msra.mxu0 0.0
    %1153 = vmatprep.subr.mxu0 0.0
    %1154 = vmatpush1.msra.mxu0 0.0
    %1155 = vmatprep.subr.mxu0 0.0
    %1156 = vmatpush1.msra.mxu0 0.0
    %1157 = vmatprep.subr.mxu0 0.0
    %1158 = vmatpush1.msra.mxu0 0.0
    %1159 = vmatprep.subr.mxu0 0.0
    %1160 = vmatpush1.msra.mxu0 0.0
    %1161 = vmatprep.subr.mxu0 0.0
    %1162 = vmatpush1.msra.mxu0 0.0
    %1163 = vmatprep.subr.mxu0 0.0
    %1164 = vmatpush1.msra.mxu0 0.0
    %1165 = vmatprep.mubr.f32.mxu0 0.0
    %1166 = vmatmul.mubr.f32.gmra.mrb[0].mxu0 %v1099
    %v1167 = vpop.f32.mrb[0].mxu0
    %v1168 = vadd.f32 %v1094, %v1167
    %v1169 = vpop.f32.mrb[0].mxu0
    %v1170 = vadd.f32 %v1095, %v1169
    %1171 = vdwg.mxu0
    %v1172 = vxor.u32 %v1168, 2147483648
    %v1173 = vxor.u32 %v1170, 2147483648
    %v1174 = vmul.f32 %v1172, 1.442695
    %v1175 = vpow.pop %v1174
    %v1176 = vmul.f32 %v1173, 1.442695
    %v1177 = vpow.pop %v1176
    %v1178 = vadd.f32 %v1175, 1.0
    %v1179 = vadd.f32 %v1177, 1.0
    %v1180 = vrcp.pop %v1178
    %v1181 = vmul.f32 1.0, %v1180
    %v1182 = vrcp.pop %v1179
    %v1183 = vmul.f32 1.0, %v1182
    %v1184 = vtanh.pop %v1170
    %v1185 = vmul.f32 %v1181, %v1083
    %1187 = vrot.lane.b32.xlu0 %v1184, 64
    %v1188 = vpop.permute.xlu0 %1187
    %v1190 = vmul.f32 %v1181, %v1188
    %1192 = vrot.lane.b32.xlu0 %v1190, 64
    %v1193 = vpop.permute.xlu0 %1192
    %v1195 = vadd.f32 %v1185, %v1193
    %v1196 = vtanh.pop %v1195
    %1198 = vrot.lane.b32.xlu0 %v1196, 64
    %v1199 = vpop.permute.xlu0 %1198
    %v1201 = vmul.f32 %v1183, %v1199
    %v1202 = vld [vmem:[#allocation2 + $0x10] sm:$0xf]
    %1204 = vrot.lane.b32.xlu0 %v1201, 96
    %v1205 = vpop.permute.xlu0 %1204
    %vm1206 = vcmask 261120
    %v1207 = vsel %vm1206, %v1205, 0
    %1209 = vmatprep.subr.mxu0 0.0
    %1210 = vmatpush1.msra.mxu0 %v321
    %1211 = vmatprep.subr.mxu0 0.0
    %1212 = vmatpush1.msra.mxu0 %v322
    %1213 = vmatprep.subr.mxu0 0.0
    %1214 = vmatpush1.msra.mxu0 %v323
    %1215 = vmatprep.subr.mxu0 0.0
    %1216 = vmatpush1.msra.mxu0 %v324
    %1217 = vmatprep.subr.mxu0 0.0
    %1218 = vmatpush1.msra.mxu0 0.0
    %1219 = vmatprep.subr.mxu0 0.0
    %1220 = vmatpush1.msra.mxu0 0.0
    %1221 = vmatprep.subr.mxu0 0.0
    %1222 = vmatpush1.msra.mxu0 0.0
    %1223 = vmatprep.subr.mxu0 0.0
    %1224 = vmatpush1.msra.mxu0 0.0
    %1225 = vmatprep.subr.mxu0 0.0
    %1226 = vmatpush1.msra.mxu0 0.0
    %1227 = vmatprep.subr.mxu0 0.0
    %1228 = vmatpush1.msra.mxu0 0.0
    %1229 = vmatprep.subr.mxu0 0.0
    %1230 = vmatpush1.msra.mxu0 0.0
    %1231 = vmatprep.subr.mxu0 0.0
    %1232 = vmatpush1.msra.mxu0 0.0
    %1233 = vmatprep.subr.mxu0 0.0
    %1234 = vmatpush1.msra.mxu0 0.0
    %1235 = vmatprep.subr.mxu0 0.0
    %1236 = vmatpush1.msra.mxu0 0.0
    %1237 = vmatprep.subr.mxu0 0.0
    %1238 = vmatpush1.msra.mxu0 0.0
    %1239 = vmatprep.subr.mxu0 0.0
    %1240 = vmatpush1.msra.mxu0 0.0
    %1241 = vmatprep.subr.mxu0 0.0
    %1242 = vmatpush1.msra.mxu0 0.0
    %1243 = vmatprep.subr.mxu0 0.0
    %1244 = vmatpush1.msra.mxu0 0.0
    %1245 = vmatprep.subr.mxu0 0.0
    %1246 = vmatpush1.msra.mxu0 0.0
    %1247 = vmatprep.subr.mxu0 0.0
    %1248 = vmatpush1.msra.mxu0 0.0
    %1249 = vmatprep.subr.mxu0 0.0
    %1250 = vmatpush1.msra.mxu0 0.0
    %1251 = vmatprep.subr.mxu0 0.0
    %1252 = vmatpush1.msra.mxu0 0.0
    %1253 = vmatprep.subr.mxu0 0.0
    %1254 = vmatpush1.msra.mxu0 0.0
    %1255 = vmatprep.subr.mxu0 0.0
    %1256 = vmatpush1.msra.mxu0 0.0
    %1257 = vmatprep.subr.mxu0 0.0
    %1258 = vmatpush1.msra.mxu0 0.0
    %1259 = vmatprep.subr.mxu0 0.0
    %1260 = vmatpush1.msra.mxu0 0.0
    %1261 = vmatprep.subr.mxu0 0.0
    %1262 = vmatpush1.msra.mxu0 0.0
    %1263 = vmatprep.subr.mxu0 0.0
    %1264 = vmatpush1.msra.mxu0 0.0
    %1265 = vmatprep.subr.mxu0 0.0
    %1266 = vmatpush1.msra.mxu0 0.0
    %1267 = vmatprep.subr.mxu0 0.0
    %1268 = vmatpush1.msra.mxu0 0.0
    %1269 = vmatprep.subr.mxu0 0.0
    %1270 = vmatpush1.msra.mxu0 0.0
    %1271 = vmatprep.subr.mxu0 0.0
    %1272 = vmatpush1.msra.mxu0 0.0
    %1273 = vmatprep.mubr.f32.mxu0 0.0
    %1274 = vmatmul.mubr.f32.gmra.mrb[0].mxu0 %v1207
    %v1275 = vpop.f32.mrb[0].mxu0
    %v1276 = vadd.f32 %v1202, %v1275
    %v1277 = vpop.f32.mrb[0].mxu0
    %1278 = vdwg.mxu0
    %v1279 = vxor.u32 %v1276, 2147483648
    %v1280 = vmul.f32 %v1279, 1.442695
    %v1281 = vpow.pop %v1280
    %v1282 = vadd.f32 %v1281, 1.0
    %v1283 = vrcp.pop %v1282
    %v1284 = vmul.f32 1.0, %v1283
    %v1285 = vtanh.pop %v1276
    %1287 = vrot.lane.b32.xlu0 %v1195, 64
    %v1288 = vpop.permute.xlu0 %1287
    %v1290 = vmul.f32 %v1284, %v1288
    %1292 = vrot.lane.b32.xlu0 %v1285, 32
    %v1293 = vpop.permute.xlu0 %1292
    %v1295 = vmul.f32 %v1284, %v1293
    %1297 = vrot.lane.b32.xlu0 %v1295, 32
    %v1298 = vpop.permute.xlu0 %1297
    %v1300 = vadd.f32 %v1290, %v1298
    %v1301 = vtanh.pop %v1300
    %1303 = vrot.lane.b32.xlu0 %v1301, 32
    %v1304 = vpop.permute.xlu0 %1303
    %v1306 = vmul.f32 %v1284, %v1304
    %v1307 = vld [vmem:[#allocation2 + $0x10] sm:$0xf0]
    %1309 = vrot.lane.b32.xlu0 %v1306, 64
    %v1310 = vpop.permute.xlu0 %1309
    %v1312 = vrot.slane %v1307, 4
    %v1314 = vsel %vm1206, %v1310, 0
    %1316 = vmatprep.subr.mxu0 0.0
    %1317 = vmatpush1.msra.mxu0 %v321
    %1318 = vmatprep.subr.mxu0 0.0
    %1319 = vmatpush1.msra.mxu0 %v322
    %1320 = vmatprep.subr.mxu0 0.0
    %1321 = vmatpush1.msra.mxu0 %v323
    %1322 = vmatprep.subr.mxu0 0.0
    %1323 = vmatpush1.msra.mxu0 %v324
    %1324 = vmatprep.subr.mxu0 0.0
    %1325 = vmatpush1.msra.mxu0 0.0
    %1326 = vmatprep.subr.mxu0 0.0
    %1327 = vmatpush1.msra.mxu0 0.0
    %1328 = vmatprep.subr.mxu0 0.0
    %1329 = vmatpush1.msra.mxu0 0.0
    %1330 = vmatprep.subr.mxu0 0.0
    %1331 = vmatpush1.msra.mxu0 0.0
    %1332 = vmatprep.subr.mxu0 0.0
    %1333 = vmatpush1.msra.mxu0 0.0
    %1334 = vmatprep.subr.mxu0 0.0
    %1335 = vmatpush1.msra.mxu0 0.0
    %1336 = vmatprep.subr.mxu0 0.0
    %1337 = vmatpush1.msra.mxu0 0.0
    %1338 = vmatprep.subr.mxu0 0.0
    %1339 = vmatpush1.msra.mxu0 0.0
    %1340 = vmatprep.subr.mxu0 0.0
    %1341 = vmatpush1.msra.mxu0 0.0
    %1342 = vmatprep.subr.mxu0 0.0
    %1343 = vmatpush1.msra.mxu0 0.0
    %1344 = vmatprep.subr.mxu0 0.0
    %1345 = vmatpush1.msra.mxu0 0.0
    %1346 = vmatprep.subr.mxu0 0.0
    %1347 = vmatpush1.msra.mxu0 0.0
    %1348 = vmatprep.subr.mxu0 0.0
    %1349 = vmatpush1.msra.mxu0 0.0
    %1350 = vmatprep.subr.mxu0 0.0
    %1351 = vmatpush1.msra.mxu0 0.0
    %1352 = vmatprep.subr.mxu0 0.0
    %1353 = vmatpush1.msra.mxu0 0.0
    %1354 = vmatprep.subr.mxu0 0.0
    %1355 = vmatpush1.msra.mxu0 0.0
    %1356 = vmatprep.subr.mxu0 0.0
    %1357 = vmatpush1.msra.mxu0 0.0
    %1358 = vmatprep.subr.mxu0 0.0
    %1359 = vmatpush1.msra.mxu0 0.0
    %1360 = vmatprep.subr.mxu0 0.0
    %1361 = vmatpush1.msra.mxu0 0.0
    %1362 = vmatprep.subr.mxu0 0.0
    %1363 = vmatpush1.msra.mxu0 0.0
    %1364 = vmatprep.subr.mxu0 0.0
    %1365 = vmatpush1.msra.mxu0 0.0
    %1366 = vmatprep.subr.mxu0 0.0
    %1367 = vmatpush1.msra.mxu0 0.0
    %1368 = vmatprep.subr.mxu0 0.0
    %1369 = vmatpush1.msra.mxu0 0.0
    %1370 = vmatprep.subr.mxu0 0.0
    %1371 = vmatpush1.msra.mxu0 0.0
    %1372 = vmatprep.subr.mxu0 0.0
    %1373 = vmatpush1.msra.mxu0 0.0
    %1374 = vmatprep.subr.mxu0 0.0
    %1375 = vmatpush1.msra.mxu0 0.0
    %1376 = vmatprep.subr.mxu0 0.0
    %1377 = vmatpush1.msra.mxu0 0.0
    %1378 = vmatprep.subr.mxu0 0.0
    %1379 = vmatpush1.msra.mxu0 0.0
    %1380 = vmatprep.mubr.f32.mxu0 0.0
    %1381 = vmatmul.mubr.f32.gmra.mrb[0].mxu0 %v1314
    %v1382 = vpop.f32.mrb[0].mxu0
    %v1383 = vadd.f32 %v1312, %v1382
    %v1384 = vpop.f32.mrb[0].mxu0
    %1385 = vdwg.mxu0
    %v1386 = vxor.u32 %v1383, 2147483648
    %v1387 = vmul.f32 %v1386, 1.442695
    %v1388 = vpow.pop %v1387
    %v1389 = vadd.f32 %v1388, 1.0
    %v1390 = vrcp.pop %v1389
    %v1391 = vmul.f32 1.0, %v1390
    %v1392 = vtanh.pop %v1383
    %v1393 = vmul.f32 %v1391, %v1300
    %1395 = vrot.lane.b32.xlu0 %v1392, 32
    %v1396 = vpop.permute.xlu0 %1395
    %v1398 = vmul.f32 %v1391, %v1396
    %1400 = vrot.lane.b32.xlu0 %v1398, 32
    %v1401 = vpop.permute.xlu0 %1400
    %v1403 = vadd.f32 %v1393, %v1401
    %v1404 = vtanh.pop %v1403
    %1406 = vrot.lane.b32.xlu0 %v1404, 32
    %v1407 = vpop.permute.xlu0 %1406
    %v1409 = vmul.f32 %v1391, %v1407
    %v1410 = vld [vmem:[#allocation2 + $0x30] sm:$0xf]
    %1412 = vrot.lane.b32.xlu0 %v1409, 64
    %v1413 = vpop.permute.xlu0 %1412
    %v1414 = vsel %vm1206, %v1413, 0
    %1416 = vmatprep.subr.mxu0 0.0
    %1417 = vmatpush1.msra.mxu0 %v321
    %1418 = vmatprep.subr.mxu0 0.0
    %1419 = vmatpush1.msra.mxu0 %v322
    %1420 = vmatprep.subr.mxu0 0.0
    %1421 = vmatpush1.msra.mxu0 %v323
    %1422 = vmatprep.subr.mxu0 0.0
    %1423 = vmatpush1.msra.mxu0 %v324
    %1424 = vmatprep.subr.mxu0 0.0
    %1425 = vmatpush1.msra.mxu0 0.0
    %1426 = vmatprep.subr.mxu0 0.0
    %1427 = vmatpush1.msra.mxu0 0.0
    %1428 = vmatprep.subr.mxu0 0.0
    %1429 = vmatpush1.msra.mxu0 0.0
    %1430 = vmatprep.subr.mxu0 0.0
    %1431 = vmatpush1.msra.mxu0 0.0
    %1432 = vmatprep.subr.mxu0 0.0
    %1433 = vmatpush1.msra.mxu0 0.0
    %1434 = vmatprep.subr.mxu0 0.0
    %1435 = vmatpush1.msra.mxu0 0.0
    %1436 = vmatprep.subr.mxu0 0.0
    %1437 = vmatpush1.msra.mxu0 0.0
    %1438 = vmatprep.subr.mxu0 0.0
    %1439 = vmatpush1.msra.mxu0 0.0
    %1440 = vmatprep.subr.mxu0 0.0
    %1441 = vmatpush1.msra.mxu0 0.0
    %1442 = vmatprep.subr.mxu0 0.0
    %1443 = vmatpush1.msra.mxu0 0.0
    %1444 = vmatprep.subr.mxu0 0.0
    %1445 = vmatpush1.msra.mxu0 0.0
    %1446 = vmatprep.subr.mxu0 0.0
    %1447 = vmatpush1.msra.mxu0 0.0
    %1448 = vmatprep.subr.mxu0 0.0
    %1449 = vmatpush1.msra.mxu0 0.0
    %1450 = vmatprep.subr.mxu0 0.0
    %1451 = vmatpush1.msra.mxu0 0.0
    %1452 = vmatprep.subr.mxu0 0.0
    %1453 = vmatpush1.msra.mxu0 0.0
    %1454 = vmatprep.subr.mxu0 0.0
    %1455 = vmatpush1.msra.mxu0 0.0
    %1456 = vmatprep.subr.mxu0 0.0
    %1457 = vmatpush1.msra.mxu0 0.0
    %1458 = vmatprep.subr.mxu0 0.0
    %1459 = vmatpush1.msra.mxu0 0.0
    %1460 = vmatprep.subr.mxu0 0.0
    %1461 = vmatpush1.msra.mxu0 0.0
    %1462 = vmatprep.subr.mxu0 0.0
    %1463 = vmatpush1.msra.mxu0 0.0
    %1464 = vmatprep.subr.mxu0 0.0
    %1465 = vmatpush1.msra.mxu0 0.0
    %1466 = vmatprep.subr.mxu0 0.0
    %1467 = vmatpush1.msra.mxu0 0.0
    %1468 = vmatprep.subr.mxu0 0.0
    %1469 = vmatpush1.msra.mxu0 0.0
    %1470 = vmatprep.subr.mxu0 0.0
    %1471 = vmatpush1.msra.mxu0 0.0
    %1472 = vmatprep.subr.mxu0 0.0
    %1473 = vmatpush1.msra.mxu0 0.0
    %1474 = vmatprep.subr.mxu0 0.0
    %1475 = vmatpush1.msra.mxu0 0.0
    %1476 = vmatprep.subr.mxu0 0.0
    %1477 = vmatpush1.msra.mxu0 0.0
    %1478 = vmatprep.subr.mxu0 0.0
    %1479 = vmatpush1.msra.mxu0 0.0
    %1480 = vmatprep.mubr.f32.mxu0 0.0
    %1481 = vmatmul.mubr.f32.gmra.mrb[0].mxu0 %v1414
    %v1482 = vpop.f32.mrb[0].mxu0
    %v1483 = vadd.f32 %v1410, %v1482
    %v1484 = vpop.f32.mrb[0].mxu0
    %1485 = vdwg.mxu0
    %v1486 = vxor.u32 %v1483, 2147483648
    %v1487 = vmul.f32 %v1486, 1.442695
    %v1488 = vpow.pop %v1487
    %v1489 = vadd.f32 %v1488, 1.0
    %v1490 = vrcp.pop %v1489
    %v1491 = vmul.f32 1.0, %v1490
    %v1492 = vtanh.pop %v1483
    %v1493 = vmul.f32 %v1491, %v1403
    %1495 = vrot.lane.b32.xlu0 %v1492, 32
    %v1496 = vpop.permute.xlu0 %1495
    %v1498 = vmul.f32 %v1491, %v1496
    %1500 = vrot.lane.b32.xlu0 %v1498, 32
    %v1501 = vpop.permute.xlu0 %1500
    %v1503 = vadd.f32 %v1493, %v1501
    %v1504 = vtanh.pop %v1503
    %1506 = vrot.lane.b32.xlu0 %v1504, 32
    %v1507 = vpop.permute.xlu0 %1506
    %v1509 = vmul.f32 %v1491, %v1507
    %v1510 = vld [vmem:[#allocation2 + $0x30] sm:$0xf0]
    %1512 = vrot.lane.b32.xlu0 %v1509, 64
    %v1513 = vpop.permute.xlu0 %1512
    %v1515 = vrot.slane %v1510, 4
    %v1517 = vsel %vm1206, %v1513, 0
    %1519 = vmatprep.subr.mxu0 0.0
    %1520 = vmatpush1.msra.mxu0 %v321
    %1521 = vmatprep.subr.mxu0 0.0
    %1522 = vmatpush1.msra.mxu0 %v322
    %1523 = vmatprep.subr.mxu0 0.0
    %1524 = vmatpush1.msra.mxu0 %v323
    %1525 = vmatprep.subr.mxu0 0.0
    %1526 = vmatpush1.msra.mxu0 %v324
    %1527 = vmatprep.subr.mxu0 0.0
    %1528 = vmatpush1.msra.mxu0 0.0
    %1529 = vmatprep.subr.mxu0 0.0
    %1530 = vmatpush1.msra.mxu0 0.0
    %1531 = vmatprep.subr.mxu0 0.0
    %1532 = vmatpush1.msra.mxu0 0.0
    %1533 = vmatprep.subr.mxu0 0.0
    %1534 = vmatpush1.msra.mxu0 0.0
    %1535 = vmatprep.subr.mxu0 0.0
    %1536 = vmatpush1.msra.mxu0 0.0
    %1537 = vmatprep.subr.mxu0 0.0
    %1538 = vmatpush1.msra.mxu0 0.0
    %1539 = vmatprep.subr.mxu0 0.0
    %1540 = vmatpush1.msra.mxu0 0.0
    %1541 = vmatprep.subr.mxu0 0.0
    %1542 = vmatpush1.msra.mxu0 0.0
    %1543 = vmatprep.subr.mxu0 0.0
    %1544 = vmatpush1.msra.mxu0 0.0
    %1545 = vmatprep.subr.mxu0 0.0
    %1546 = vmatpush1.msra.mxu0 0.0
    %1547 = vmatprep.subr.mxu0 0.0
    %1548 = vmatpush1.msra.mxu0 0.0
    %1549 = vmatprep.subr.mxu0 0.0
    %1550 = vmatpush1.msra.mxu0 0.0
    %1551 = vmatprep.subr.mxu0 0.0
    %1552 = vmatpush1.msra.mxu0 0.0
    %1553 = vmatprep.subr.mxu0 0.0
    %1554 = vmatpush1.msra.mxu0 0.0
    %1555 = vmatprep.subr.mxu0 0.0
    %1556 = vmatpush1.msra.mxu0 0.0
    %1557 = vmatprep.subr.mxu0 0.0
    %1558 = vmatpush1.msra.mxu0 0.0
    %1559 = vmatprep.subr.mxu0 0.0
    %1560 = vmatpush1.msra.mxu0 0.0
    %1561 = vmatprep.subr.mxu0 0.0
    %1562 = vmatpush1.msra.mxu0 0.0
    %1563 = vmatprep.subr.mxu0 0.0
    %1564 = vmatpush1.msra.mxu0 0.0
    %1565 = vmatprep.subr.mxu0 0.0
    %1566 = vmatpush1.msra.mxu0 0.0
    %1567 = vmatprep.subr.mxu0 0.0
    %1568 = vmatpush1.msra.mxu0 0.0
    %1569 = vmatprep.subr.mxu0 0.0
    %1570 = vmatpush1.msra.mxu0 0.0
    %1571 = vmatprep.subr.mxu0 0.0
    %1572 = vmatpush1.msra.mxu0 0.0
    %1573 = vmatprep.subr.mxu0 0.0
    %1574 = vmatpush1.msra.mxu0 0.0
    %1575 = vmatprep.subr.mxu0 0.0
    %1576 = vmatpush1.msra.mxu0 0.0
    %1577 = vmatprep.subr.mxu0 0.0
    %1578 = vmatpush1.msra.mxu0 0.0
    %1579 = vmatprep.subr.mxu0 0.0
    %1580 = vmatpush1.msra.mxu0 0.0
    %1581 = vmatprep.subr.mxu0 0.0
    %1582 = vmatpush1.msra.mxu0 0.0
    %1583 = vmatprep.mubr.f32.mxu0 0.0
    %1584 = vmatmul.mubr.f32.gmra.mrb[0].mxu0 %v1517
    %v1585 = vpop.f32.mrb[0].mxu0
    %v1586 = vadd.f32 %v1515, %v1585
    %v1587 = vpop.f32.mrb[0].mxu0
    %1588 = vdwg.mxu0
    %v1589 = vxor.u32 %v1586, 2147483648
    %v1590 = vmul.f32 %v1589, 1.442695
    %v1591 = vpow.pop %v1590
    %v1592 = vadd.f32 %v1591, 1.0
    %v1593 = vrcp.pop %v1592
    %v1594 = vmul.f32 1.0, %v1593
    %v1595 = vtanh.pop %v1586
    %v1596 = vmul.f32 %v1594, %v1503
    %1598 = vrot.lane.b32.xlu0 %v1595, 32
    %v1599 = vpop.permute.xlu0 %1598
    %v1601 = vmul.f32 %v1594, %v1599
    %1603 = vrot.lane.b32.xlu0 %v1601, 32
    %v1604 = vpop.permute.xlu0 %1603
    %v1606 = vadd.f32 %v1596, %v1604
    %v1607 = vtanh.pop %v1606
    %1609 = vrot.lane.b32.xlu0 %v1607, 32
    %v1610 = vpop.permute.xlu0 %1609
    %v1612 = vmul.f32 %v1594, %v1610
    %v1613 = vld [vmem:[#allocation2 + $0x50] sm:$0xf]
    %1615 = vrot.lane.b32.xlu0 %v1612, 64
    %v1616 = vpop.permute.xlu0 %1615
    %v1617 = vsel %vm1206, %v1616, 0
    %1619 = vmatprep.subr.mxu0 0.0
    %1620 = vmatpush1.msra.mxu0 %v321
    %1621 = vmatprep.subr.mxu0 0.0
    %1622 = vmatpush1.msra.mxu0 %v322
    %1623 = vmatprep.subr.mxu0 0.0
    %1624 = vmatpush1.msra.mxu0 %v323
    %1625 = vmatprep.subr.mxu0 0.0
    %1626 = vmatpush1.msra.mxu0 %v324
    %1627 = vmatprep.subr.mxu0 0.0
    %1628 = vmatpush1.msra.mxu0 0.0
    %1629 = vmatprep.subr.mxu0 0.0
    %1630 = vmatpush1.msra.mxu0 0.0
    %1631 = vmatprep.subr.mxu0 0.0
    %1632 = vmatpush1.msra.mxu0 0.0
    %1633 = vmatprep.subr.mxu0 0.0
    %1634 = vmatpush1.msra.mxu0 0.0
    %1635 = vmatprep.subr.mxu0 0.0
    %1636 = vmatpush1.msra.mxu0 0.0
    %1637 = vmatprep.subr.mxu0 0.0
    %1638 = vmatpush1.msra.mxu0 0.0
    %1639 = vmatprep.subr.mxu0 0.0
    %1640 = vmatpush1.msra.mxu0 0.0
    %1641 = vmatprep.subr.mxu0 0.0
    %1642 = vmatpush1.msra.mxu0 0.0
    %1643 = vmatprep.subr.mxu0 0.0
    %1644 = vmatpush1.msra.mxu0 0.0
    %1645 = vmatprep.subr.mxu0 0.0
    %1646 = vmatpush1.msra.mxu0 0.0
    %1647 = vmatprep.subr.mxu0 0.0
    %1648 = vmatpush1.msra.mxu0 0.0
    %1649 = vmatprep.subr.mxu0 0.0
    %1650 = vmatpush1.msra.mxu0 0.0
    %1651 = vmatprep.subr.mxu0 0.0
    %1652 = vmatpush1.msra.mxu0 0.0
    %1653 = vmatprep.subr.mxu0 0.0
    %1654 = vmatpush1.msra.mxu0 0.0
    %1655 = vmatprep.subr.mxu0 0.0
    %1656 = vmatpush1.msra.mxu0 0.0
    %1657 = vmatprep.subr.mxu0 0.0
    %1658 = vmatpush1.msra.mxu0 0.0
    %1659 = vmatprep.subr.mxu0 0.0
    %1660 = vmatpush1.msra.mxu0 0.0
    %1661 = vmatprep.subr.mxu0 0.0
    %1662 = vmatpush1.msra.mxu0 0.0
    %1663 = vmatprep.subr.mxu0 0.0
    %1664 = vmatpush1.msra.mxu0 0.0
    %1665 = vmatprep.subr.mxu0 0.0
    %1666 = vmatpush1.msra.mxu0 0.0
    %1667 = vmatprep.subr.mxu0 0.0
    %1668 = vmatpush1.msra.mxu0 0.0
    %1669 = vmatprep.subr.mxu0 0.0
    %1670 = vmatpush1.msra.mxu0 0.0
    %1671 = vmatprep.subr.mxu0 0.0
    %1672 = vmatpush1.msra.mxu0 0.0
    %1673 = vmatprep.subr.mxu0 0.0
    %1674 = vmatpush1.msra.mxu0 0.0
    %1675 = vmatprep.subr.mxu0 0.0
    %1676 = vmatpush1.msra.mxu0 0.0
    %1677 = vmatprep.subr.mxu0 0.0
    %1678 = vmatpush1.msra.mxu0 0.0
    %1679 = vmatprep.subr.mxu0 0.0
    %1680 = vmatpush1.msra.mxu0 0.0
    %1681 = vmatprep.subr.mxu0 0.0
    %1682 = vmatpush1.msra.mxu0 0.0
    %1683 = vmatprep.mubr.f32.mxu0 0.0
    %1684 = vmatmul.mubr.f32.gmra.mrb[0].mxu0 %v1617
    %v1685 = vpop.f32.mrb[0].mxu0
    %v1686 = vadd.f32 %v1613, %v1685
    %v1687 = vpop.f32.mrb[0].mxu0
    %1688 = vdwg.mxu0
    %v1689 = vxor.u32 %v1686, 2147483648
    %v1690 = vmul.f32 %v1689, 1.442695
    %v1691 = vpow.pop %v1690
    %v1692 = vadd.f32 %v1691, 1.0
    %v1693 = vrcp.pop %v1692
    %v1694 = vmul.f32 1.0, %v1693
    %v1695 = vtanh.pop %v1686
    %v1696 = vmul.f32 %v1694, %v1606
    %1698 = vrot.lane.b32.xlu0 %v1695, 32
    %v1699 = vpop.permute.xlu0 %1698
    %v1701 = vmul.f32 %v1694, %v1699
    %1703 = vrot.lane.b32.xlu0 %v1701, 32
    %v1704 = vpop.permute.xlu0 %1703
    %v1706 = vadd.f32 %v1696, %v1704
    %v1707 = vtanh.pop %v1706
    %1709 = vrot.lane.b32.xlu0 %v1707, 32
    %v1710 = vpop.permute.xlu0 %1709
    %v1712 = vmul.f32 %v1694, %v1710
    %v1713 = vld [vmem:[#allocation2 + $0x50] sm:$0xf0]
    %1715 = vrot.lane.b32.xlu0 %v1712, 64
    %v1716 = vpop.permute.xlu0 %1715
    %v1718 = vrot.slane %v1713, 4
    %v1720 = vsel %vm1206, %v1716, 0
    %1722 = vmatprep.subr.mxu0 0.0
    %1723 = vmatpush1.msra.mxu0 %v321
    %1724 = vmatprep.subr.mxu0 0.0
    %1725 = vmatpush1.msra.mxu0 %v322
    %1726 = vmatprep.subr.mxu0 0.0
    %1727 = vmatpush1.msra.mxu0 %v323
    %1728 = vmatprep.subr.mxu0 0.0
    %1729 = vmatpush1.msra.mxu0 %v324
    %1730 = vmatprep.subr.mxu0 0.0
    %1731 = vmatpush1.msra.mxu0 0.0
    %1732 = vmatprep.subr.mxu0 0.0
    %1733 = vmatpush1.msra.mxu0 0.0
    %1734 = vmatprep.subr.mxu0 0.0
    %1735 = vmatpush1.msra.mxu0 0.0
    %1736 = vmatprep.subr.mxu0 0.0
    %1737 = vmatpush1.msra.mxu0 0.0
    %1738 = vmatprep.subr.mxu0 0.0
    %1739 = vmatpush1.msra.mxu0 0.0
    %1740 = vmatprep.subr.mxu0 0.0
    %1741 = vmatpush1.msra.mxu0 0.0
    %1742 = vmatprep.subr.mxu0 0.0
    %1743 = vmatpush1.msra.mxu0 0.0
    %1744 = vmatprep.subr.mxu0 0.0
    %1745 = vmatpush1.msra.mxu0 0.0
    %1746 = vmatprep.subr.mxu0 0.0
    %1747 = vmatpush1.msra.mxu0 0.0
    %1748 = vmatprep.subr.mxu0 0.0
    %1749 = vmatpush1.msra.mxu0 0.0
    %1750 = vmatprep.subr.mxu0 0.0
    %1751 = vmatpush1.msra.mxu0 0.0
    %1752 = vmatprep.subr.mxu0 0.0
    %1753 = vmatpush1.msra.mxu0 0.0
    %1754 = vmatprep.subr.mxu0 0.0
    %1755 = vmatpush1.msra.mxu0 0.0
    %1756 = vmatprep.subr.mxu0 0.0
    %1757 = vmatpush1.msra.mxu0 0.0
    %1758 = vmatprep.subr.mxu0 0.0
    %1759 = vmatpush1.msra.mxu0 0.0
    %1760 = vmatprep.subr.mxu0 0.0
    %1761 = vmatpush1.msra.mxu0 0.0
    %1762 = vmatprep.subr.mxu0 0.0
    %1763 = vmatpush1.msra.mxu0 0.0
    %1764 = vmatprep.subr.mxu0 0.0
    %1765 = vmatpush1.msra.mxu0 0.0
    %1766 = vmatprep.subr.mxu0 0.0
    %1767 = vmatpush1.msra.mxu0 0.0
    %1768 = vmatprep.subr.mxu0 0.0
    %1769 = vmatpush1.msra.mxu0 0.0
    %1770 = vmatprep.subr.mxu0 0.0
    %1771 = vmatpush1.msra.mxu0 0.0
    %1772 = vmatprep.subr.mxu0 0.0
    %1773 = vmatpush1.msra.mxu0 0.0
    %1774 = vmatprep.subr.mxu0 0.0
    %1775 = vmatpush1.msra.mxu0 0.0
    %1776 = vmatprep.subr.mxu0 0.0
    %1777 = vmatpush1.msra.mxu0 0.0
    %1778 = vmatprep.subr.mxu0 0.0
    %1779 = vmatpush1.msra.mxu0 0.0
    %1780 = vmatprep.subr.mxu0 0.0
    %1781 = vmatpush1.msra.mxu0 0.0
    %1782 = vmatprep.subr.mxu0 0.0
    %1783 = vmatpush1.msra.mxu0 0.0
    %1784 = vmatprep.subr.mxu0 0.0
    %1785 = vmatpush1.msra.mxu0 0.0
    %1786 = vmatprep.mubr.f32.mxu0 0.0
    %1787 = vmatmul.mubr.f32.gmra.mrb[0].mxu0 %v1720
    %v1788 = vpop.f32.mrb[0].mxu0
    %v1789 = vadd.f32 %v1718, %v1788
    %v1790 = vpop.f32.mrb[0].mxu0
    %1791 = vdwg.mxu0
    %v1792 = vxor.u32 %v1789, 2147483648
    %v1793 = vmul.f32 %v1792, 1.442695
    %v1794 = vpow.pop %v1793
    %v1795 = vadd.f32 %v1794, 1.0
    %v1796 = vrcp.pop %v1795
    %v1797 = vmul.f32 1.0, %v1796
    %v1798 = vtanh.pop %v1789
    %v1799 = vmul.f32 %v1797, %v1706
    %1801 = vrot.lane.b32.xlu0 %v1798, 32
    %v1802 = vpop.permute.xlu0 %1801
    %v1804 = vmul.f32 %v1797, %v1802
    %1806 = vrot.lane.b32.xlu0 %v1804, 32
    %v1807 = vpop.permute.xlu0 %1806
    %v1809 = vadd.f32 %v1799, %v1807
    %v1810 = vtanh.pop %v1809
    %1812 = vrot.lane.b32.xlu0 %v1810, 32
    %v1813 = vpop.permute.xlu0 %1812
    %v1815 = vmul.f32 %v1797, %v1813
    %v1816 = vld [vmem:[#allocation2 + $0x70] sm:$0xf]
    %1818 = vrot.lane.b32.xlu0 %v1815, 64
    %v1819 = vpop.permute.xlu0 %1818
    %v1820 = vsel %vm1206, %v1819, 0
    %1822 = vmatprep.subr.mxu0 0.0
    %1823 = vmatpush1.msra.mxu0 %v321
    %1824 = vmatprep.subr.mxu0 0.0
    %1825 = vmatpush1.msra.mxu0 %v322
    %1826 = vmatprep.subr.mxu0 0.0
    %1827 = vmatpush1.msra.mxu0 %v323
    %1828 = vmatprep.subr.mxu0 0.0
    %1829 = vmatpush1.msra.mxu0 %v324
    %1830 = vmatprep.subr.mxu0 0.0
    %1831 = vmatpush1.msra.mxu0 0.0
    %1832 = vmatprep.subr.mxu0 0.0
    %1833 = vmatpush1.msra.mxu0 0.0
    %1834 = vmatprep.subr.mxu0 0.0
    %1835 = vmatpush1.msra.mxu0 0.0
    %1836 = vmatprep.subr.mxu0 0.0
    %1837 = vmatpush1.msra.mxu0 0.0
    %1838 = vmatprep.subr.mxu0 0.0
    %1839 = vmatpush1.msra.mxu0 0.0
    %1840 = vmatprep.subr.mxu0 0.0
    %1841 = vmatpush1.msra.mxu0 0.0
    %1842 = vmatprep.subr.mxu0 0.0
    %1843 = vmatpush1.msra.mxu0 0.0
    %1844 = vmatprep.subr.mxu0 0.0
    %1845 = vmatpush1.msra.mxu0 0.0
    %1846 = vmatprep.subr.mxu0 0.0
    %1847 = vmatpush1.msra.mxu0 0.0
    %1848 = vmatprep.subr.mxu0 0.0
    %1849 = vmatpush1.msra.mxu0 0.0
    %1850 = vmatprep.subr.mxu0 0.0
    %1851 = vmatpush1.msra.mxu0 0.0
    %1852 = vmatprep.subr.mxu0 0.0
    %1853 = vmatpush1.msra.mxu0 0.0
    %1854 = vmatprep.subr.mxu0 0.0
    %1855 = vmatpush1.msra.mxu0 0.0
    %1856 = vmatprep.subr.mxu0 0.0
    %1857 = vmatpush1.msra.mxu0 0.0
    %1858 = vmatprep.subr.mxu0 0.0
    %1859 = vmatpush1.msra.mxu0 0.0
    %1860 = vmatprep.subr.mxu0 0.0
    %1861 = vmatpush1.msra.mxu0 0.0
    %1862 = vmatprep.subr.mxu0 0.0
    %1863 = vmatpush1.msra.mxu0 0.0
    %1864 = vmatprep.subr.mxu0 0.0
    %1865 = vmatpush1.msra.mxu0 0.0
    %1866 = vmatprep.subr.mxu0 0.0
    %1867 = vmatpush1.msra.mxu0 0.0
    %1868 = vmatprep.subr.mxu0 0.0
    %1869 = vmatpush1.msra.mxu0 0.0
    %1870 = vmatprep.subr.mxu0 0.0
    %1871 = vmatpush1.msra.mxu0 0.0
    %1872 = vmatprep.subr.mxu0 0.0
    %1873 = vmatpush1.msra.mxu0 0.0
    %1874 = vmatprep.subr.mxu0 0.0
    %1875 = vmatpush1.msra.mxu0 0.0
    %1876 = vmatprep.subr.mxu0 0.0
    %1877 = vmatpush1.msra.mxu0 0.0
    %1878 = vmatprep.subr.mxu0 0.0
    %1879 = vmatpush1.msra.mxu0 0.0
    %1880 = vmatprep.subr.mxu0 0.0
    %1881 = vmatpush1.msra.mxu0 0.0
    %1882 = vmatprep.subr.mxu0 0.0
    %1883 = vmatpush1.msra.mxu0 0.0
    %1884 = vmatprep.subr.mxu0 0.0
    %1885 = vmatpush1.msra.mxu0 0.0
    %1886 = vmatprep.mubr.f32.mxu0 0.0
    %1887 = vmatmul.mubr.f32.gmra.mrb[0].mxu0 %v1820
    %v1888 = vpop.f32.mrb[0].mxu0
    %v1889 = vadd.f32 %v1816, %v1888
    %v1890 = vpop.f32.mrb[0].mxu0
    %1891 = vdwg.mxu0
    %v1892 = vxor.u32 %v1889, 2147483648
    %v1893 = vmul.f32 %v1892, 1.442695
    %v1894 = vpow.pop %v1893
    %v1895 = vadd.f32 %v1894, 1.0
    %v1896 = vrcp.pop %v1895
    %v1897 = vmul.f32 1.0, %v1896
    %v1898 = vtanh.pop %v1889
    %v1899 = vmul.f32 %v1897, %v1809
    %1901 = vrot.lane.b32.xlu0 %v1898, 32
    %v1902 = vpop.permute.xlu0 %1901
    %v1904 = vmul.f32 %v1897, %v1902
    %1906 = vrot.lane.b32.xlu0 %v1904, 32
    %v1907 = vpop.permute.xlu0 %1906
    %v1909 = vadd.f32 %v1899, %v1907
    %v1910 = vtanh.pop %v1909
    %1912 = vrot.lane.b32.xlu0 %v1910, 32
    %v1913 = vpop.permute.xlu0 %1912
    %v1915 = vmul.f32 %v1897, %v1913
    %v1916 = vld [vmem:[#allocation2 + $0x70] sm:$0xf0]
    %1918 = vrot.lane.b32.xlu0 %v1915, 64
    %v1919 = vpop.permute.xlu0 %1918
    %v1921 = vrot.slane %v1916, 4
    %v1923 = vsel %vm1206, %v1919, 0
    %1925 = vmatprep.subr.mxu0 0.0
    %1926 = vmatpush1.msra.mxu0 %v321
    %1927 = vmatprep.subr.mxu0 0.0
    %1928 = vmatpush1.msra.mxu0 %v322
    %1929 = vmatprep.subr.mxu0 0.0
    %1930 = vmatpush1.msra.mxu0 %v323
    %1931 = vmatprep.subr.mxu0 0.0
    %1932 = vmatpush1.msra.mxu0 %v324
    %1933 = vmatprep.subr.mxu0 0.0
    %1934 = vmatpush1.msra.mxu0 0.0
    %1935 = vmatprep.subr.mxu0 0.0
    %1936 = vmatpush1.msra.mxu0 0.0
    %1937 = vmatprep.subr.mxu0 0.0
    %1938 = vmatpush1.msra.mxu0 0.0
    %1939 = vmatprep.subr.mxu0 0.0
    %1940 = vmatpush1.msra.mxu0 0.0
    %1941 = vmatprep.subr.mxu0 0.0
    %1942 = vmatpush1.msra.mxu0 0.0
    %1943 = vmatprep.subr.mxu0 0.0
    %1944 = vmatpush1.msra.mxu0 0.0
    %1945 = vmatprep.subr.mxu0 0.0
    %1946 = vmatpush1.msra.mxu0 0.0
    %1947 = vmatprep.subr.mxu0 0.0
    %1948 = vmatpush1.msra.mxu0 0.0
    %1949 = vmatprep.subr.mxu0 0.0
    %1950 = vmatpush1.msra.mxu0 0.0
    %1951 = vmatprep.subr.mxu0 0.0
    %1952 = vmatpush1.msra.mxu0 0.0
    %1953 = vmatprep.subr.mxu0 0.0
    %1954 = vmatpush1.msra.mxu0 0.0
    %1955 = vmatprep.subr.mxu0 0.0
    %1956 = vmatpush1.msra.mxu0 0.0
    %1957 = vmatprep.subr.mxu0 0.0
    %1958 = vmatpush1.msra.mxu0 0.0
    %1959 = vmatprep.subr.mxu0 0.0
    %1960 = vmatpush1.msra.mxu0 0.0
    %1961 = vmatprep.subr.mxu0 0.0
    %1962 = vmatpush1.msra.mxu0 0.0
    %1963 = vmatprep.subr.mxu0 0.0
    %1964 = vmatpush1.msra.mxu0 0.0
    %1965 = vmatprep.subr.mxu0 0.0
    %1966 = vmatpush1.msra.mxu0 0.0
    %1967 = vmatprep.subr.mxu0 0.0
    %1968 = vmatpush1.msra.mxu0 0.0
    %1969 = vmatprep.subr.mxu0 0.0
    %1970 = vmatpush1.msra.mxu0 0.0
    %1971 = vmatprep.subr.mxu0 0.0
    %1972 = vmatpush1.msra.mxu0 0.0
    %1973 = vmatprep.subr.mxu0 0.0
    %1974 = vmatpush1.msra.mxu0 0.0
    %1975 = vmatprep.subr.mxu0 0.0
    %1976 = vmatpush1.msra.mxu0 0.0
    %1977 = vmatprep.subr.mxu0 0.0
    %1978 = vmatpush1.msra.mxu0 0.0
    %1979 = vmatprep.subr.mxu0 0.0
    %1980 = vmatpush1.msra.mxu0 0.0
    %1981 = vmatprep.subr.mxu0 0.0
    %1982 = vmatpush1.msra.mxu0 0.0
    %1983 = vmatprep.subr.mxu0 0.0
    %1984 = vmatpush1.msra.mxu0 0.0
    %1985 = vmatprep.subr.mxu0 0.0
    %1986 = vmatpush1.msra.mxu0 0.0
    %1987 = vmatprep.subr.mxu0 0.0
    %1988 = vmatpush1.msra.mxu0 0.0
    %1989 = vmatprep.mubr.f32.mxu0 0.0
    %1990 = vmatmul.mubr.f32.gmra.mrb[0].mxu0 %v1923
    %v1991 = vpop.f32.mrb[0].mxu0
    %v1992 = vadd.f32 %v1921, %v1991
    %v1993 = vpop.f32.mrb[0].mxu0
    %1994 = vdwg.mxu0
    %v1995 = vxor.u32 %v1992, 2147483648
    %v1996 = vmul.f32 %v1995, 1.442695
    %v1997 = vpow.pop %v1996
    %v1998 = vadd.f32 %v1997, 1.0
    %v1999 = vrcp.pop %v1998
    %v2000 = vmul.f32 1.0, %v1999
    %v2001 = vtanh.pop %v1992
    %v2002 = vmul.f32 %v2000, %v1909
    %2004 = vrot.lane.b32.xlu0 %v2001, 32
    %v2005 = vpop.permute.xlu0 %2004
    %v2007 = vmul.f32 %v2000, %v2005
    %2009 = vrot.lane.b32.xlu0 %v2007, 32
    %v2010 = vpop.permute.xlu0 %2009
    %v2012 = vadd.f32 %v2002, %v2010
    %v2013 = vtanh.pop %v2012
    %2015 = vrot.lane.b32.xlu0 %v2013, 32
    %v2016 = vpop.permute.xlu0 %2015
    %v2018 = vmul.f32 %v2000, %v2016
    %v2019 = vld [vmem:[#allocation2 + $0x18] sm:$0xf]
    %2021 = vrot.lane.b32.xlu0 %v2018, 64
    %v2022 = vpop.permute.xlu0 %2021
    %v2023 = vsel %vm1206, %v2022, 0
    %2025 = vmatprep.subr.mxu0 0.0
    %2026 = vmatpush1.msra.mxu0 %v325
    %2027 = vmatprep.subr.mxu0 0.0
    %2028 = vmatpush1.msra.mxu0 %v326
    %2029 = vmatprep.subr.mxu0 0.0
    %2030 = vmatpush1.msra.mxu0 %v327
    %2031 = vmatprep.subr.mxu0 0.0
    %2032 = vmatpush1.msra.mxu0 %v328
    %2033 = vmatprep.subr.mxu0 0.0
    %2034 = vmatpush1.msra.mxu0 0.0
    %2035 = vmatprep.subr.mxu0 0.0
    %2036 = vmatpush1.msra.mxu0 0.0
    %2037 = vmatprep.subr.mxu0 0.0
    %2038 = vmatpush1.msra.mxu0 0.0
    %2039 = vmatprep.subr.mxu0 0.0
    %2040 = vmatpush1.msra.mxu0 0.0
    %2041 = vmatprep.subr.mxu0 0.0
    %2042 = vmatpush1.msra.mxu0 0.0
    %2043 = vmatprep.subr.mxu0 0.0
    %2044 = vmatpush1.msra.mxu0 0.0
    %2045 = vmatprep.subr.mxu0 0.0
    %2046 = vmatpush1.msra.mxu0 0.0
    %2047 = vmatprep.subr.mxu0 0.0
    %2048 = vmatpush1.msra.mxu0 0.0
    %2049 = vmatprep.subr.mxu0 0.0
    %2050 = vmatpush1.msra.mxu0 0.0
    %2051 = vmatprep.subr.mxu0 0.0
    %2052 = vmatpush1.msra.mxu0 0.0
    %2053 = vmatprep.subr.mxu0 0.0
    %2054 = vmatpush1.msra.mxu0 0.0
    %2055 = vmatprep.subr.mxu0 0.0
    %2056 = vmatpush1.msra.mxu0 0.0
    %2057 = vmatprep.subr.mxu0 0.0
    %2058 = vmatpush1.msra.mxu0 0.0
    %2059 = vmatprep.subr.mxu0 0.0
    %2060 = vmatpush1.msra.mxu0 0.0
    %2061 = vmatprep.subr.mxu0 0.0
    %2062 = vmatpush1.msra.mxu0 0.0
    %2063 = vmatprep.subr.mxu0 0.0
    %2064 = vmatpush1.msra.mxu0 0.0
    %2065 = vmatprep.subr.mxu0 0.0
    %2066 = vmatpush1.msra.mxu0 0.0
    %2067 = vmatprep.subr.mxu0 0.0
    %2068 = vmatpush1.msra.mxu0 0.0
    %2069 = vmatprep.subr.mxu0 0.0
    %2070 = vmatpush1.msra.mxu0 0.0
    %2071 = vmatprep.subr.mxu0 0.0
    %2072 = vmatpush1.msra.mxu0 0.0
    %2073 = vmatprep.subr.mxu0 0.0
    %2074 = vmatpush1.msra.mxu0 0.0
    %2075 = vmatprep.subr.mxu0 0.0
    %2076 = vmatpush1.msra.mxu0 0.0
    %2077 = vmatprep.subr.mxu0 0.0
    %2078 = vmatpush1.msra.mxu0 0.0
    %2079 = vmatprep.subr.mxu0 0.0
    %2080 = vmatpush1.msra.mxu0 0.0
    %2081 = vmatprep.subr.mxu0 0.0
    %2082 = vmatpush1.msra.mxu0 0.0
    %2083 = vmatprep.subr.mxu0 0.0
    %2084 = vmatpush1.msra.mxu0 0.0
    %2085 = vmatprep.subr.mxu0 0.0
    %2086 = vmatpush1.msra.mxu0 0.0
    %2087 = vmatprep.subr.mxu0 0.0
    %2088 = vmatpush1.msra.mxu0 0.0
    %2089 = vmatprep.mubr.f32.mxu0 0.0
    %2090 = vmatmul.mubr.f32.gmra.mrb[0].mxu0 %v2023
    %v2091 = vpop.f32.mrb[0].mxu0
    %v2092 = vadd.f32 %v2019, %v2091
    %v2093 = vpop.f32.mrb[0].mxu0
    %2094 = vdwg.mxu0
    %v2095 = vxor.u32 %v2092, 2147483648
    %v2096 = vmul.f32 %v2095, 1.442695
    %v2097 = vpow.pop %v2096
    %v2098 = vadd.f32 %v2097, 1.0
    %v2099 = vrcp.pop %v2098
    %v2100 = vmul.f32 1.0, %v2099
    %v2101 = vtanh.pop %v2092
    %v2102 = vmul.f32 %v2100, %v2012
    %2104 = vrot.lane.b32.xlu0 %v2101, 32
    %v2105 = vpop.permute.xlu0 %2104
    %v2107 = vmul.f32 %v2100, %v2105
    %2109 = vrot.lane.b32.xlu0 %v2107, 32
    %v2110 = vpop.permute.xlu0 %2109
    %v2112 = vadd.f32 %v2102, %v2110
    %v2113 = vtanh.pop %v2112
    %2115 = vrot.lane.b32.xlu0 %v2113, 32
    %v2116 = vpop.permute.xlu0 %2115
    %v2118 = vmul.f32 %v2100, %v2116
    %v2119 = vld [vmem:[#allocation2 + $0x18] sm:$0xf0]
    %2121 = vrot.lane.b32.xlu0 %v2118, 64
    %v2122 = vpop.permute.xlu0 %2121
    %v2124 = vrot.slane %v2119, 4
    %v2126 = vsel %vm1206, %v2122, 0
    %2128 = vmatprep.subr.mxu0 0.0
    %2129 = vmatpush1.msra.mxu0 %v325
    %2130 = vmatprep.subr.mxu0 0.0
    %2131 = vmatpush1.msra.mxu0 %v326
    %2132 = vmatprep.subr.mxu0 0.0
    %2133 = vmatpush1.msra.mxu0 %v327
    %2134 = vmatprep.subr.mxu0 0.0
    %2135 = vmatpush1.msra.mxu0 %v328
    %2136 = vmatprep.subr.mxu0 0.0
    %2137 = vmatpush1.msra.mxu0 0.0
    %2138 = vmatprep.subr.mxu0 0.0
    %2139 = vmatpush1.msra.mxu0 0.0
    %2140 = vmatprep.subr.mxu0 0.0
    %2141 = vmatpush1.msra.mxu0 0.0
    %2142 = vmatprep.subr.mxu0 0.0
    %2143 = vmatpush1.msra.mxu0 0.0
    %2144 = vmatprep.subr.mxu0 0.0
    %2145 = vmatpush1.msra.mxu0 0.0
    %2146 = vmatprep.subr.mxu0 0.0
    %2147 = vmatpush1.msra.mxu0 0.0
    %2148 = vmatprep.subr.mxu0 0.0
    %2149 = vmatpush1.msra.mxu0 0.0
    %2150 = vmatprep.subr.mxu0 0.0
    %2151 = vmatpush1.msra.mxu0 0.0
    %2152 = vmatprep.subr.mxu0 0.0
    %2153 = vmatpush1.msra.mxu0 0.0
    %2154 = vmatprep.subr.mxu0 0.0
    %2155 = vmatpush1.msra.mxu0 0.0
    %2156 = vmatprep.subr.mxu0 0.0
    %2157 = vmatpush1.msra.mxu0 0.0
    %2158 = vmatprep.subr.mxu0 0.0
    %2159 = vmatpush1.msra.mxu0 0.0
    %2160 = vmatprep.subr.mxu0 0.0
    %2161 = vmatpush1.msra.mxu0 0.0
    %2162 = vmatprep.subr.mxu0 0.0
    %2163 = vmatpush1.msra.mxu0 0.0
    %2164 = vmatprep.subr.mxu0 0.0
    %2165 = vmatpush1.msra.mxu0 0.0
    %2166 = vmatprep.subr.mxu0 0.0
    %2167 = vmatpush1.msra.mxu0 0.0
    %2168 = vmatprep.subr.mxu0 0.0
    %2169 = vmatpush1.msra.mxu0 0.0
    %2170 = vmatprep.subr.mxu0 0.0
    %2171 = vmatpush1.msra.mxu0 0.0
    %2172 = vmatprep.subr.mxu0 0.0
    %2173 = vmatpush1.msra.mxu0 0.0
    %2174 = vmatprep.subr.mxu0 0.0
    %2175 = vmatpush1.msra.mxu0 0.0
    %2176 = vmatprep.subr.mxu0 0.0
    %2177 = vmatpush1.msra.mxu0 0.0
    %2178 = vmatprep.subr.mxu0 0.0
    %2179 = vmatpush1.msra.mxu0 0.0
    %2180 = vmatprep.subr.mxu0 0.0
    %2181 = vmatpush1.msra.mxu0 0.0
    %2182 = vmatprep.subr.mxu0 0.0
    %2183 = vmatpush1.msra.mxu0 0.0
    %2184 = vmatprep.subr.mxu0 0.0
    %2185 = vmatpush1.msra.mxu0 0.0
    %2186 = vmatprep.subr.mxu0 0.0
    %2187 = vmatpush1.msra.mxu0 0.0
    %2188 = vmatprep.subr.mxu0 0.0
    %2189 = vmatpush1.msra.mxu0 0.0
    %2190 = vmatprep.subr.mxu0 0.0
    %2191 = vmatpush1.msra.mxu0 0.0
    %2192 = vmatprep.mubr.f32.mxu0 0.0
    %2193 = vmatmul.mubr.f32.gmra.mrb[0].mxu0 %v2126
    %v2194 = vpop.f32.mrb[0].mxu0
    %v2195 = vadd.f32 %v2124, %v2194
    %v2196 = vpop.f32.mrb[0].mxu0
    %2197 = vdwg.mxu0
    %v2198 = vxor.u32 %v2195, 2147483648
    %v2199 = vmul.f32 %v2198, 1.442695
    %v2200 = vpow.pop %v2199
    %v2201 = vadd.f32 %v2200, 1.0
    %v2202 = vrcp.pop %v2201
    %v2203 = vmul.f32 1.0, %v2202
    %v2204 = vtanh.pop %v2195
    %v2205 = vmul.f32 %v2203, %v2112
    %2207 = vrot.lane.b32.xlu0 %v2204, 32
    %v2208 = vpop.permute.xlu0 %2207
    %v2210 = vmul.f32 %v2203, %v2208
    %2212 = vrot.lane.b32.xlu0 %v2210, 32
    %v2213 = vpop.permute.xlu0 %2212
    %v2215 = vadd.f32 %v2205, %v2213
    %v2216 = vtanh.pop %v2215
    %2218 = vrot.lane.b32.xlu0 %v2216, 32
    %v2219 = vpop.permute.xlu0 %2218
    %v2221 = vmul.f32 %v2203, %v2219
    %v2222 = vld [vmem:[#allocation2 + $0x38] sm:$0xf]
    %2224 = vrot.lane.b32.xlu0 %v2221, 64
    %v2225 = vpop.permute.xlu0 %2224
    %v2226 = vsel %vm1206, %v2225, 0
    %2228 = vmatprep.subr.mxu0 0.0
    %2229 = vmatpush1.msra.mxu0 %v325
    %2230 = vmatprep.subr.mxu0 0.0
    %2231 = vmatpush1.msra.mxu0 %v326
    %2232 = vmatprep.subr.mxu0 0.0
    %2233 = vmatpush1.msra.mxu0 %v327
    %2234 = vmatprep.subr.mxu0 0.0
    %2235 = vmatpush1.msra.mxu0 %v328
    %2236 = vmatprep.subr.mxu0 0.0
    %2237 = vmatpush1.msra.mxu0 0.0
    %2238 = vmatprep.subr.mxu0 0.0
    %2239 = vmatpush1.msra.mxu0 0.0
    %2240 = vmatprep.subr.mxu0 0.0
    %2241 = vmatpush1.msra.mxu0 0.0
    %2242 = vmatprep.subr.mxu0 0.0
    %2243 = vmatpush1.msra.mxu0 0.0
    %2244 = vmatprep.subr.mxu0 0.0
    %2245 = vmatpush1.msra.mxu0 0.0
    %2246 = vmatprep.subr.mxu0 0.0
    %2247 = vmatpush1.msra.mxu0 0.0
    %2248 = vmatprep.subr.mxu0 0.0
    %2249 = vmatpush1.msra.mxu0 0.0
    %2250 = vmatprep.subr.mxu0 0.0
    %2251 = vmatpush1.msra.mxu0 0.0
    %2252 = vmatprep.subr.mxu0 0.0
    %2253 = vmatpush1.msra.mxu0 0.0
    %2254 = vmatprep.subr.mxu0 0.0
    %2255 = vmatpush1.msra.mxu0 0.0
    %2256 = vmatprep.subr.mxu0 0.0
    %2257 = vmatpush1.msra.mxu0 0.0
    %2258 = vmatprep.subr.mxu0 0.0
    %2259 = vmatpush1.msra.mxu0 0.0
    %2260 = vmatprep.subr.mxu0 0.0
    %2261 = vmatpush1.msra.mxu0 0.0
    %2262 = vmatprep.subr.mxu0 0.0
    %2263 = vmatpush1.msra.mxu0 0.0
    %2264 = vmatprep.subr.mxu0 0.0
    %2265 = vmatpush1.msra.mxu0 0.0
    %2266 = vmatprep.subr.mxu0 0.0
    %2267 = vmatpush1.msra.mxu0 0.0
    %2268 = vmatprep.subr.mxu0 0.0
    %2269 = vmatpush1.msra.mxu0 0.0
    %2270 = vmatprep.subr.mxu0 0.0
    %2271 = vmatpush1.msra.mxu0 0.0
    %2272 = vmatprep.subr.mxu0 0.0
    %2273 = vmatpush1.msra.mxu0 0.0
    %2274 = vmatprep.subr.mxu0 0.0
    %2275 = vmatpush1.msra.mxu0 0.0
    %2276 = vmatprep.subr.mxu0 0.0
    %2277 = vmatpush1.msra.mxu0 0.0
    %2278 = vmatprep.subr.mxu0 0.0
    %2279 = vmatpush1.msra.mxu0 0.0
    %2280 = vmatprep.subr.mxu0 0.0
    %2281 = vmatpush1.msra.mxu0 0.0
    %2282 = vmatprep.subr.mxu0 0.0
    %2283 = vmatpush1.msra.mxu0 0.0
    %2284 = vmatprep.subr.mxu0 0.0
    %2285 = vmatpush1.msra.mxu0 0.0
    %2286 = vmatprep.subr.mxu0 0.0
    %2287 = vmatpush1.msra.mxu0 0.0
    %2288 = vmatprep.subr.mxu0 0.0
    %2289 = vmatpush1.msra.mxu0 0.0
    %2290 = vmatprep.subr.mxu0 0.0
    %2291 = vmatpush1.msra.mxu0 0.0
    %2292 = vmatprep.mubr.f32.mxu0 0.0
    %2293 = vmatmul.mubr.f32.gmra.mrb[0].mxu0 %v2226
    %v2294 = vpop.f32.mrb[0].mxu0
    %v2295 = vadd.f32 %v2222, %v2294
    %v2296 = vpop.f32.mrb[0].mxu0
    %2297 = vdwg.mxu0
    %v2298 = vxor.u32 %v2295, 2147483648
    %v2299 = vmul.f32 %v2298, 1.442695
    %v2300 = vpow.pop %v2299
    %v2301 = vadd.f32 %v2300, 1.0
    %v2302 = vrcp.pop %v2301
    %v2303 = vmul.f32 1.0, %v2302
    %v2304 = vtanh.pop %v2295
    %v2305 = vmul.f32 %v2303, %v2215
    %2307 = vrot.lane.b32.xlu0 %v2304, 32
    %v2308 = vpop.permute.xlu0 %2307
    %v2310 = vmul.f32 %v2303, %v2308
    %2312 = vrot.lane.b32.xlu0 %v2310, 32
    %v2313 = vpop.permute.xlu0 %2312
    %v2315 = vadd.f32 %v2305, %v2313
    %v2316 = vtanh.pop %v2315
    %2318 = vrot.lane.b32.xlu0 %v2316, 32
    %v2319 = vpop.permute.xlu0 %2318
    %v2321 = vmul.f32 %v2303, %v2319
    %v2322 = vld [vmem:[#allocation2 + $0x38] sm:$0xf0]
    %2324 = vrot.lane.b32.xlu0 %v2321, 64
    %v2325 = vpop.permute.xlu0 %2324
    %v2327 = vrot.slane %v2322, 4
    %v2329 = vsel %vm1206, %v2325, 0
    %2331 = vmatprep.subr.mxu0 0.0
    %2332 = vmatpush1.msra.mxu0 %v325
    %2333 = vmatprep.subr.mxu0 0.0
    %2334 = vmatpush1.msra.mxu0 %v326
    %2335 = vmatprep.subr.mxu0 0.0
    %2336 = vmatpush1.msra.mxu0 %v327
    %2337 = vmatprep.subr.mxu0 0.0
    %2338 = vmatpush1.msra.mxu0 %v328
    %2339 = vmatprep.subr.mxu0 0.0
    %2340 = vmatpush1.msra.mxu0 0.0
    %2341 = vmatprep.subr.mxu0 0.0
    %2342 = vmatpush1.msra.mxu0 0.0
    %2343 = vmatprep.subr.mxu0 0.0
    %2344 = vmatpush1.msra.mxu0 0.0
    %2345 = vmatprep.subr.mxu0 0.0
    %2346 = vmatpush1.msra.mxu0 0.0
    %2347 = vmatprep.subr.mxu0 0.0
    %2348 = vmatpush1.msra.mxu0 0.0
    %2349 = vmatprep.subr.mxu0 0.0
    %2350 = vmatpush1.msra.mxu0 0.0
    %2351 = vmatprep.subr.mxu0 0.0
    %2352 = vmatpush1.msra.mxu0 0.0
    %2353 = vmatprep.subr.mxu0 0.0
    %2354 = vmatpush1.msra.mxu0 0.0
    %2355 = vmatprep.subr.mxu0 0.0
    %2356 = vmatpush1.msra.mxu0 0.0
    %2357 = vmatprep.subr.mxu0 0.0
    %2358 = vmatpush1.msra.mxu0 0.0
    %2359 = vmatprep.subr.mxu0 0.0
    %2360 = vmatpush1.msra.mxu0 0.0
    %2361 = vmatprep.subr.mxu0 0.0
    %2362 = vmatpush1.msra.mxu0 0.0
    %2363 = vmatprep.subr.mxu0 0.0
    %2364 = vmatpush1.msra.mxu0 0.0
    %2365 = vmatprep.subr.mxu0 0.0
    %2366 = vmatpush1.msra.mxu0 0.0
    %2367 = vmatprep.subr.mxu0 0.0
    %2368 = vmatpush1.msra.mxu0 0.0
    %2369 = vmatprep.subr.mxu0 0.0
    %2370 = vmatpush1.msra.mxu0 0.0
    %2371 = vmatprep.subr.mxu0 0.0
    %2372 = vmatpush1.msra.mxu0 0.0
    %2373 = vmatprep.subr.mxu0 0.0
    %2374 = vmatpush1.msra.mxu0 0.0
    %2375 = vmatprep.subr.mxu0 0.0
    %2376 = vmatpush1.msra.mxu0 0.0
    %2377 = vmatprep.subr.mxu0 0.0
    %2378 = vmatpush1.msra.mxu0 0.0
    %2379 = vmatprep.subr.mxu0 0.0
    %2380 = vmatpush1.msra.mxu0 0.0
    %2381 = vmatprep.subr.mxu0 0.0
    %2382 = vmatpush1.msra.mxu0 0.0
    %2383 = vmatprep.subr.mxu0 0.0
    %2384 = vmatpush1.msra.mxu0 0.0
    %2385 = vmatprep.subr.mxu0 0.0
    %2386 = vmatpush1.msra.mxu0 0.0
    %2387 = vmatprep.subr.mxu0 0.0
    %2388 = vmatpush1.msra.mxu0 0.0
    %2389 = vmatprep.subr.mxu0 0.0
    %2390 = vmatpush1.msra.mxu0 0.0
    %2391 = vmatprep.subr.mxu0 0.0
    %2392 = vmatpush1.msra.mxu0 0.0
    %2393 = vmatprep.subr.mxu0 0.0
    %2394 = vmatpush1.msra.mxu0 0.0
    %2395 = vmatprep.mubr.f32.mxu0 0.0
    %2396 = vmatmul.mubr.f32.gmra.mrb[0].mxu0 %v2329
    %v2397 = vpop.f32.mrb[0].mxu0
    %v2398 = vadd.f32 %v2327, %v2397
    %v2399 = vpop.f32.mrb[0].mxu0
    %2400 = vdwg.mxu0
    %v2401 = vxor.u32 %v2398, 2147483648
    %v2402 = vmul.f32 %v2401, 1.442695
    %v2403 = vpow.pop %v2402
    %v2404 = vadd.f32 %v2403, 1.0
    %v2405 = vrcp.pop %v2404
    %v2406 = vmul.f32 1.0, %v2405
    %v2407 = vtanh.pop %v2398
    %v2408 = vmul.f32 %v2406, %v2315
    %2410 = vrot.lane.b32.xlu0 %v2407, 32
    %v2411 = vpop.permute.xlu0 %2410
    %v2413 = vmul.f32 %v2406, %v2411
    %2415 = vrot.lane.b32.xlu0 %v2413, 32
    %v2416 = vpop.permute.xlu0 %2415
    %v2418 = vadd.f32 %v2408, %v2416
    %v2419 = vtanh.pop %v2418
    %2421 = vrot.lane.b32.xlu0 %v2419, 32
    %v2422 = vpop.permute.xlu0 %2421
    %v2424 = vmul.f32 %v2406, %v2422
    %v2425 = vld [vmem:[#allocation2 + $0x58] sm:$0xf]
    %2427 = vrot.lane.b32.xlu0 %v2424, 64
    %v2428 = vpop.permute.xlu0 %2427
    %v2429 = vsel %vm1206, %v2428, 0
    %2431 = vmatprep.subr.mxu0 0.0
    %2432 = vmatpush1.msra.mxu0 %v325
    %2433 = vmatprep.subr.mxu0 0.0
    %2434 = vmatpush1.msra.mxu0 %v326
    %2435 = vmatprep.subr.mxu0 0.0
    %2436 = vmatpush1.msra.mxu0 %v327
    %2437 = vmatprep.subr.mxu0 0.0
    %2438 = vmatpush1.msra.mxu0 %v328
    %2439 = vmatprep.subr.mxu0 0.0
    %2440 = vmatpush1.msra.mxu0 0.0
    %2441 = vmatprep.subr.mxu0 0.0
    %2442 = vmatpush1.msra.mxu0 0.0
    %2443 = vmatprep.subr.mxu0 0.0
    %2444 = vmatpush1.msra.mxu0 0.0
    %2445 = vmatprep.subr.mxu0 0.0
    %2446 = vmatpush1.msra.mxu0 0.0
    %2447 = vmatprep.subr.mxu0 0.0
    %2448 = vmatpush1.msra.mxu0 0.0
    %2449 = vmatprep.subr.mxu0 0.0
    %2450 = vmatpush1.msra.mxu0 0.0
    %2451 = vmatprep.subr.mxu0 0.0
    %2452 = vmatpush1.msra.mxu0 0.0
    %2453 = vmatprep.subr.mxu0 0.0
    %2454 = vmatpush1.msra.mxu0 0.0
    %2455 = vmatprep.subr.mxu0 0.0
    %2456 = vmatpush1.msra.mxu0 0.0
    %2457 = vmatprep.subr.mxu0 0.0
    %2458 = vmatpush1.msra.mxu0 0.0
    %2459 = vmatprep.subr.mxu0 0.0
    %2460 = vmatpush1.msra.mxu0 0.0
    %2461 = vmatprep.subr.mxu0 0.0
    %2462 = vmatpush1.msra.mxu0 0.0
    %2463 = vmatprep.subr.mxu0 0.0
    %2464 = vmatpush1.msra.mxu0 0.0
    %2465 = vmatprep.subr.mxu0 0.0
    %2466 = vmatpush1.msra.mxu0 0.0
    %2467 = vmatprep.subr.mxu0 0.0
    %2468 = vmatpush1.msra.mxu0 0.0
    %2469 = vmatprep.subr.mxu0 0.0
    %2470 = vmatpush1.msra.mxu0 0.0
    %2471 = vmatprep.subr.mxu0 0.0
    %2472 = vmatpush1.msra.mxu0 0.0
    %2473 = vmatprep.subr.mxu0 0.0
    %2474 = vmatpush1.msra.mxu0 0.0
    %2475 = vmatprep.subr.mxu0 0.0
    %2476 = vmatpush1.msra.mxu0 0.0
    %2477 = vmatprep.subr.mxu0 0.0
    %2478 = vmatpush1.msra.mxu0 0.0
    %2479 = vmatprep.subr.mxu0 0.0
    %2480 = vmatpush1.msra.mxu0 0.0
    %2481 = vmatprep.subr.mxu0 0.0
    %2482 = vmatpush1.msra.mxu0 0.0
    %2483 = vmatprep.subr.mxu0 0.0
    %2484 = vmatpush1.msra.mxu0 0.0
    %2485 = vmatprep.subr.mxu0 0.0
    %2486 = vmatpush1.msra.mxu0 0.0
    %2487 = vmatprep.subr.mxu0 0.0
    %2488 = vmatpush1.msra.mxu0 0.0
    %2489 = vmatprep.subr.mxu0 0.0
    %2490 = vmatpush1.msra.mxu0 0.0
    %2491 = vmatprep.subr.mxu0 0.0
    %2492 = vmatpush1.msra.mxu0 0.0
    %2493 = vmatprep.subr.mxu0 0.0
    %2494 = vmatpush1.msra.mxu0 0.0
    %2495 = vmatprep.mubr.f32.mxu0 0.0
    %2496 = vmatmul.mubr.f32.gmra.mrb[0].mxu0 %v2429
    %v2497 = vpop.f32.mrb[0].mxu0
    %v2498 = vadd.f32 %v2425, %v2497
    %v2499 = vpop.f32.mrb[0].mxu0
    %2500 = vdwg.mxu0
    %v2501 = vxor.u32 %v2498, 2147483648
    %v2502 = vmul.f32 %v2501, 1.442695
    %v2503 = vpow.pop %v2502
    %v2504 = vadd.f32 %v2503, 1.0
    %v2505 = vrcp.pop %v2504
    %v2506 = vmul.f32 1.0, %v2505
    %v2507 = vtanh.pop %v2498
    %v2508 = vmul.f32 %v2506, %v2418
    %2510 = vrot.lane.b32.xlu0 %v2507, 32
    %v2511 = vpop.permute.xlu0 %2510
    %v2513 = vmul.f32 %v2506, %v2511
    %2515 = vrot.lane.b32.xlu0 %v2513, 32
    %v2516 = vpop.permute.xlu0 %2515
    %v2518 = vadd.f32 %v2508, %v2516
    %v2519 = vtanh.pop %v2518
    %2521 = vrot.lane.b32.xlu0 %v2519, 32
    %v2522 = vpop.permute.xlu0 %2521
    %v2524 = vmul.f32 %v2506, %v2522
    %v2525 = vld [vmem:[#allocation2 + $0x58] sm:$0xf0]
    %2527 = vrot.lane.b32.xlu0 %v2524, 64
    %v2528 = vpop.permute.xlu0 %2527
    %v2530 = vrot.slane %v2525, 4
    %v2532 = vsel %vm1206, %v2528, 0
    %2534 = vmatprep.subr.mxu0 0.0
    %2535 = vmatpush1.msra.mxu0 %v325
    %2536 = vmatprep.subr.mxu0 0.0
    %2537 = vmatpush1.msra.mxu0 %v326
    %2538 = vmatprep.subr.mxu0 0.0
    %2539 = vmatpush1.msra.mxu0 %v327
    %2540 = vmatprep.subr.mxu0 0.0
    %2541 = vmatpush1.msra.mxu0 %v328
    %2542 = vmatprep.subr.mxu0 0.0
    %2543 = vmatpush1.msra.mxu0 0.0
    %2544 = vmatprep.subr.mxu0 0.0
    %2545 = vmatpush1.msra.mxu0 0.0
    %2546 = vmatprep.subr.mxu0 0.0
    %2547 = vmatpush1.msra.mxu0 0.0
    %2548 = vmatprep.subr.mxu0 0.0
    %2549 = vmatpush1.msra.mxu0 0.0
    %2550 = vmatprep.subr.mxu0 0.0
    %2551 = vmatpush1.msra.mxu0 0.0
    %2552 = vmatprep.subr.mxu0 0.0
    %2553 = vmatpush1.msra.mxu0 0.0
    %2554 = vmatprep.subr.mxu0 0.0
    %2555 = vmatpush1.msra.mxu0 0.0
    %2556 = vmatprep.subr.mxu0 0.0
    %2557 = vmatpush1.msra.mxu0 0.0
    %2558 = vmatprep.subr.mxu0 0.0
    %2559 = vmatpush1.msra.mxu0 0.0
    %2560 = vmatprep.subr.mxu0 0.0
    %2561 = vmatpush1.msra.mxu0 0.0
    %2562 = vmatprep.subr.mxu0 0.0
    %2563 = vmatpush1.msra.mxu0 0.0
    %2564 = vmatprep.subr.mxu0 0.0
    %2565 = vmatpush1.msra.mxu0 0.0
    %2566 = vmatprep.subr.mxu0 0.0
    %2567 = vmatpush1.msra.mxu0 0.0
    %2568 = vmatprep.subr.mxu0 0.0
    %2569 = vmatpush1.msra.mxu0 0.0
    %2570 = vmatprep.subr.mxu0 0.0
    %2571 = vmatpush1.msra.mxu0 0.0
    %2572 = vmatprep.subr.mxu0 0.0
    %2573 = vmatpush1.msra.mxu0 0.0
    %2574 = vmatprep.subr.mxu0 0.0
    %2575 = vmatpush1.msra.mxu0 0.0
    %2576 = vmatprep.subr.mxu0 0.0
    %2577 = vmatpush1.msra.mxu0 0.0
    %2578 = vmatprep.subr.mxu0 0.0
    %2579 = vmatpush1.msra.mxu0 0.0
    %2580 = vmatprep.subr.mxu0 0.0
    %2581 = vmatpush1.msra.mxu0 0.0
    %2582 = vmatprep.subr.mxu0 0.0
    %2583 = vmatpush1.msra.mxu0 0.0
    %2584 = vmatprep.subr.mxu0 0.0
    %2585 = vmatpush1.msra.mxu0 0.0
    %2586 = vmatprep.subr.mxu0 0.0
    %2587 = vmatpush1.msra.mxu0 0.0
    %2588 = vmatprep.subr.mxu0 0.0
    %2589 = vmatpush1.msra.mxu0 0.0
    %2590 = vmatprep.subr.mxu0 0.0
    %2591 = vmatpush1.msra.mxu0 0.0
    %2592 = vmatprep.subr.mxu0 0.0
    %2593 = vmatpush1.msra.mxu0 0.0
    %2594 = vmatprep.subr.mxu0 0.0
    %2595 = vmatpush1.msra.mxu0 0.0
    %2596 = vmatprep.subr.mxu0 0.0
    %2597 = vmatpush1.msra.mxu0 0.0
    %2598 = vmatprep.mubr.f32.mxu0 0.0
    %2599 = vmatmul.mubr.f32.gmra.mrb[0].mxu0 %v2532
    %v2600 = vpop.f32.mrb[0].mxu0
    %v2601 = vadd.f32 %v2530, %v2600
    %v2602 = vpop.f32.mrb[0].mxu0
    %2603 = vdwg.mxu0
    %v2604 = vxor.u32 %v2601, 2147483648
    %v2605 = vmul.f32 %v2604, 1.442695
    %v2606 = vpow.pop %v2605
    %v2607 = vadd.f32 %v2606, 1.0
    %v2608 = vrcp.pop %v2607
    %v2609 = vmul.f32 1.0, %v2608
    %v2610 = vtanh.pop %v2601
    %v2611 = vmul.f32 %v2609, %v2518
    %2613 = vrot.lane.b32.xlu0 %v2610, 32
    %v2614 = vpop.permute.xlu0 %2613
    %v2616 = vmul.f32 %v2609, %v2614
    %2618 = vrot.lane.b32.xlu0 %v2616, 32
    %v2619 = vpop.permute.xlu0 %2618
    %v2621 = vadd.f32 %v2611, %v2619
    %v2622 = vtanh.pop %v2621
    %2624 = vrot.lane.b32.xlu0 %v2622, 32
    %v2625 = vpop.permute.xlu0 %2624
    %v2627 = vmul.f32 %v2609, %v2625
    %v2628 = vld [vmem:[#allocation2 + $0x78] sm:$0xf]
    %2630 = vrot.lane.b32.xlu0 %v2627, 64
    %v2631 = vpop.permute.xlu0 %2630
    %v2632 = vsel %vm1206, %v2631, 0
    %2634 = vmatprep.subr.mxu0 0.0
    %2635 = vmatpush1.msra.mxu0 %v325
    %2636 = vmatprep.subr.mxu0 0.0
    %2637 = vmatpush1.msra.mxu0 %v326
    %2638 = vmatprep.subr.mxu0 0.0
    %2639 = vmatpush1.msra.mxu0 %v327
    %2640 = vmatprep.subr.mxu0 0.0
    %2641 = vmatpush1.msra.mxu0 %v328
    %2642 = vmatprep.subr.mxu0 0.0
    %2643 = vmatpush1.msra.mxu0 0.0
    %2644 = vmatprep.subr.mxu0 0.0
    %2645 = vmatpush1.msra.mxu0 0.0
    %2646 = vmatprep.subr.mxu0 0.0
    %2647 = vmatpush1.msra.mxu0 0.0
    %2648 = vmatprep.subr.mxu0 0.0
    %2649 = vmatpush1.msra.mxu0 0.0
    %2650 = vmatprep.subr.mxu0 0.0
    %2651 = vmatpush1.msra.mxu0 0.0
    %2652 = vmatprep.subr.mxu0 0.0
    %2653 = vmatpush1.msra.mxu0 0.0
    %2654 = vmatprep.subr.mxu0 0.0
    %2655 = vmatpush1.msra.mxu0 0.0
    %2656 = vmatprep.subr.mxu0 0.0
    %2657 = vmatpush1.msra.mxu0 0.0
    %2658 = vmatprep.subr.mxu0 0.0
    %2659 = vmatpush1.msra.mxu0 0.0
    %2660 = vmatprep.subr.mxu0 0.0
    %2661 = vmatpush1.msra.mxu0 0.0
    %2662 = vmatprep.subr.mxu0 0.0
    %2663 = vmatpush1.msra.mxu0 0.0
    %2664 = vmatprep.subr.mxu0 0.0
    %2665 = vmatpush1.msra.mxu0 0.0
    %2666 = vmatprep.subr.mxu0 0.0
    %2667 = vmatpush1.msra.mxu0 0.0
    %2668 = vmatprep.subr.mxu0 0.0
    %2669 = vmatpush1.msra.mxu0 0.0
    %2670 = vmatprep.subr.mxu0 0.0
    %2671 = vmatpush1.msra.mxu0 0.0
    %2672 = vmatprep.subr.mxu0 0.0
    %2673 = vmatpush1.msra.mxu0 0.0
    %2674 = vmatprep.subr.mxu0 0.0
    %2675 = vmatpush1.msra.mxu0 0.0
    %2676 = vmatprep.subr.mxu0 0.0
    %2677 = vmatpush1.msra.mxu0 0.0
    %2678 = vmatprep.subr.mxu0 0.0
    %2679 = vmatpush1.msra.mxu0 0.0
    %2680 = vmatprep.subr.mxu0 0.0
    %2681 = vmatpush1.msra.mxu0 0.0
    %2682 = vmatprep.subr.mxu0 0.0
    %2683 = vmatpush1.msra.mxu0 0.0
    %2684 = vmatprep.subr.mxu0 0.0
    %2685 = vmatpush1.msra.mxu0 0.0
    %2686 = vmatprep.subr.mxu0 0.0
    %2687 = vmatpush1.msra.mxu0 0.0
    %2688 = vmatprep.subr.mxu0 0.0
    %2689 = vmatpush1.msra.mxu0 0.0
    %2690 = vmatprep.subr.mxu0 0.0
    %2691 = vmatpush1.msra.mxu0 0.0
    %2692 = vmatprep.subr.mxu0 0.0
    %2693 = vmatpush1.msra.mxu0 0.0
    %2694 = vmatprep.subr.mxu0 0.0
    %2695 = vmatpush1.msra.mxu0 0.0
    %2696 = vmatprep.subr.mxu0 0.0
    %2697 = vmatpush1.msra.mxu0 0.0
    %2698 = vmatprep.mubr.f32.mxu0 0.0
    %2699 = vmatmul.mubr.f32.gmra.mrb[0].mxu0 %v2632
    %v2700 = vpop.f32.mrb[0].mxu0
    %v2701 = vadd.f32 %v2628, %v2700
    %v2702 = vpop.f32.mrb[0].mxu0
    %2703 = vdwg.mxu0
    %v2704 = vxor.u32 %v2701, 2147483648
    %v2705 = vmul.f32 %v2704, 1.442695
    %v2706 = vpow.pop %v2705
    %v2707 = vadd.f32 %v2706, 1.0
    %v2708 = vrcp.pop %v2707
    %v2709 = vmul.f32 1.0, %v2708
    %v2710 = vtanh.pop %v2701
    %v2711 = vmul.f32 %v2709, %v2621
    %2713 = vrot.lane.b32.xlu0 %v2710, 32
    %v2714 = vpop.permute.xlu0 %2713
    %v2716 = vmul.f32 %v2709, %v2714
    %2718 = vrot.lane.b32.xlu0 %v2716, 32
    %v2719 = vpop.permute.xlu0 %2718
    %v2721 = vadd.f32 %v2711, %v2719
    %v2722 = vtanh.pop %v2721
    %2724 = vrot.lane.b32.xlu0 %v2722, 32
    %v2725 = vpop.permute.xlu0 %2724
    %v2727 = vmul.f32 %v2709, %v2725
    %v2728 = vld [vmem:[#allocation2 + $0x78] sm:$0xf0]
    %2730 = vrot.lane.b32.xlu0 %v2727, 64
    %v2731 = vpop.permute.xlu0 %2730
    %v2733 = vrot.slane %v2728, 4
    %v2735 = vsel %vm1206, %v2731, 0
    %2737 = vmatprep.subr.mxu0 0.0
    %2738 = vmatpush1.msra.mxu0 %v325
    %2739 = vmatprep.subr.mxu0 0.0
    %2740 = vmatpush1.msra.mxu0 %v326
    %2741 = vmatprep.subr.mxu0 0.0
    %2742 = vmatpush1.msra.mxu0 %v327
    %2743 = vmatprep.subr.mxu0 0.0
    %2744 = vmatpush1.msra.mxu0 %v328
    %2745 = vmatprep.subr.mxu0 0.0
    %2746 = vmatpush1.msra.mxu0 0.0
    %2747 = vmatprep.subr.mxu0 0.0
    %2748 = vmatpush1.msra.mxu0 0.0
    %2749 = vmatprep.subr.mxu0 0.0
    %2750 = vmatpush1.msra.mxu0 0.0
    %2751 = vmatprep.subr.mxu0 0.0
    %2752 = vmatpush1.msra.mxu0 0.0
    %2753 = vmatprep.subr.mxu0 0.0
    %2754 = vmatpush1.msra.mxu0 0.0
    %2755 = vmatprep.subr.mxu0 0.0
    %2756 = vmatpush1.msra.mxu0 0.0
    %2757 = vmatprep.subr.mxu0 0.0
    %2758 = vmatpush1.msra.mxu0 0.0
    %2759 = vmatprep.subr.mxu0 0.0
    %2760 = vmatpush1.msra.mxu0 0.0
    %2761 = vmatprep.subr.mxu0 0.0
    %2762 = vmatpush1.msra.mxu0 0.0
    %2763 = vmatprep.subr.mxu0 0.0
    %2764 = vmatpush1.msra.mxu0 0.0
    %2765 = vmatprep.subr.mxu0 0.0
    %2766 = vmatpush1.msra.mxu0 0.0
    %2767 = vmatprep.subr.mxu0 0.0
    %2768 = vmatpush1.msra.mxu0 0.0
    %2769 = vmatprep.subr.mxu0 0.0
    %2770 = vmatpush1.msra.mxu0 0.0
    %2771 = vmatprep.subr.mxu0 0.0
    %2772 = vmatpush1.msra.mxu0 0.0
    %2773 = vmatprep.subr.mxu0 0.0
    %2774 = vmatpush1.msra.mxu0 0.0
    %2775 = vmatprep.subr.mxu0 0.0
    %2776 = vmatpush1.msra.mxu0 0.0
    %2777 = vmatprep.subr.mxu0 0.0
    %2778 = vmatpush1.msra.mxu0 0.0
    %2779 = vmatprep.subr.mxu0 0.0
    %2780 = vmatpush1.msra.mxu0 0.0
    %2781 = vmatprep.subr.mxu0 0.0
    %2782 = vmatpush1.msra.mxu0 0.0
    %2783 = vmatprep.subr.mxu0 0.0
    %2784 = vmatpush1.msra.mxu0 0.0
    %2785 = vmatprep.subr.mxu0 0.0
    %2786 = vmatpush1.msra.mxu0 0.0
    %2787 = vmatprep.subr.mxu0 0.0
    %2788 = vmatpush1.msra.mxu0 0.0
    %2789 = vmatprep.subr.mxu0 0.0
    %2790 = vmatpush1.msra.mxu0 0.0
    %2791 = vmatprep.subr.mxu0 0.0
    %2792 = vmatpush1.msra.mxu0 0.0
    %2793 = vmatprep.subr.mxu0 0.0
    %2794 = vmatpush1.msra.mxu0 0.0
    %2795 = vmatprep.subr.mxu0 0.0
    %2796 = vmatpush1.msra.mxu0 0.0
    %2797 = vmatprep.subr.mxu0 0.0
    %2798 = vmatpush1.msra.mxu0 0.0
    %2799 = vmatprep.subr.mxu0 0.0
    %2800 = vmatpush1.msra.mxu0 0.0
    %2801 = vmatprep.mubr.f32.mxu0 0.0
    %2802 = vmatmul.mubr.f32.gmra.mrb[0].mxu0 %v2735
    %v2803 = vpop.f32.mrb[0].mxu0
    %v2804 = vadd.f32 %v2733, %v2803
    %v2805 = vpop.f32.mrb[0].mxu0
    %2806 = vdwg.mxu0
    %v2807 = vxor.u32 %v2804, 2147483648
    %v2808 = vmul.f32 %v2807, 1.442695
    %v2809 = vpow.pop %v2808
    %v2810 = vadd.f32 %v2809, 1.0
    %v2811 = vrcp.pop %v2810
    %v2812 = vmul.f32 1.0, %v2811
    %v2813 = vtanh.pop %v2804
    %v2814 = vmul.f32 %v2812, %v2721
    %2816 = vrot.lane.b32.xlu0 %v2813, 32
    %v2817 = vpop.permute.xlu0 %2816
    %v2819 = vmul.f32 %v2812, %v2817
    %2821 = vrot.lane.b32.xlu0 %v2819, 32
    %v2822 = vpop.permute.xlu0 %2821
    %v2824 = vadd.f32 %v2814, %v2822
    %v2825 = vtanh.pop %v2824
    %2827 = vrot.lane.b32.xlu0 %v2825, 32
    %v2828 = vpop.permute.xlu0 %2827
    %v2830 = vmul.f32 %v2812, %v2828
    %v2831 = vld [vmem:[#allocation7] sm:$0xff]
    %v2832 = vld [vmem:[#allocation7 + $0x8] sm:$0xff]
    %v2833 = vld [vmem:[#allocation7 + $0x10] sm:$0xff]
    %v2834 = vld [vmem:[#allocation7 + $0x18] sm:$0xff]
    %v2835 = vld [vmem:[#allocation7 + $0x20] sm:$0x1]
    %v2836 = vld [vmem:[#allocation7 + $0x21] sm:$0x1]
    %v2837 = vrot.slane %v1201, 4
    %2838 = vrot.lane.b32.xlu0 %v2837, 96
    %v2839 = vpop.permute.xlu0 %2838
    %v2843 = vrot.slane %v2830, 4
    %2844 = vrot.lane.b32.xlu0 %v2843, 64
    %v2845 = vpop.permute.xlu0 %2844
    %vm2847 = vcmask 1043456
    %v2848 = vsel %vm2847, %v1201, %v2839
    %v2849 = vsel %vm2847, %v2022, %v2845
    %v2850 = vmax.f32 %v2848, 0.0
    %v2851 = vmax.f32 %v2849, 0.0
    %v2852 = vlaneseq
    %v2853 = vshrl.u32 %v2852, 7
    %v2854 = vsub.s32 0, %v2853
    %v2855 = vrot.slane %v2835, %v2854
    %v2857 = vsel %vm1206, %v2850, 0
    %v2860 = vsel %vm1206, %v2851, 0
    %2862 = vmatprep.subr.mxu0 0.0
    %2863 = vmatpush1.msra.mxu0 %v2831
    %2864 = vmatprep.subr.mxu0 0.0
    %2865 = vmatpush1.msra.mxu0 %v2832
    %2866 = vmatprep.subr.mxu0 0.0
    %2867 = vmatpush1.msra.mxu0 %v2833
    %2868 = vmatprep.subr.mxu0 0.0
    %2869 = vmatpush1.msra.mxu0 %v2834
    %2870 = vmatprep.subr.mxu0 0.0
    %2871 = vmatpush1.msra.mxu0 0.0
    %2872 = vmatprep.subr.mxu0 0.0
    %2873 = vmatpush1.msra.mxu0 0.0
    %2874 = vmatprep.subr.mxu0 0.0
    %2875 = vmatpush1.msra.mxu0 0.0
    %2876 = vmatprep.subr.mxu0 0.0
    %2877 = vmatpush1.msra.mxu0 0.0
    %2878 = vmatprep.subr.mxu0 0.0
    %2879 = vmatpush1.msra.mxu0 0.0
    %2880 = vmatprep.subr.mxu0 0.0
    %2881 = vmatpush1.msra.mxu0 0.0
    %2882 = vmatprep.subr.mxu0 0.0
    %2883 = vmatpush1.msra.mxu0 0.0
    %2884 = vmatprep.subr.mxu0 0.0
    %2885 = vmatpush1.msra.mxu0 0.0
    %2886 = vmatprep.subr.mxu0 0.0
    %2887 = vmatpush1.msra.mxu0 0.0
    %2888 = vmatprep.subr.mxu0 0.0
    %2889 = vmatpush1.msra.mxu0 0.0
    %2890 = vmatprep.subr.mxu0 0.0
    %2891 = vmatpush1.msra.mxu0 0.0
    %2892 = vmatprep.subr.mxu0 0.0
    %2893 = vmatpush1.msra.mxu0 0.0
    %2894 = vmatprep.subr.mxu0 0.0
    %2895 = vmatpush1.msra.mxu0 0.0
    %2896 = vmatprep.subr.mxu0 0.0
    %2897 = vmatpush1.msra.mxu0 0.0
    %2898 = vmatprep.subr.mxu0 0.0
    %2899 = vmatpush1.msra.mxu0 0.0
    %2900 = vmatprep.subr.mxu0 0.0
    %2901 = vmatpush1.msra.mxu0 0.0
    %2902 = vmatprep.subr.mxu0 0.0
    %2903 = vmatpush1.msra.mxu0 0.0
    %2904 = vmatprep.subr.mxu0 0.0
    %2905 = vmatpush1.msra.mxu0 0.0
    %2906 = vmatprep.subr.mxu0 0.0
    %2907 = vmatpush1.msra.mxu0 0.0
    %2908 = vmatprep.subr.mxu0 0.0
    %2909 = vmatpush1.msra.mxu0 0.0
    %2910 = vmatprep.subr.mxu0 0.0
    %2911 = vmatpush1.msra.mxu0 0.0
    %2912 = vmatprep.subr.mxu0 0.0
    %2913 = vmatpush1.msra.mxu0 0.0
    %2914 = vmatprep.subr.mxu0 0.0
    %2915 = vmatpush1.msra.mxu0 0.0
    %2916 = vmatprep.subr.mxu0 0.0
    %2917 = vmatpush1.msra.mxu0 0.0
    %2918 = vmatprep.subr.mxu0 0.0
    %2919 = vmatpush1.msra.mxu0 0.0
    %2920 = vmatprep.subr.mxu0 0.0
    %2921 = vmatpush1.msra.mxu0 0.0
    %2922 = vmatprep.subr.mxu0 0.0
    %2923 = vmatpush1.msra.mxu0 0.0
    %2924 = vmatprep.subr.mxu0 0.0
    %2925 = vmatpush1.msra.mxu0 0.0
    %2926 = vmatprep.mubr.f32.mxu0 0.0
    %2927 = vmatmul.mubr.f32.gmra.mrb[0].mxu0 %v2857
    %v2928 = vpop.f32.mrb[0].mxu0
    %v2929 = vadd.f32 %v2855, %v2928
    %v2930 = vpop.f32.mrb[0].mxu0
    %2931 = vmatprep.mubr.f32.mxu0 0.0
    %2932 = vmatmul.mubr.f32.gmra.mrb[0].mxu0 %v2860
    %v2933 = vpop.f32.mrb[0].mxu0
    %v2934 = vadd.f32 %v2855, %v2933
    %v2935 = vpop.f32.mrb[0].mxu0
    %2936 = vdwg.mxu0
    %v2937 = vmax.f32 %v2929, 0.0
    %v2938 = vlaneseq
    %v2939 = vshrl.u32 %v2938, 7
    %v2940 = vsub.s32 0, %v2939
    %v2941 = vrot.slane %v2836, %v2940
    %v2942 = vmul.f32 %v2937, %v2941
    %vm2943 = vcmask 257024
    %v2944 = vsel %vm2943, %v2942, 0.0
    %2945 = vadd.xlane.f32.xlu0 %v2944
    %v2946 = vpop.xlane.xlu0 %2945
    %v2947 = vadd.f32 %v2946, %v2941
    %vm2948 = vcmask 400644
    %v2949 = vsel %vm2948, %v2929, -inf
    %2950 = vmax.xlane.f32.xlu0 %v2949
    %v2951 = vpop.xlane.xlu0 %2950
    %vm2952 = vcmask 400640
    %v2953 = vsel %vm2952, %v2934, -inf
    %2954 = vmax.xlane.f32.xlu0 %v2953
    %v2955 = vpop.xlane.xlu0 %2954
    %v2956 = vsub.f32 %v2929, %v2951
    %v2957 = vsub.f32 %v2934, %v2955
    %v2958 = vmul.f32 %v2956, 1.442695
    %v2959 = vpow.pop %v2958
    %v2960 = vmul.f32 %v2957, 1.442695
    %v2961 = vpow.pop %v2960
    %2964 = vrot.lane.b32.xlu0 %v2959, 96
    %v2965 = vpop.permute.xlu0 %2964
    %2966 = vrot.lane.b32.xlu0 %v2961, 96
    %v2967 = vpop.permute.xlu0 %2966
    %vm2970 = vcmask 138244
    %v2971 = vsel %vm2970, %v2965, 0.0
    %2972 = vadd.xlane.f32.xlu0 %v2971
    %v2973 = vpop.xlane.xlu0 %2972
    %vm2974 = vcmask 138240
    %v2975 = vsel %vm2974, %v2967, 0.0
    %2976 = vadd.xlane.f32.xlu0 %v2975
    %v2977 = vpop.xlane.xlu0 %2976
    %v2978 = vrcp.pop %v2973
    %v2979 = vmul.f32 %v2959, %v2978
    %v2980 = vrcp.pop %v2977
    %v2981 = vmul.f32 %v2961, %v2980
    %2983 = vrot.lane.b32.xlu0 %v2947, 96
    %v2984 = vpop.permute.xlu0 %2983
    %vm2986 = vcmask 7168
    %v2987 = vsel %vm2986, %v2984, 0.0
    %2990 = vrot.lane.b32.xlu0 %v2979, 96
    %v2991 = vpop.permute.xlu0 %2990
    %2992 = vrot.lane.b32.xlu0 %v2981, 96
    %v2993 = vpop.permute.xlu0 %2992
    %v2996 = vsel %vm2974, %v2991, 0.0
    %v2997 = vsel %vm2974, %v2993, 0.0
    %v2998 = vsel %vm2847, %v2987, %v2996
    %2999 = vst [vmem:[%s6] sm:$0xff] %v2998
    %3000 = vst [vmem:[%s6 + $0x8] sm:$0xff] %v2997
    // Predicated region
    $region38: #{lstm_policy_forward.1} parent=1 // pred_check
      _
    $region39: #{lstm_policy_forward.1} parent=1 // pred_check_branch
      %3002 = sbr.rel (0) target = $region41
    $region40: #{lstm_policy_forward.1} parent=1 // pred_region
      _
    $region41: #{lstm_policy_forward.1} parent=1 // pred_fallthru
      _
    // Predicated region
    $region42: #{lstm_policy_forward.1} parent=1 // pred_check
      _
    $region43: #{lstm_policy_forward.1} parent=1 // pred_check_branch
      %3004 = sbr.rel (0) target = $region45
    $region44: #{lstm_policy_forward.1} parent=1 // pred_region
      _
    $region45: #{lstm_policy_forward.1} parent=1 // pred_fallthru
      _
    %3005 = vsyncpa [#allocation4], 1
    %3006 = vsyncpa [#allocation6], 1

</llo_original>
